<compile_context>
chip_gen: v6e
topology: v6e:2x2x1
jax: 0.10.0
libtpu: 0.0.40
codegen_flags: <defaults>
</compile_context>

<pallas_src>
import jax
import jax.numpy as jnp
from jax.experimental import pallas as pl
from jax.experimental.pallas import tpu as pltpu


def _sigmoid(x):
    return 1.0 / (1.0 + jnp.exp(-x))


def _elu(x):
    # PyTorch ELU, alpha = 1.0.  exp(min(x, 0)) keeps the untaken branch finite.
    return jnp.where(x > 0, x, jnp.exp(jnp.minimum(x, 0.0)) - 1.0)


def gated_graph_conv(params, x, edge_sources, edge_targets, rij,
                     combine_sets, plane_wave, cutoff, *,
                     tile_edges=256, compute_dtype=jnp.bfloat16):
    """Forward pass of GatedGraphConvolution (bias=False, no batch norm)."""
    E = edge_sources.shape[0]
    N, F = x.shape
    out_f = params["w_gate"].shape[1]
    # index_add_ writes z[E, out_f] into output[N, F]; requires out_f == F.
    assert out_f == F, "out_features must equal n_node_feat for index_add_"
    k1 = combine_sets.shape[1]
    k2 = plane_wave.shape[1]

    cutoff = float(cutoff)                       # compile-time constant.

    # Lane-dense output: pad the z feature axis to a multiple of 128.
    out_pad = ((out_f + 127) // 128) * 128

    n_tiles = pl.cdiv(E, tile_edges)
    e_pad = n_tiles * tile_edges
    pad_rows = e_pad - E

    # --- glue: data-dependent gather (cast to bf16 first to halve traffic) ---
    # TODO(synk): move the ni/nj gather in-kernel (scalar-prefetched edge ids
    # + per-row DMA gather from an HBM-resident node table) to avoid
    # materializing two E x F edge streams in HBM.
    x_c = x.astype(compute_dtype)
    ni = jnp.take(x_c, edge_sources, axis=0)
    nj = jnp.take(x_c, edge_targets, axis=0)
    cs = combine_sets.astype(compute_dtype)
    pw = plane_wave.astype(compute_dtype)
    rij2 = rij.astype(jnp.float32).reshape(E, 1)

    if pad_rows:
        ni = jnp.pad(ni, ((0, pad_rows), (0, 0)))
        nj = jnp.pad(nj, ((0, pad_rows), (0, 0)))
        cs = jnp.pad(cs, ((0, pad_rows), (0, 0)))
        pw = jnp.pad(pw, ((0, pad_rows), (0, 0)))
        rij2 = jnp.pad(rij2, ((0, pad_rows), (0, 0)), constant_values=1.0)

    # --- weights: split cat([ni, nj, delta]) matmul, fuse gate|mlp, zero-pad ---
    def _colpad(w):
        return jnp.pad(w, ((0, 0), (0, out_pad - w.shape[1])))

    wg, wm = params["w_gate"], params["w_mlp"]                 # [3F, out]
    wa = jnp.concatenate([_colpad(wg[:F]),      _colpad(wm[:F])],      axis=1)
    wb = jnp.concatenate([_colpad(wg[F:2 * F]), _colpad(wm[F:2 * F])], axis=1)
    wc = jnp.concatenate([_colpad(wg[2 * F:]),  _colpad(wm[2 * F:])],  axis=1)
    wa = wa.astype(compute_dtype)                              # [F, 2*out_pad]
    wb = wb.astype(compute_dtype)
    wc = wc.astype(compute_dtype)
    w1 = _colpad(params["w1"]).astype(compute_dtype)           # [k1, out_pad]
    w2g = params["w2_gate"].astype(compute_dtype)              # [k2, k2]
    w2 = _colpad(params["w2"]).astype(compute_dtype)           # [k2, out_pad]

    def edge_kernel(ni_ref, nj_ref, rij_ref, cs_ref, pw_ref,
                    wa_ref, wb_ref, wc_ref, w1_ref, w2g_ref, w2_ref,
                    z_ref):
        r = rij_ref[...]                                   # [TE, 1] f32
        inv_r = pl.reciprocal(r, approx=True)              # EUP, once per edge
        ni_t = ni_ref[...]                                 # [TE, F] bf16
        nj_t = nj_ref[...]
        delta = ((ni_t.astype(jnp.float32) - nj_t.astype(jnp.float32)) * inv_r
                 ).astype(ni_t.dtype)

        # cat([ni, nj, delta]) @ [W_gate | W_mlp]  ==  3 fused partial matmuls
        pre = (jnp.dot(ni_t, wa_ref[...], preferred_element_type=jnp.float32)
               + jnp.dot(nj_t, wb_ref[...], preferred_element_type=jnp.float32)
               + jnp.dot(delta, wc_ref[...], preferred_element_type=jnp.float32))
        e_gate = _sigmoid(pre[:, :out_pad])                # Sigmoid gate
        e_mlp = _elu(pre[:, out_pad:])                     # ELU MLP

        z1 = jnp.dot(cs_ref[...], w1_ref[...],
                     preferred_element_type=jnp.float32)

        pw_t = pw_ref[...]
        gate = _sigmoid(jnp.dot(pw_t, w2g_ref[...],
                                preferred_element_type=jnp.float32))
        z2 = jnp.dot((pw_t.astype(jnp.float32) * gate).astype(pw_t.dtype),
                     w2_ref[...], preferred_element_type=jnp.float32)

        mask = (r < cutoff).astype(jnp.float32)            # rij < cutoff
        z_ref[...] = (e_gate * e_mlp * (z1 + z2) * mask).astype(z_ref.dtype)

    edge_spec = lambda d: pl.BlockSpec((tile_edges, d), lambda i: (i, 0))
    # Weights keep a constant block index; at these shapes their double buffer
    # costs < 0.5 MiB, so pipeline_mode=pl.Buffered(1) is not worth the churn.
    full_spec = lambda s: pl.BlockSpec(s, lambda i: (0, 0))

    z = pl.pallas_call(
        edge_kernel,
        out_shape=jax.ShapeDtypeStruct((e_pad, out_pad), jnp.float32),
        grid_spec=pltpu.PrefetchScalarGridSpec(
            num_scalar_prefetch=0,
            grid=(n_tiles,),
            in_specs=[
                edge_spec(F),                  # ni
                edge_spec(F),                  # nj
                edge_spec(1),                  # rij
                edge_spec(k1),                 # combine_sets
                edge_spec(k2),                 # plane_wave
                full_spec((F, 2 * out_pad)),   # wa = [Wg_a | Wm_a]
                full_spec((F, 2 * out_pad)),   # wb = [Wg_b | Wm_b]
                full_spec((F, 2 * out_pad)),   # wc = [Wg_c | Wm_c]
                full_spec((k1, out_pad)),      # linear1_vector
                full_spec((k2, k2)),           # linear2_vector_gate
                full_spec((k2, out_pad)),      # linear2_vector
            ],
            out_specs=pl.BlockSpec((tile_edges, out_pad), lambda i: (i, 0)),
        ),
        compiler_params=pltpu.CompilerParams(
            dimension_semantics=("parallel",),
            vmem_limit_bytes=64 * 1024 * 1024,
        ),
    )(ni, nj, rij2, cs, pw, wa, wb, wc, w1, w2g, w2)

    z = z[:E, :out_f]

    # output = input.clone(); output.index_add_(0, edge_sources, z)
    # TODO(synk): for large dense graphs replace with sort-by-source +
    # segment_sum (or a second Pallas pass); XLA scatter-add serializes on
    # duplicate indices.
    return x.at[edge_sources].add(z)


def reference(params, x, es, et, rij, cs, pw, cutoff,
              compute_dtype=jnp.float32):
    """Pure-JAX mirror of the PyTorch forward; optionally applies the same
    low-precision input/weight casts the kernel uses."""
    cd = compute_dtype
    x_c = x.astype(cd)
    ni = x_c[es]
    nj = x_c[et]
    r = rij[:, None].astype(jnp.float32)
    mask = (r < cutoff).astype(jnp.float32)
    delta = ((ni.astype(jnp.float32) - nj.astype(jnp.float32)) / r).astype(cd)
    fe = jnp.concatenate([ni, nj, delta], axis=1)
    e_gate = jax.nn.sigmoid(jnp.dot(fe, params["w_gate"].astype(cd),
                                    preferred_element_type=jnp.float32))
    e_mlp = jax.nn.elu(jnp.dot(fe, params["w_mlp"].astype(cd),
                               preferred_element_type=jnp.float32))
    z1 = jnp.dot(cs.astype(cd), params["w1"].astype(cd),
                 preferred_element_type=jnp.float32)
    pw_c = pw.astype(cd)
    gate = jax.nn.sigmoid(jnp.dot(pw_c, params["w2_gate"].astype(cd),
                                  preferred_element_type=jnp.float32))
    z2 = jnp.dot((pw_c.astype(jnp.float32) * gate).astype(cd),
                 params["w2"].astype(cd), preferred_element_type=jnp.float32)
    z = e_gate * e_mlp * (z1 + z2) * mask
    return x.at[es].add(z)


if __name__ == "__main__":
    # Module hyper-parameters (consistent with the PyTorch __init__):
    #   n_node_feat = F = 32, in_features = 3*F = 96, out_features = 32,
    #   n_Gaussian (k1) = 32, n_grid_K = 4 -> k2 = 64.
    # (linear1_vector_gate / activation1_vector_gate are unused in forward;
    #  the `nodes` argument is unused too.)
    F = 32
    OUT = 32
    K1 = 32
    K2 = 4 ** 3
    N_NODES = 64
    N_EDGES = 640          # not a multiple of tile_edges -> exercises cdiv+pad
    CUTOFF = 1.5

    key = jax.random.PRNGKey(0)
    ks = jax.random.split(key, 12)
    scale = 0.1
    params = {
        "w_gate":  jax.random.normal(ks[0], (3 * F, OUT), jnp.float32) * scale,
        "w_mlp":   jax.random.normal(ks[1], (3 * F, OUT), jnp.float32) * scale,
        "w1":      jax.random.normal(ks[2], (K1, OUT), jnp.float32) * scale,
        "w2_gate": jax.random.normal(ks[3], (K2, K2), jnp.float32) * scale,
        "w2":      jax.random.normal(ks[4], (K2, OUT), jnp.float32) * scale,
    }

    x = jax.random.normal(ks[5], (N_NODES, F), jnp.float32)
    edge_sources = jax.random.randint(ks[6], (N_EDGES,), 0, N_NODES, jnp.int32)
    edge_targets = jax.random.randint(ks[7], (N_EDGES,), 0, N_NODES, jnp.int32)
    rij = jax.random.uniform(ks[8], (N_EDGES,), jnp.float32, 0.5, 2.0)
    combine_sets = jax.random.normal(ks[9], (N_EDGES, K1), jnp.float32)
    plane_wave = jax.random.normal(ks[10], (N_EDGES, K2), jnp.float32)

    out = gated_graph_conv(params, x, edge_sources, edge_targets, rij,
                           combine_sets, plane_wave, CUTOFF)
    out = jax.block_until_ready(out)
    assert out.shape == (N_NODES, F)

    # Compare against a pure-JAX mirror that applies the same bf16 casts the
    # kernel uses (bf16 eps ~ 8e-3, so 2e-2 is a tight, meaningful check).
    ref = reference(params, x, edge_sources, edge_targets, rij,
                    combine_sets, plane_wave, CUTOFF,
                    compute_dtype=jnp.bfloat16)
    assert jnp.allclose(out, ref, atol=2e-2, rtol=2e-2), "mismatch vs reference"
    print("KERNEL_OK")
</pallas_src>

<mosaic_0001>
module attributes {stable_mosaic.version = 11 : i64} {
  func.func @edge_kernel(%arg0: i32, %arg1: memref<256x32xbf16, #tpu.memory_space<vmem>>, %arg2: memref<256x32xbf16, #tpu.memory_space<vmem>>, %arg3: memref<256x1xf32, #tpu.memory_space<vmem>>, %arg4: memref<256x32xbf16, #tpu.memory_space<vmem>>, %arg5: memref<256x64xbf16, #tpu.memory_space<vmem>>, %arg6: memref<32x256xbf16, #tpu.memory_space<vmem>>, %arg7: memref<32x256xbf16, #tpu.memory_space<vmem>>, %arg8: memref<32x256xbf16, #tpu.memory_space<vmem>>, %arg9: memref<32x128xbf16, #tpu.memory_space<vmem>>, %arg10: memref<64x64xbf16, #tpu.memory_space<vmem>>, %arg11: memref<64x128xbf16, #tpu.memory_space<vmem>>, %arg12: memref<256x128xf32, #tpu.memory_space<vmem>>) attributes {dimension_semantics = [#tpu.dimension_semantics<parallel>], iteration_bounds = array<i64: 3>, scalar_prefetch = 0 : i64, scratch_operands = 0 : i64, tpu.core_type = #tpu.core_type<tc>, window_params = [{transform_indices = @transform_0, window_bounds = array<i64: 256, 32>}, {transform_indices = @transform_1, window_bounds = array<i64: 256, 32>}, {transform_indices = @transform_2, window_bounds = array<i64: 256, 1>}, {transform_indices = @transform_3, window_bounds = array<i64: 256, 32>}, {transform_indices = @transform_4, window_bounds = array<i64: 256, 64>}, {pipeline_mode = #tpu.pipeline_mode<synchronous>, transform_indices = @transform_5, window_bounds = array<i64: 32, 256>}, {pipeline_mode = #tpu.pipeline_mode<synchronous>, transform_indices = @transform_6, window_bounds = array<i64: 32, 256>}, {pipeline_mode = #tpu.pipeline_mode<synchronous>, transform_indices = @transform_7, window_bounds = array<i64: 32, 256>}, {pipeline_mode = #tpu.pipeline_mode<synchronous>, transform_indices = @transform_8, window_bounds = array<i64: 32, 128>}, {pipeline_mode = #tpu.pipeline_mode<synchronous>, transform_indices = @transform_9, window_bounds = array<i64: 64, 64>}, {pipeline_mode = #tpu.pipeline_mode<synchronous>, transform_indices = @transform_10, window_bounds = array<i64: 64, 128>}, {transform_indices = @transform_11, window_bounds = array<i64: 256, 128>}]} {
    %c0 = arith.constant 0 : index
    %c0_0 = arith.constant 0 : index
    %0 = vector.load %arg3[%c0, %c0_0] : memref<256x1xf32, #tpu.memory_space<vmem>>, vector<256x1xf32>
    %1 = tpu.reciprocal %0 {approx = true} : vector<256x1xf32> -> vector<256x1xf32>
    %c0_1 = arith.constant 0 : index
    %c0_2 = arith.constant 0 : index
    %2 = vector.load %arg1[%c0_1, %c0_2] : memref<256x32xbf16, #tpu.memory_space<vmem>>, vector<256x32xbf16>
    %c0_3 = arith.constant 0 : index
    %c0_4 = arith.constant 0 : index
    %3 = vector.load %arg2[%c0_3, %c0_4] : memref<256x32xbf16, #tpu.memory_space<vmem>>, vector<256x32xbf16>
    %4 = arith.extf %2 : vector<256x32xbf16> to vector<256x32xf32>
    %5 = arith.extf %3 : vector<256x32xbf16> to vector<256x32xf32>
    %6 = arith.subf %4, %5 : vector<256x32xf32>
    %7 = vector.broadcast %1 : vector<256x1xf32> to vector<256x32xf32>
    %8 = arith.mulf %6, %7 : vector<256x32xf32>
    %9 = arith.truncf %8 : vector<256x32xf32> to vector<256x32xbf16>
    %c0_5 = arith.constant 0 : index
    %c0_6 = arith.constant 0 : index
    %10 = vector.load %arg6[%c0_5, %c0_6] : memref<32x256xbf16, #tpu.memory_space<vmem>>, vector<32x256xbf16>
    %cst = arith.constant dense<0.000000e+00> : vector<256x256xf32>
    %11 = tpu.matmul %2, %10, %cst {dimension_numbers = #tpu.dot_dimension_numbers<[1], [0], [0], [1], [0, 0, 1, 1], [], []>} : vector<256x32xbf16>, vector<32x256xbf16>, vector<256x256xf32> -> vector<256x256xf32>
    %c0_7 = arith.constant 0 : index
    %c0_8 = arith.constant 0 : index
    %12 = vector.load %arg7[%c0_7, %c0_8] : memref<32x256xbf16, #tpu.memory_space<vmem>>, vector<32x256xbf16>
    %cst_9 = arith.constant dense<0.000000e+00> : vector<256x256xf32>
    %13 = tpu.matmul %3, %12, %cst_9 {dimension_numbers = #tpu.dot_dimension_numbers<[1], [0], [0], [1], [0, 0, 1, 1], [], []>} : vector<256x32xbf16>, vector<32x256xbf16>, vector<256x256xf32> -> vector<256x256xf32>
    %14 = arith.addf %11, %13 : vector<256x256xf32>
    %c0_10 = arith.constant 0 : index
    %c0_11 = arith.constant 0 : index
    %15 = vector.load %arg8[%c0_10, %c0_11] : memref<32x256xbf16, #tpu.memory_space<vmem>>, vector<32x256xbf16>
    %cst_12 = arith.constant dense<0.000000e+00> : vector<256x256xf32>
    %16 = tpu.matmul %9, %15, %cst_12 {dimension_numbers = #tpu.dot_dimension_numbers<[1], [0], [0], [1], [0, 0, 1, 1], [], []>} : vector<256x32xbf16>, vector<32x256xbf16>, vector<256x256xf32> -> vector<256x256xf32>
    %17 = arith.addf %14, %16 : vector<256x256xf32>
    %18 = vector.extract_strided_slice %17 {offsets = [0, 0], sizes = [256, 128], strides = [1, 1]} : vector<256x256xf32> to vector<256x128xf32>
    %cst_13 = arith.constant 0.000000e+00 : f32
    %19 = vector.broadcast %cst_13 : f32 to vector<256x128xf32>
    %20 = arith.subf %19, %18 : vector<256x128xf32>
    %21 = math.exp %20 : vector<256x128xf32>
    %cst_14 = arith.constant 1.000000e+00 : f32
    %22 = vector.broadcast %cst_14 : f32 to vector<256x128xf32>
    %23 = arith.addf %22, %21 : vector<256x128xf32>
    %cst_15 = arith.constant 1.000000e+00 : f32
    %24 = vector.broadcast %cst_15 : f32 to vector<256x128xf32>
    %25 = arith.divf %24, %23 : vector<256x128xf32>
    %26 = vector.extract_strided_slice %17 {offsets = [0, 128], sizes = [256, 128], strides = [1, 1]} : vector<256x256xf32> to vector<256x128xf32>
    %cst_16 = arith.constant 0.000000e+00 : f32
    %27 = vector.broadcast %cst_16 : f32 to vector<256x128xf32>
    %28 = arith.cmpf ogt, %26, %27 : vector<256x128xf32>
    %cst_17 = arith.constant 0.000000e+00 : f32
    %29 = vector.broadcast %cst_17 : f32 to vector<256x128xf32>
    %30 = arith.minimumf %26, %29 : vector<256x128xf32>
    %31 = math.exp %30 : vector<256x128xf32>
    %cst_18 = arith.constant 1.000000e+00 : f32
    %32 = vector.broadcast %cst_18 : f32 to vector<256x128xf32>
    %33 = arith.subf %31, %32 : vector<256x128xf32>
    %34 = arith.select %28, %26, %33 : vector<256x128xi1>, vector<256x128xf32>
    %c0_19 = arith.constant 0 : index
    %c0_20 = arith.constant 0 : index
    %35 = vector.load %arg4[%c0_19, %c0_20] : memref<256x32xbf16, #tpu.memory_space<vmem>>, vector<256x32xbf16>
    %c0_21 = arith.constant 0 : index
    %c0_22 = arith.constant 0 : index
    %36 = vector.load %arg9[%c0_21, %c0_22] : memref<32x128xbf16, #tpu.memory_space<vmem>>, vector<32x128xbf16>
    %cst_23 = arith.constant dense<0.000000e+00> : vector<256x128xf32>
    %37 = tpu.matmul %35, %36, %cst_23 {dimension_numbers = #tpu.dot_dimension_numbers<[1], [0], [0], [1], [0, 0, 1, 1], [], []>} : vector<256x32xbf16>, vector<32x128xbf16>, vector<256x128xf32> -> vector<256x128xf32>
    %c0_24 = arith.constant 0 : index
    %c0_25 = arith.constant 0 : index
    %38 = vector.load %arg5[%c0_24, %c0_25] : memref<256x64xbf16, #tpu.memory_space<vmem>>, vector<256x64xbf16>
    %c0_26 = arith.constant 0 : index
    %c0_27 = arith.constant 0 : index
    %39 = vector.load %arg10[%c0_26, %c0_27] : memref<64x64xbf16, #tpu.memory_space<vmem>>, vector<64x64xbf16>
    %cst_28 = arith.constant dense<0.000000e+00> : vector<256x64xf32>
    %40 = tpu.matmul %38, %39, %cst_28 {dimension_numbers = #tpu.dot_dimension_numbers<[1], [0], [0], [1], [0, 0, 1, 1], [], []>} : vector<256x64xbf16>, vector<64x64xbf16>, vector<256x64xf32> -> vector<256x64xf32>
    %cst_29 = arith.constant 0.000000e+00 : f32
    %41 = vector.broadcast %cst_29 : f32 to vector<256x64xf32>
    %42 = arith.subf %41, %40 : vector<256x64xf32>
    %43 = math.exp %42 : vector<256x64xf32>
    %cst_30 = arith.constant 1.000000e+00 : f32
    %44 = vector.broadcast %cst_30 : f32 to vector<256x64xf32>
    %45 = arith.addf %44, %43 : vector<256x64xf32>
    %cst_31 = arith.constant 1.000000e+00 : f32
    %46 = vector.broadcast %cst_31 : f32 to vector<256x64xf32>
    %47 = arith.divf %46, %45 : vector<256x64xf32>
    %48 = arith.extf %38 : vector<256x64xbf16> to vector<256x64xf32>
    %49 = arith.mulf %48, %47 : vector<256x64xf32>
    %50 = arith.truncf %49 : vector<256x64xf32> to vector<256x64xbf16>
    %c0_32 = arith.constant 0 : index
    %c0_33 = arith.constant 0 : index
    %51 = vector.load %arg11[%c0_32, %c0_33] : memref<64x128xbf16, #tpu.memory_space<vmem>>, vector<64x128xbf16>
    %cst_34 = arith.constant dense<0.000000e+00> : vector<256x128xf32>
    %52 = tpu.matmul %50, %51, %cst_34 {dimension_numbers = #tpu.dot_dimension_numbers<[1], [0], [0], [1], [0, 0, 1, 1], [], []>} : vector<256x64xbf16>, vector<64x128xbf16>, vector<256x128xf32> -> vector<256x128xf32>
    %cst_35 = arith.constant 1.500000e+00 : f32
    %53 = vector.broadcast %cst_35 : f32 to vector<256x1xf32>
    %54 = arith.cmpf olt, %0, %53 : vector<256x1xf32>
    %55 = arith.extui %54 : vector<256x1xi1> to vector<256x1xi32>
    %56 = arith.sitofp %55 : vector<256x1xi32> to vector<256x1xf32>
    %57 = arith.mulf %25, %34 : vector<256x128xf32>
    %58 = arith.addf %37, %52 : vector<256x128xf32>
    %59 = arith.mulf %57, %58 : vector<256x128xf32>
    %60 = vector.broadcast %56 : vector<256x1xf32> to vector<256x128xf32>
    %61 = arith.mulf %59, %60 : vector<256x128xf32>
    %c0_36 = arith.constant 0 : index
    %c0_37 = arith.constant 0 : index
    %62 = vector.load %arg12[%c0_36, %c0_37] : memref<256x128xf32, #tpu.memory_space<vmem>>, vector<256x128xf32>
    tpu.vector_store %arg12[%c0_36, %c0_37], %61 {strides = array<i32>} : memref<256x128xf32, #tpu.memory_space<vmem>>, vector<256x128xf32>,
    return
  }
  func.func @transform_0(%arg0: i32) -> (i32, i32) {
    %c0_i32 = arith.constant 0 : i32
    %c0_i32_0 = arith.constant 0 : i32
    return %arg0, %c0_i32 : i32, i32
  }
  func.func @transform_1(%arg0: i32) -> (i32, i32) {
    %c0_i32 = arith.constant 0 : i32
    %c0_i32_0 = arith.constant 0 : i32
    return %arg0, %c0_i32 : i32, i32
  }
  func.func @transform_2(%arg0: i32) -> (i32, i32) {
    %c0_i32 = arith.constant 0 : i32
    %c0_i32_0 = arith.constant 0 : i32
    return %arg0, %c0_i32 : i32, i32
  }
  func.func @transform_3(%arg0: i32) -> (i32, i32) {
    %c0_i32 = arith.constant 0 : i32
    %c0_i32_0 = arith.constant 0 : i32
    return %arg0, %c0_i32 : i32, i32
  }
  func.func @transform_4(%arg0: i32) -> (i32, i32) {
    %c0_i32 = arith.constant 0 : i32
    %c0_i32_0 = arith.constant 0 : i32
    return %arg0, %c0_i32 : i32, i32
  }
  func.func @transform_5(%arg0: i32) -> (i32, i32) {
    %c0_i32 = arith.constant 0 : i32
    %c0_i32_0 = arith.constant 0 : i32
    %c0_i32_1 = arith.constant 0 : i32
    return %c0_i32, %c0_i32_0 : i32, i32
  }
  func.func @transform_6(%arg0: i32) -> (i32, i32) {
    %c0_i32 = arith.constant 0 : i32
    %c0_i32_0 = arith.constant 0 : i32
    %c0_i32_1 = arith.constant 0 : i32
    return %c0_i32, %c0_i32_0 : i32, i32
  }
  func.func @transform_7(%arg0: i32) -> (i32, i32) {
    %c0_i32 = arith.constant 0 : i32
    %c0_i32_0 = arith.constant 0 : i32
    %c0_i32_1 = arith.constant 0 : i32
    return %c0_i32, %c0_i32_0 : i32, i32
  }
  func.func @transform_8(%arg0: i32) -> (i32, i32) {
    %c0_i32 = arith.constant 0 : i32
    %c0_i32_0 = arith.constant 0 : i32
    %c0_i32_1 = arith.constant 0 : i32
    return %c0_i32, %c0_i32_0 : i32, i32
  }
  func.func @transform_9(%arg0: i32) -> (i32, i32) {
    %c0_i32 = arith.constant 0 : i32
    %c0_i32_0 = arith.constant 0 : i32
    %c0_i32_1 = arith.constant 0 : i32
    return %c0_i32, %c0_i32_0 : i32, i32
  }
  func.func @transform_10(%arg0: i32) -> (i32, i32) {
    %c0_i32 = arith.constant 0 : i32
    %c0_i32_0 = arith.constant 0 : i32
    %c0_i32_1 = arith.constant 0 : i32
    return %c0_i32, %c0_i32_0 : i32, i32
  }
  func.func @transform_11(%arg0: i32) -> (i32, i32) {
    %c0_i32 = arith.constant 0 : i32
    %c0_i32_0 = arith.constant 0 : i32
    return %arg0, %c0_i32 : i32, i32
  }
}

</mosaic_0001>

<llo_original>
// kernel: tpu_custom_call.1
$region0: #{tpu_custom_call.1}
  #allocation0 [shape = 'u32[]', space=smem, size = 0x4, offset = 0x4, fixed_abs, tag = 'smem constant byte address 0x4 - core index']
  #allocation1 [shape = 'u32[144,128]{1,0:T(1,128)}', space=vmem, size = 0x12000, scoped, tag = 'internal scratch']
  %s0 = inlined_call_operand.vmem [shape: bf16[768,32], index: 0, kind: input, shape index: {}]
  %s1 = inlined_call_operand.vmem [shape: bf16[768,32], index: 1, kind: input, shape index: {}]
  %s2 = inlined_call_operand.vmem [shape: f32[768,1], index: 2, kind: input, shape index: {}]
  %s3 = inlined_call_operand.vmem [shape: bf16[768,32], index: 3, kind: input, shape index: {}]
  %s4 = inlined_call_operand.vmem [shape: bf16[768,64], index: 4, kind: input, shape index: {}]
  %s5 = inlined_call_operand.vmem [shape: bf16[32,256], index: 5, kind: input, shape index: {}]
  %s6 = inlined_call_operand.vmem [shape: bf16[32,256], index: 6, kind: input, shape index: {}]
  %s7 = inlined_call_operand.vmem [shape: bf16[32,256], index: 7, kind: input, shape index: {}]
  %s8 = inlined_call_operand.vmem [shape: bf16[32,128], index: 8, kind: input, shape index: {}]
  %s9 = inlined_call_operand.vmem [shape: bf16[64,64], index: 9, kind: input, shape index: {}]
  %s10 = inlined_call_operand.vmem [shape: bf16[64,128], index: 10, kind: input, shape index: {}]
  %s11 = inlined_call_operand.hbm [shape: f32[768,128], index: 11, kind: output, shape index: {}]
  %s12 = sld [smem:[#allocation0]]
  $region77: #{tpu_custom_call.1} parent=0
    _
  %s14 = ssub.s32 1, %s12
  %s15 = scalar_select 0, %s14, %s12
  $region1: #{tpu_custom_call.1} parent=0
    #allocation2 [shape = 'u8[262144]{0}', space=vmem, size = 0x40000, scoped, tag = 'output window, operand 0']
    #allocation3 [shape = 's32[2]{0}', space=sflag, size = 0x8, scoped, tag = 'scoped memory for tpu_custom_call.1']
    %16 = vsyncpa [#allocation3], 0
    %s17 = scalar_lea.sflag [#allocation3], 1
    %18 = vsyncpa %s17, 0
    loop: start=0, step=1, limit=5
    $region2: #{tpu_custom_call.1} parent=1 // loop_pre_header
      _
    $region3: #{tpu_custom_call.1} parent=1 // loop_header
      %s20 = sphi 0, %s24
      %p21 = scmp.ge.s32.totalorder %s20, 5
      %s30 = sphi 0, %s32
      %s33 = sphi 0, %s30
      %s34 = sphi 0, %s33
      %s50 = sphi 0, %s34
      %s56 = sphi 0, %s58
      %s59 = sphi 0, %s56
      %s60 = sphi 0, %s59
      %s76 = sphi 0, %s60
      %s82 = sphi 0, %s84
      %s85 = sphi 0, %s82
      %s86 = sphi 0, %s85
      %s102 = sphi 0, %s86
      %s108 = sphi 0, %s110
      %s111 = sphi 0, %s108
      %s112 = sphi 0, %s111
      %s128 = sphi 0, %s112
      %s134 = sphi 0, %s136
      %s137 = sphi 0, %s134
      %s138 = sphi 0, %s137
      %s154 = sphi 0, %s138
      %s158 = sphi 0, %s158
      %s160 = sphi 0, %s158
      %s161 = sphi 0, %s160
      %s175 = sphi 0, %s161
      %s179 = sphi 0, %s179
      %s181 = sphi 0, %s179
      %s182 = sphi 0, %s181
      %s196 = sphi 0, %s182
      %s200 = sphi 0, %s200
      %s202 = sphi 0, %s200
      %s203 = sphi 0, %s202
      %s217 = sphi 0, %s203
      %s221 = sphi 0, %s221
      %s223 = sphi 0, %s221
      %s224 = sphi 0, %s223
      %s238 = sphi 0, %s224
      %s242 = sphi 0, %s242
      %s244 = sphi 0, %s242
      %s245 = sphi 0, %s244
      %s259 = sphi 0, %s245
      %s263 = sphi 0, %s263
      %s265 = sphi 0, %s263
      %s266 = sphi 0, %s265
      %s280 = sphi 0, %s266
      %s286 = sphi 0, %s288
      %s289 = sphi 0, %s286
      %s290 = sphi 0, %s289
      %s306 = sphi 0, %s290
    $region4: #{tpu_custom_call.1} parent=1 // loop_header_branch
      %23 = sbr.rel (%p21) target = $region8
    $region5: #{tpu_custom_call.1} parent=1 // loop_body
      %s25 = ssub.s32 %s20, 1
      %s26 = ssub.s32 %s20, 2
      %s27 = sadd.s32 %s20, 1
      %s28 = ssub.s32 %s20, %s27
      %p29 = scmp.eq.s32.totalorder %s28, 0
      %s31 = sadd.s32 %s30, 1
      %s32 = scalar_select %p29, %s30, %s31
      %p35 = pneg %p29
      %p36 = scmp.eq.s32.totalorder %s20, 2
      %p37 = por %p35, %p36
      %p38 = scmp.ne.s32.totalorder %s30, %s33
      %p39 = scmp.eq.s32.totalorder %s20, 0
      %p40 = por %p38, %p39
      %p41 = scmp.ne.s32.totalorder %s30, %s33
      %p42 = scmp.eq.s32.totalorder %s25, 2
      %p43 = por %p41, %p42
      %p44 = scmp.ne.s32.totalorder %s33, %s34
      %p45 = scmp.eq.s32.totalorder %s25, 0
      %p46 = por %p44, %p45
      %p47 = scmp.ne.s32.totalorder %s33, %s34
      %p48 = scmp.eq.s32.totalorder %s26, 2
      %p49 = por %p47, %p48
      %p51 = scmp.ne.s32.totalorder %s34, %s50
      %p52 = scmp.eq.s32.totalorder %s26, 0
      %p53 = por %p51, %p52
      %s54 = ssub.s32 %s20, %s27
      %p55 = scmp.eq.s32.totalorder %s54, 0
      %s57 = sadd.s32 %s56, 1
      %s58 = scalar_select %p55, %s56, %s57
      %p61 = pneg %p55
      %p62 = scmp.eq.s32.totalorder %s20, 2
      %p63 = por %p61, %p62
      %p64 = scmp.ne.s32.totalorder %s56, %s59
      %p65 = scmp.eq.s32.totalorder %s20, 0
      %p66 = por %p64, %p65
      %p67 = scmp.ne.s32.totalorder %s56, %s59
      %p68 = scmp.eq.s32.totalorder %s25, 2
      %p69 = por %p67, %p68
      %p70 = scmp.ne.s32.totalorder %s59, %s60
      %p71 = scmp.eq.s32.totalorder %s25, 0
      %p72 = por %p70, %p71
      %p73 = scmp.ne.s32.totalorder %s59, %s60
      %p74 = scmp.eq.s32.totalorder %s26, 2
      %p75 = por %p73, %p74
      %p77 = scmp.ne.s32.totalorder %s60, %s76
      %p78 = scmp.eq.s32.totalorder %s26, 0
      %p79 = por %p77, %p78
      %s80 = ssub.s32 %s20, %s27
      %p81 = scmp.eq.s32.totalorder %s80, 0
      %s83 = sadd.s32 %s82, 1
      %s84 = scalar_select %p81, %s82, %s83
      %p87 = pneg %p81
      %p88 = scmp.eq.s32.totalorder %s20, 2
      %p89 = por %p87, %p88
      %p90 = scmp.ne.s32.totalorder %s82, %s85
      %p91 = scmp.eq.s32.totalorder %s20, 0
      %p92 = por %p90, %p91
      %p93 = scmp.ne.s32.totalorder %s82, %s85
      %p94 = scmp.eq.s32.totalorder %s25, 2
      %p95 = por %p93, %p94
      %p96 = scmp.ne.s32.totalorder %s85, %s86
      %p97 = scmp.eq.s32.totalorder %s25, 0
      %p98 = por %p96, %p97
      %p99 = scmp.ne.s32.totalorder %s85, %s86
      %p100 = scmp.eq.s32.totalorder %s26, 2
      %p101 = por %p99, %p100
      %p103 = scmp.ne.s32.totalorder %s86, %s102
      %p104 = scmp.eq.s32.totalorder %s26, 0
      %p105 = por %p103, %p104
      %s106 = ssub.s32 %s20, %s27
      %p107 = scmp.eq.s32.totalorder %s106, 0
      %s109 = sadd.s32 %s108, 1
      %s110 = scalar_select %p107, %s108, %s109
      %p113 = pneg %p107
      %p114 = scmp.eq.s32.totalorder %s20, 2
      %p115 = por %p113, %p114
      %p116 = scmp.ne.s32.totalorder %s108, %s111
      %p117 = scmp.eq.s32.totalorder %s20, 0
      %p118 = por %p116, %p117
      %p119 = scmp.ne.s32.totalorder %s108, %s111
      %p120 = scmp.eq.s32.totalorder %s25, 2
      %p121 = por %p119, %p120
      %p122 = scmp.ne.s32.totalorder %s111, %s112
      %p123 = scmp.eq.s32.totalorder %s25, 0
      %p124 = por %p122, %p123
      %p125 = scmp.ne.s32.totalorder %s111, %s112
      %p126 = scmp.eq.s32.totalorder %s26, 2
      %p127 = por %p125, %p126
      %p129 = scmp.ne.s32.totalorder %s112, %s128
      %p130 = scmp.eq.s32.totalorder %s26, 0
      %p131 = por %p129, %p130
      %s132 = ssub.s32 %s20, %s27
      %p133 = scmp.eq.s32.totalorder %s132, 0
      %s135 = sadd.s32 %s134, 1
      %s136 = scalar_select %p133, %s134, %s135
      %p139 = pneg %p133
      %p140 = scmp.eq.s32.totalorder %s20, 2
      %p141 = por %p139, %p140
      %p142 = scmp.ne.s32.totalorder %s134, %s137
      %p143 = scmp.eq.s32.totalorder %s20, 0
      %p144 = por %p142, %p143
      %p145 = scmp.ne.s32.totalorder %s134, %s137
      %p146 = scmp.eq.s32.totalorder %s25, 2
      %p147 = por %p145, %p146
      %p148 = scmp.ne.s32.totalorder %s137, %s138
      %p149 = scmp.eq.s32.totalorder %s25, 0
      %p150 = por %p148, %p149
      %p151 = scmp.ne.s32.totalorder %s137, %s138
      %p152 = scmp.eq.s32.totalorder %s26, 2
      %p153 = por %p151, %p152
      %p155 = scmp.ne.s32.totalorder %s138, %s154
      %p156 = scmp.eq.s32.totalorder %s26, 0
      %p157 = por %p155, %p156
      %s159 = sadd.s32 %s158, 1
      %p162 = scmp.eq.s32.totalorder %s20, 2
      %p163 = scmp.ne.s32.totalorder %s158, %s160
      %p164 = scmp.eq.s32.totalorder %s20, 0
      %p165 = por %p163, %p164
      %p166 = scmp.ne.s32.totalorder %s158, %s160
      %p167 = scmp.eq.s32.totalorder %s25, 2
      %p168 = por %p166, %p167
      %p169 = scmp.ne.s32.totalorder %s160, %s161
      %p170 = scmp.eq.s32.totalorder %s25, 0
      %p171 = por %p169, %p170
      %p172 = scmp.ne.s32.totalorder %s160, %s161
      %p173 = scmp.eq.s32.totalorder %s26, 2
      %p174 = por %p172, %p173
      %p176 = scmp.ne.s32.totalorder %s161, %s175
      %p177 = scmp.eq.s32.totalorder %s26, 0
      %p178 = por %p176, %p177
      %s180 = sadd.s32 %s179, 1
      %p183 = scmp.eq.s32.totalorder %s20, 2
      %p184 = scmp.ne.s32.totalorder %s179, %s181
      %p185 = scmp.eq.s32.totalorder %s20, 0
      %p186 = por %p184, %p185
      %p187 = scmp.ne.s32.totalorder %s179, %s181
      %p188 = scmp.eq.s32.totalorder %s25, 2
      %p189 = por %p187, %p188
      %p190 = scmp.ne.s32.totalorder %s181, %s182
      %p191 = scmp.eq.s32.totalorder %s25, 0
      %p192 = por %p190, %p191
      %p193 = scmp.ne.s32.totalorder %s181, %s182
      %p194 = scmp.eq.s32.totalorder %s26, 2
      %p195 = por %p193, %p194
      %p197 = scmp.ne.s32.totalorder %s182, %s196
      %p198 = scmp.eq.s32.totalorder %s26, 0
      %p199 = por %p197, %p198
      %s201 = sadd.s32 %s200, 1
      %p204 = scmp.eq.s32.totalorder %s20, 2
      %p205 = scmp.ne.s32.totalorder %s200, %s202
      %p206 = scmp.eq.s32.totalorder %s20, 0
      %p207 = por %p205, %p206
      %p208 = scmp.ne.s32.totalorder %s200, %s202
      %p209 = scmp.eq.s32.totalorder %s25, 2
      %p210 = por %p208, %p209
      %p211 = scmp.ne.s32.totalorder %s202, %s203
      %p212 = scmp.eq.s32.totalorder %s25, 0
      %p213 = por %p211, %p212
      %p214 = scmp.ne.s32.totalorder %s202, %s203
      %p215 = scmp.eq.s32.totalorder %s26, 2
      %p216 = por %p214, %p215
      %p218 = scmp.ne.s32.totalorder %s203, %s217
      %p219 = scmp.eq.s32.totalorder %s26, 0
      %p220 = por %p218, %p219
      %s222 = sadd.s32 %s221, 1
      %p225 = scmp.eq.s32.totalorder %s20, 2
      %p226 = scmp.ne.s32.totalorder %s221, %s223
      %p227 = scmp.eq.s32.totalorder %s20, 0
      %p228 = por %p226, %p227
      %p229 = scmp.ne.s32.totalorder %s221, %s223
      %p230 = scmp.eq.s32.totalorder %s25, 2
      %p231 = por %p229, %p230
      %p232 = scmp.ne.s32.totalorder %s223, %s224
      %p233 = scmp.eq.s32.totalorder %s25, 0
      %p234 = por %p232, %p233
      %p235 = scmp.ne.s32.totalorder %s223, %s224
      %p236 = scmp.eq.s32.totalorder %s26, 2
      %p237 = por %p235, %p236
      %p239 = scmp.ne.s32.totalorder %s224, %s238
      %p240 = scmp.eq.s32.totalorder %s26, 0
      %p241 = por %p239, %p240
      %s243 = sadd.s32 %s242, 1
      %p246 = scmp.eq.s32.totalorder %s20, 2
      %p247 = scmp.ne.s32.totalorder %s242, %s244
      %p248 = scmp.eq.s32.totalorder %s20, 0
      %p249 = por %p247, %p248
      %p250 = scmp.ne.s32.totalorder %s242, %s244
      %p251 = scmp.eq.s32.totalorder %s25, 2
      %p252 = por %p250, %p251
      %p253 = scmp.ne.s32.totalorder %s244, %s245
      %p254 = scmp.eq.s32.totalorder %s25, 0
      %p255 = por %p253, %p254
      %p256 = scmp.ne.s32.totalorder %s244, %s245
      %p257 = scmp.eq.s32.totalorder %s26, 2
      %p258 = por %p256, %p257
      %p260 = scmp.ne.s32.totalorder %s245, %s259
      %p261 = scmp.eq.s32.totalorder %s26, 0
      %p262 = por %p260, %p261
      %s264 = sadd.s32 %s263, 1
      %p267 = scmp.eq.s32.totalorder %s20, 2
      %p268 = scmp.ne.s32.totalorder %s263, %s265
      %p269 = scmp.eq.s32.totalorder %s20, 0
      %p270 = por %p268, %p269
      %p271 = scmp.ne.s32.totalorder %s263, %s265
      %p272 = scmp.eq.s32.totalorder %s25, 2
      %p273 = por %p271, %p272
      %p274 = scmp.ne.s32.totalorder %s265, %s266
      %p275 = scmp.eq.s32.totalorder %s25, 0
      %p276 = por %p274, %p275
      %p277 = scmp.ne.s32.totalorder %s265, %s266
      %p278 = scmp.eq.s32.totalorder %s26, 2
      %p279 = por %p277, %p278
      %p281 = scmp.ne.s32.totalorder %s266, %s280
      %p282 = scmp.eq.s32.totalorder %s26, 0
      %p283 = por %p281, %p282
      %s284 = ssub.s32 %s20, %s27
      %p285 = scmp.eq.s32.totalorder %s284, 0
      %s287 = sadd.s32 %s286, 1
      %s288 = scalar_select %p285, %s286, %s287
      %p291 = pneg %p285
      %p292 = scmp.eq.s32.totalorder %s20, 2
      %p293 = por %p291, %p292
      %p294 = scmp.ne.s32.totalorder %s286, %s289
      %p295 = scmp.eq.s32.totalorder %s20, 0
      %p296 = por %p294, %p295
      %p297 = scmp.ne.s32.totalorder %s286, %s289
      %p298 = scmp.eq.s32.totalorder %s25, 2
      %p299 = por %p297, %p298
      %p300 = scmp.ne.s32.totalorder %s289, %s290
      %p301 = scmp.eq.s32.totalorder %s25, 0
      %p302 = por %p300, %p301
      %p303 = scmp.ne.s32.totalorder %s289, %s290
      %p304 = scmp.eq.s32.totalorder %s26, 2
      %p305 = por %p303, %p304
      %p307 = scmp.ne.s32.totalorder %s290, %s306
      %p308 = scmp.eq.s32.totalorder %s26, 0
      %p309 = por %p307, %p308
      %p310 = scmp.le.s32.totalorder 1, %s20
      %p311 = scmp.lt.s32.totalorder %s20, 4
      %p312 = pnand %p310, %p311
      %p313 = pneg %p312
      // Predicated region
      $region9: #{tpu_custom_call.1} parent=5 // pred_check
        _
      $region10: #{tpu_custom_call.1} parent=5 // pred_check_branch
        %315 = sbr.rel (%p312) target = $region12
      $region11: #{tpu_custom_call.1} parent=5 // pred_region
        %s316 = ssub.s32 %s20, 1
        // Predicated region
        $region13: #{tpu_custom_call.1} parent=11 // pred_check
          %p317 = pneg %p171
        $region14: #{tpu_custom_call.1} parent=11 // pred_check_branch
          %319 = sbr.rel (%p317) target = $region16
        $region15: #{tpu_custom_call.1} parent=11 // pred_region
          _
        $region16: #{tpu_custom_call.1} parent=11 // pred_fallthru
          _
        // Predicated region
        $region17: #{tpu_custom_call.1} parent=11 // pred_check
          %p320 = pneg %p192
        $region18: #{tpu_custom_call.1} parent=11 // pred_check_branch
          %322 = sbr.rel (%p320) target = $region20
        $region19: #{tpu_custom_call.1} parent=11 // pred_region
          _
        $region20: #{tpu_custom_call.1} parent=11 // pred_fallthru
          _
        // Predicated region
        $region21: #{tpu_custom_call.1} parent=11 // pred_check
          %p323 = pneg %p213
        $region22: #{tpu_custom_call.1} parent=11 // pred_check_branch
          %325 = sbr.rel (%p323) target = $region24
        $region23: #{tpu_custom_call.1} parent=11 // pred_region
          _
        $region24: #{tpu_custom_call.1} parent=11 // pred_fallthru
          _
        // Predicated region
        $region25: #{tpu_custom_call.1} parent=11 // pred_check
          %p326 = pneg %p234
        $region26: #{tpu_custom_call.1} parent=11 // pred_check_branch
          %328 = sbr.rel (%p326) target = $region28
        $region27: #{tpu_custom_call.1} parent=11 // pred_region
          _
        $region28: #{tpu_custom_call.1} parent=11 // pred_fallthru
          _
        // Predicated region
        $region29: #{tpu_custom_call.1} parent=11 // pred_check
          %p329 = pneg %p255
        $region30: #{tpu_custom_call.1} parent=11 // pred_check_branch
          %331 = sbr.rel (%p329) target = $region32
        $region31: #{tpu_custom_call.1} parent=11 // pred_region
          _
        $region32: #{tpu_custom_call.1} parent=11 // pred_fallthru
          _
        // Predicated region
        $region33: #{tpu_custom_call.1} parent=11 // pred_check
          %p332 = pneg %p276
        $region34: #{tpu_custom_call.1} parent=11 // pred_check_branch
          %334 = sbr.rel (%p332) target = $region36
        $region35: #{tpu_custom_call.1} parent=11 // pred_region
          _
        $region36: #{tpu_custom_call.1} parent=11 // pred_fallthru
          _
      $region12: #{tpu_custom_call.1} parent=5 // pred_fallthru
        _
      %p335 = scmp.lt.s32.totalorder %s20, 3
      // Predicated region
      $region37: #{tpu_custom_call.1} parent=5 // pred_check
        %p336 = pneg %p335
      $region38: #{tpu_custom_call.1} parent=5 // pred_check_branch
        %338 = sbr.rel (%p336) target = $region40
      $region39: #{tpu_custom_call.1} parent=5 // pred_region
        // Predicated region
        $region41: #{tpu_custom_call.1} parent=39 // pred_check
          %p339 = pneg %p40
        $region42: #{tpu_custom_call.1} parent=39 // pred_check_branch
          %341 = sbr.rel (%p339) target = $region44
        $region43: #{tpu_custom_call.1} parent=39 // pred_region
          %s342 = smul.u32 32, %s20
          %p343 = scmp.lt.s32.totalorder %s342, 95
          %s344 = scalar_select %p343, %s342, 95
          %s345 = smul.addr %s344, 4
          %s346 = scalar_lea.vmem %s0, %s345
          %s347 = smul.u32 32, %s20
        $region44: #{tpu_custom_call.1} parent=39 // pred_fallthru
          _
        // Predicated region
        $region45: #{tpu_custom_call.1} parent=39 // pred_check
          %p348 = pneg %p66
        $region46: #{tpu_custom_call.1} parent=39 // pred_check_branch
          %350 = sbr.rel (%p348) target = $region48
        $region47: #{tpu_custom_call.1} parent=39 // pred_region
          %s351 = smul.u32 32, %s20
          %p352 = scmp.lt.s32.totalorder %s351, 95
          %s353 = scalar_select %p352, %s351, 95
          %s354 = smul.addr %s353, 4
          %s355 = scalar_lea.vmem %s1, %s354
          %s356 = smul.u32 32, %s20
        $region48: #{tpu_custom_call.1} parent=39 // pred_fallthru
          _
        // Predicated region
        $region49: #{tpu_custom_call.1} parent=39 // pred_check
          %p357 = pneg %p92
        $region50: #{tpu_custom_call.1} parent=39 // pred_check_branch
          %359 = sbr.rel (%p357) target = $region52
        $region51: #{tpu_custom_call.1} parent=39 // pred_region
          %s360 = smul.u32 32, %s20
          %p361 = scmp.lt.s32.totalorder %s360, 95
          %s362 = scalar_select %p361, %s360, 95
          %s363 = smul.addr %s362, 8
          %s364 = scalar_lea.vmem %s2, %s363
          %s365 = smul.u32 32, %s20
        $region52: #{tpu_custom_call.1} parent=39 // pred_fallthru
          _
        // Predicated region
        $region53: #{tpu_custom_call.1} parent=39 // pred_check
          %p366 = pneg %p118
        $region54: #{tpu_custom_call.1} parent=39 // pred_check_branch
          %368 = sbr.rel (%p366) target = $region56
        $region55: #{tpu_custom_call.1} parent=39 // pred_region
          %s369 = smul.u32 32, %s20
          %p370 = scmp.lt.s32.totalorder %s369, 95
          %s371 = scalar_select %p370, %s369, 95
          %s372 = smul.addr %s371, 4
          %s373 = scalar_lea.vmem %s3, %s372
          %s374 = smul.u32 32, %s20
        $region56: #{tpu_custom_call.1} parent=39 // pred_fallthru
          _
        // Predicated region
        $region57: #{tpu_custom_call.1} parent=39 // pred_check
          %p375 = pneg %p144
        $region58: #{tpu_custom_call.1} parent=39 // pred_check_branch
          %377 = sbr.rel (%p375) target = $region60
        $region59: #{tpu_custom_call.1} parent=39 // pred_region
          %s378 = smul.u32 32, %s20
          %p379 = scmp.lt.s32.totalorder %s378, 95
          %s380 = scalar_select %p379, %s378, 95
          %s381 = smul.addr %s380, 4
          %s382 = scalar_lea.vmem %s4, %s381
          %s383 = smul.u32 32, %s20
        $region60: #{tpu_custom_call.1} parent=39 // pred_fallthru
          _
      $region40: #{tpu_custom_call.1} parent=5 // pred_fallthru
        _
      %p384 = scmp.le.s32.totalorder 1, %s20
      %p385 = scmp.lt.s32.totalorder %s20, 4
      %p386 = pnand %p384, %p385
      %p387 = pneg %p386
      // Predicated region
      $region61: #{tpu_custom_call.1} parent=5 // pred_check
        _
      $region62: #{tpu_custom_call.1} parent=5 // pred_check_branch
        %389 = sbr.rel (%p386) target = $region64
      $region63: #{tpu_custom_call.1} parent=5 // pred_region
        %s390 = ssub.s32 %s20, 1
        %s391 = smul.u32 32, %s25
        %p392 = scmp.lt.s32.totalorder %s391, 95
        %s393 = scalar_select %p392, %s391, 95
        %s394 = smul.addr %s393, 4
        %s395 = scalar_lea.vmem %s0, %s394
        %p396 = pneg %p46
        %p397 = pneg %p43
        %s398 = smul.u32 32, %s25
        %p399 = scmp.lt.s32.totalorder %s398, 95
        %s400 = scalar_select %p399, %s398, 95
        %s401 = smul.addr %s400, 4
        %s402 = scalar_lea.vmem %s1, %s401
        %p403 = pneg %p72
        %p404 = pneg %p69
        %s405 = smul.u32 32, %s25
        %p406 = scmp.lt.s32.totalorder %s405, 95
        %s407 = scalar_select %p406, %s405, 95
        %s408 = smul.addr %s407, 8
        %s409 = scalar_lea.vmem %s2, %s408
        %p410 = pneg %p98
        %p411 = pneg %p95
        %s412 = smul.u32 32, %s25
        %p413 = scmp.lt.s32.totalorder %s412, 95
        %s414 = scalar_select %p413, %s412, 95
        %s415 = smul.addr %s414, 4
        %s416 = scalar_lea.vmem %s3, %s415
        %p417 = pneg %p124
        %p418 = pneg %p121
        %s419 = smul.u32 32, %s25
        %p420 = scmp.lt.s32.totalorder %s419, 95
        %s421 = scalar_select %p420, %s419, 95
        %s422 = smul.addr %s421, 4
        %s423 = scalar_lea.vmem %s4, %s422
        %p424 = pneg %p150
        %p425 = pneg %p147
        %p426 = pneg %p171
        %p427 = pneg %p168
        %p428 = pneg %p192
        %p429 = pneg %p189
        %p430 = pneg %p213
        %p431 = pneg %p210
        %p432 = pneg %p234
        %p433 = pneg %p231
        %p434 = pneg %p255
        %p435 = pneg %p252
        %p436 = pneg %p276
        %p437 = pneg %p273
        %p438 = pneg %p302
        %p439 = pneg %p299
        %s440 = sand.u32 %s289, 1
        %s441 = scalar_lea.sflag [#allocation3], %s440
        %s442 = sand.u32 %s289, 1
        %s443 = smul.addr %s442, 256
        %s444 = scalar_lea.vmem [#allocation2], %s443
        %s445 = smul.u32 32, %s25
        %p446 = scmp.lt.s32.totalorder %s445, 95
        %s447 = scalar_select %p446, %s445, 95
        %s448 = smul.addr %s447, 4
        %s449 = scalar_lea.vmem %s0, %s448
        %s450 = smul.u32 32, %s25
        %s451 = smul.u32 32, %s25
        %p452 = scmp.lt.s32.totalorder %s451, 95
        %s453 = scalar_select %p452, %s451, 95
        %s454 = smul.addr %s453, 4
        %s455 = scalar_lea.vmem %s1, %s454
        %s456 = smul.u32 32, %s25
        %s457 = smul.u32 32, %s25
        %p458 = scmp.lt.s32.totalorder %s457, 95
        %s459 = scalar_select %p458, %s457, 95
        %s460 = smul.addr %s459, 8
        %s461 = scalar_lea.vmem %s2, %s460
        %s462 = smul.u32 32, %s25
        %s463 = smul.u32 32, %s25
        %p464 = scmp.lt.s32.totalorder %s463, 95
        %s465 = scalar_select %p464, %s463, 95
        %s466 = smul.addr %s465, 4
        %s467 = scalar_lea.vmem %s3, %s466
        %s468 = smul.u32 32, %s25
        %s469 = smul.u32 32, %s25
        %p470 = scmp.lt.s32.totalorder %s469, 95
        %s471 = scalar_select %p470, %s469, 95
        %s472 = smul.addr %s471, 4
        %s473 = scalar_lea.vmem %s4, %s472
        %s474 = smul.u32 32, %s25
        %s475 = smul.u32 32, %s25
        %v477 = vld [vmem:[%s461] sm:$0xff]
        %v478 = vld [vmem:[%s461 + $0x8] sm:$0xff]
        %v479 = vld [vmem:[%s461 + $0x10] sm:$0xff]
        %v480 = vld [vmem:[%s461 + $0x18] sm:$0xff]
        %v481 = vld [vmem:[%s461 + $0x20] sm:$0xff]
        %v482 = vld [vmem:[%s461 + $0x28] sm:$0xff]
        %v483 = vld [vmem:[%s461 + $0x30] sm:$0xff]
        %v484 = vld [vmem:[%s461 + $0x38] sm:$0xff]
        %v485 = vld [vmem:[%s461 + $0x40] sm:$0xff]
        %v486 = vld [vmem:[%s461 + $0x48] sm:$0xff]
        %v487 = vld [vmem:[%s461 + $0x50] sm:$0xff]
        %v488 = vld [vmem:[%s461 + $0x58] sm:$0xff]
        %v489 = vld [vmem:[%s461 + $0x60] sm:$0xff]
        %v490 = vld [vmem:[%s461 + $0x68] sm:$0xff]
        %v491 = vld [vmem:[%s461 + $0x70] sm:$0xff]
        %v492 = vld [vmem:[%s461 + $0x78] sm:$0xff]
        %v493 = vld [vmem:[%s461 + $0x80] sm:$0xff]
        %v494 = vld [vmem:[%s461 + $0x88] sm:$0xff]
        %v495 = vld [vmem:[%s461 + $0x90] sm:$0xff]
        %v496 = vld [vmem:[%s461 + $0x98] sm:$0xff]
        %v497 = vld [vmem:[%s461 + $0xa0] sm:$0xff]
        %v498 = vld [vmem:[%s461 + $0xa8] sm:$0xff]
        %v499 = vld [vmem:[%s461 + $0xb0] sm:$0xff]
        %v500 = vld [vmem:[%s461 + $0xb8] sm:$0xff]
        %v501 = vld [vmem:[%s461 + $0xc0] sm:$0xff]
        %v502 = vld [vmem:[%s461 + $0xc8] sm:$0xff]
        %v503 = vld [vmem:[%s461 + $0xd0] sm:$0xff]
        %v504 = vld [vmem:[%s461 + $0xd8] sm:$0xff]
        %v505 = vld [vmem:[%s461 + $0xe0] sm:$0xff]
        %v506 = vld [vmem:[%s461 + $0xe8] sm:$0xff]
        %v507 = vld [vmem:[%s461 + $0xf0] sm:$0xff]
        %v508 = vld [vmem:[%s461 + $0xf8] sm:$0xff]
        %v509 = vrcp.pop %v477
        %v510 = vrcp.pop %v478
        %v511 = vrcp.pop %v479
        %v512 = vrcp.pop %v480
        %v513 = vrcp.pop %v481
        %v514 = vrcp.pop %v482
        %v515 = vrcp.pop %v483
        %v516 = vrcp.pop %v484
        %v517 = vrcp.pop %v485
        %v518 = vrcp.pop %v486
        %v519 = vrcp.pop %v487
        %v520 = vrcp.pop %v488
        %v521 = vrcp.pop %v489
        %v522 = vrcp.pop %v490
        %v523 = vrcp.pop %v491
        %v524 = vrcp.pop %v492
        %v525 = vrcp.pop %v493
        %v526 = vrcp.pop %v494
        %v527 = vrcp.pop %v495
        %v528 = vrcp.pop %v496
        %v529 = vrcp.pop %v497
        %v530 = vrcp.pop %v498
        %v531 = vrcp.pop %v499
        %v532 = vrcp.pop %v500
        %v533 = vrcp.pop %v501
        %v534 = vrcp.pop %v502
        %v535 = vrcp.pop %v503
        %v536 = vrcp.pop %v504
        %v537 = vrcp.pop %v505
        %v538 = vrcp.pop %v506
        %v539 = vrcp.pop %v507
        %v540 = vrcp.pop %v508
        %v541 = vld [vmem:[%s449] sm:$0xf]
        %v542 = vld [vmem:[%s449 + $0x4] sm:$0xf]
        %v543 = vld [vmem:[%s449 + $0x8] sm:$0xf]
        %v544 = vld [vmem:[%s449 + $0xc] sm:$0xf]
        %v545 = vld [vmem:[%s449 + $0x10] sm:$0xf]
        %v546 = vld [vmem:[%s449 + $0x14] sm:$0xf]
        %v547 = vld [vmem:[%s449 + $0x18] sm:$0xf]
        %v548 = vld [vmem:[%s449 + $0x1c] sm:$0xf]
        %v549 = vld [vmem:[%s449 + $0x20] sm:$0xf]
        %v550 = vld [vmem:[%s449 + $0x24] sm:$0xf]
        %v551 = vld [vmem:[%s449 + $0x28] sm:$0xf]
        %v552 = vld [vmem:[%s449 + $0x2c] sm:$0xf]
        %v553 = vld [vmem:[%s449 + $0x30] sm:$0xf]
        %v554 = vld [vmem:[%s449 + $0x34] sm:$0xf]
        %v555 = vld [vmem:[%s449 + $0x38] sm:$0xf]
        %v556 = vld [vmem:[%s449 + $0x3c] sm:$0xf]
        %v557 = vld [vmem:[%s449 + $0x40] sm:$0xf]
        %v558 = vld [vmem:[%s449 + $0x44] sm:$0xf]
        %v559 = vld [vmem:[%s449 + $0x48] sm:$0xf]
        %v560 = vld [vmem:[%s449 + $0x4c] sm:$0xf]
        %v561 = vld [vmem:[%s449 + $0x50] sm:$0xf]
        %v562 = vld [vmem:[%s449 + $0x54] sm:$0xf]
        %v563 = vld [vmem:[%s449 + $0x58] sm:$0xf]
        %v564 = vld [vmem:[%s449 + $0x5c] sm:$0xf]
        %v565 = vld [vmem:[%s449 + $0x60] sm:$0xf]
        %v566 = vld [vmem:[%s449 + $0x64] sm:$0xf]
        %v567 = vld [vmem:[%s449 + $0x68] sm:$0xf]
        %v568 = vld [vmem:[%s449 + $0x6c] sm:$0xf]
        %v569 = vld [vmem:[%s449 + $0x70] sm:$0xf]
        %v570 = vld [vmem:[%s449 + $0x74] sm:$0xf]
        %v571 = vld [vmem:[%s449 + $0x78] sm:$0xf]
        %v572 = vld [vmem:[%s449 + $0x7c] sm:$0xf]
        %v573 = vld [vmem:[%s455] sm:$0xf]
        %v574 = vld [vmem:[%s455 + $0x4] sm:$0xf]
        %v575 = vld [vmem:[%s455 + $0x8] sm:$0xf]
        %v576 = vld [vmem:[%s455 + $0xc] sm:$0xf]
        %v577 = vld [vmem:[%s455 + $0x10] sm:$0xf]
        %v578 = vld [vmem:[%s455 + $0x14] sm:$0xf]
        %v579 = vld [vmem:[%s455 + $0x18] sm:$0xf]
        %v580 = vld [vmem:[%s455 + $0x1c] sm:$0xf]
        %v581 = vld [vmem:[%s455 + $0x20] sm:$0xf]
        %v582 = vld [vmem:[%s455 + $0x24] sm:$0xf]
        %v583 = vld [vmem:[%s455 + $0x28] sm:$0xf]
        %v584 = vld [vmem:[%s455 + $0x2c] sm:$0xf]
        %v585 = vld [vmem:[%s455 + $0x30] sm:$0xf]
        %v586 = vld [vmem:[%s455 + $0x34] sm:$0xf]
        %v587 = vld [vmem:[%s455 + $0x38] sm:$0xf]
        %v588 = vld [vmem:[%s455 + $0x3c] sm:$0xf]
        %v589 = vld [vmem:[%s455 + $0x40] sm:$0xf]
        %v590 = vld [vmem:[%s455 + $0x44] sm:$0xf]
        %v591 = vld [vmem:[%s455 + $0x48] sm:$0xf]
        %v592 = vld [vmem:[%s455 + $0x4c] sm:$0xf]
        %v593 = vld [vmem:[%s455 + $0x50] sm:$0xf]
        %v594 = vld [vmem:[%s455 + $0x54] sm:$0xf]
        %v595 = vld [vmem:[%s455 + $0x58] sm:$0xf]
        %v596 = vld [vmem:[%s455 + $0x5c] sm:$0xf]
        %v597 = vld [vmem:[%s455 + $0x60] sm:$0xf]
        %v598 = vld [vmem:[%s455 + $0x64] sm:$0xf]
        %v599 = vld [vmem:[%s455 + $0x68] sm:$0xf]
        %v600 = vld [vmem:[%s455 + $0x6c] sm:$0xf]
        %v601 = vld [vmem:[%s455 + $0x70] sm:$0xf]
        %v602 = vld [vmem:[%s455 + $0x74] sm:$0xf]
        %v603 = vld [vmem:[%s455 + $0x78] sm:$0xf]
        %v604 = vld [vmem:[%s455 + $0x7c] sm:$0xf]
        %v605 = vunpack.c.l.bf16 %v541
        %v606 = vunpack.c.l.bf16 %v542
        %v607 = vunpack.c.l.bf16 %v543
        %v608 = vunpack.c.l.bf16 %v544
        %v609 = vunpack.c.l.bf16 %v545
        %v610 = vunpack.c.l.bf16 %v546
        %v611 = vunpack.c.l.bf16 %v547
        %v612 = vunpack.c.l.bf16 %v548
        %v613 = vunpack.c.l.bf16 %v549
        %v614 = vunpack.c.l.bf16 %v550
        %v615 = vunpack.c.l.bf16 %v551
        %v616 = vunpack.c.l.bf16 %v552
        %v617 = vunpack.c.l.bf16 %v553
        %v618 = vunpack.c.l.bf16 %v554
        %v619 = vunpack.c.l.bf16 %v555
        %v620 = vunpack.c.l.bf16 %v556
        %v621 = vunpack.c.l.bf16 %v557
        %v622 = vunpack.c.l.bf16 %v558
        %v623 = vunpack.c.l.bf16 %v559
        %v624 = vunpack.c.l.bf16 %v560
        %v625 = vunpack.c.l.bf16 %v561
        %v626 = vunpack.c.l.bf16 %v562
        %v627 = vunpack.c.l.bf16 %v563
        %v628 = vunpack.c.l.bf16 %v564
        %v629 = vunpack.c.l.bf16 %v565
        %v630 = vunpack.c.l.bf16 %v566
        %v631 = vunpack.c.l.bf16 %v567
        %v632 = vunpack.c.l.bf16 %v568
        %v633 = vunpack.c.l.bf16 %v569
        %v634 = vunpack.c.l.bf16 %v570
        %v635 = vunpack.c.l.bf16 %v571
        %v636 = vunpack.c.l.bf16 %v572
        %v637 = vunpack.c.l.bf16 %v573
        %v638 = vunpack.c.l.bf16 %v574
        %v639 = vunpack.c.l.bf16 %v575
        %v640 = vunpack.c.l.bf16 %v576
        %v641 = vunpack.c.l.bf16 %v577
        %v642 = vunpack.c.l.bf16 %v578
        %v643 = vunpack.c.l.bf16 %v579
        %v644 = vunpack.c.l.bf16 %v580
        %v645 = vunpack.c.l.bf16 %v581
        %v646 = vunpack.c.l.bf16 %v582
        %v647 = vunpack.c.l.bf16 %v583
        %v648 = vunpack.c.l.bf16 %v584
        %v649 = vunpack.c.l.bf16 %v585
        %v650 = vunpack.c.l.bf16 %v586
        %v651 = vunpack.c.l.bf16 %v587
        %v652 = vunpack.c.l.bf16 %v588
        %v653 = vunpack.c.l.bf16 %v589
        %v654 = vunpack.c.l.bf16 %v590
        %v655 = vunpack.c.l.bf16 %v591
        %v656 = vunpack.c.l.bf16 %v592
        %v657 = vunpack.c.l.bf16 %v593
        %v658 = vunpack.c.l.bf16 %v594
        %v659 = vunpack.c.l.bf16 %v595
        %v660 = vunpack.c.l.bf16 %v596
        %v661 = vunpack.c.l.bf16 %v597
        %v662 = vunpack.c.l.bf16 %v598
        %v663 = vunpack.c.l.bf16 %v599
        %v664 = vunpack.c.l.bf16 %v600
        %v665 = vunpack.c.l.bf16 %v601
        %v666 = vunpack.c.l.bf16 %v602
        %v667 = vunpack.c.l.bf16 %v603
        %v668 = vunpack.c.l.bf16 %v604
        %v669 = vsub.f32 %v605, %v637
        %v670 = vsub.f32 %v606, %v638
        %v671 = vsub.f32 %v607, %v639
        %v672 = vsub.f32 %v608, %v640
        %v673 = vsub.f32 %v609, %v641
        %v674 = vsub.f32 %v610, %v642
        %v675 = vsub.f32 %v611, %v643
        %v676 = vsub.f32 %v612, %v644
        %v677 = vsub.f32 %v613, %v645
        %v678 = vsub.f32 %v614, %v646
        %v679 = vsub.f32 %v615, %v647
        %v680 = vsub.f32 %v616, %v648
        %v681 = vsub.f32 %v617, %v649
        %v682 = vsub.f32 %v618, %v650
        %v683 = vsub.f32 %v619, %v651
        %v684 = vsub.f32 %v620, %v652
        %v685 = vsub.f32 %v621, %v653
        %v686 = vsub.f32 %v622, %v654
        %v687 = vsub.f32 %v623, %v655
        %v688 = vsub.f32 %v624, %v656
        %v689 = vsub.f32 %v625, %v657
        %v690 = vsub.f32 %v626, %v658
        %v691 = vsub.f32 %v627, %v659
        %v692 = vsub.f32 %v628, %v660
        %v693 = vsub.f32 %v629, %v661
        %v694 = vsub.f32 %v630, %v662
        %v695 = vsub.f32 %v631, %v663
        %v696 = vsub.f32 %v632, %v664
        %v697 = vsub.f32 %v633, %v665
        %v698 = vsub.f32 %v634, %v666
        %v699 = vsub.f32 %v635, %v667
        %v700 = vsub.f32 %v636, %v668
        %702 = vset.pattern.permute.xlu0 0
        %703 = vperm.xlu0 %702, %v509
        %v704 = vpop.permute.xlu0 %703
        %707 = vset.pattern.permute.xlu0 0
        %708 = vperm.xlu0 %707, %v510
        %v709 = vpop.permute.xlu0 %708
        %712 = vset.pattern.permute.xlu0 0
        %713 = vperm.xlu0 %712, %v511
        %v714 = vpop.permute.xlu0 %713
        %717 = vset.pattern.permute.xlu0 0
        %718 = vperm.xlu0 %717, %v512
        %v719 = vpop.permute.xlu0 %718
        %722 = vset.pattern.permute.xlu0 0
        %723 = vperm.xlu0 %722, %v513
        %v724 = vpop.permute.xlu0 %723
        %727 = vset.pattern.permute.xlu0 0
        %728 = vperm.xlu0 %727, %v514
        %v729 = vpop.permute.xlu0 %728
        %732 = vset.pattern.permute.xlu0 0
        %733 = vperm.xlu0 %732, %v515
        %v734 = vpop.permute.xlu0 %733
        %737 = vset.pattern.permute.xlu0 0
        %738 = vperm.xlu0 %737, %v516
        %v739 = vpop.permute.xlu0 %738
        %742 = vset.pattern.permute.xlu0 0
        %743 = vperm.xlu0 %742, %v517
        %v744 = vpop.permute.xlu0 %743
        %747 = vset.pattern.permute.xlu0 0
        %748 = vperm.xlu0 %747, %v518
        %v749 = vpop.permute.xlu0 %748
        %752 = vset.pattern.permute.xlu0 0
        %753 = vperm.xlu0 %752, %v519
        %v754 = vpop.permute.xlu0 %753
        %757 = vset.pattern.permute.xlu0 0
        %758 = vperm.xlu0 %757, %v520
        %v759 = vpop.permute.xlu0 %758
        %762 = vset.pattern.permute.xlu0 0
        %763 = vperm.xlu0 %762, %v521
        %v764 = vpop.permute.xlu0 %763
        %767 = vset.pattern.permute.xlu0 0
        %768 = vperm.xlu0 %767, %v522
        %v769 = vpop.permute.xlu0 %768
        %772 = vset.pattern.permute.xlu0 0
        %773 = vperm.xlu0 %772, %v523
        %v774 = vpop.permute.xlu0 %773
        %777 = vset.pattern.permute.xlu0 0
        %778 = vperm.xlu0 %777, %v524
        %v779 = vpop.permute.xlu0 %778
        %782 = vset.pattern.permute.xlu0 0
        %783 = vperm.xlu0 %782, %v525
        %v784 = vpop.permute.xlu0 %783
        %787 = vset.pattern.permute.xlu0 0
        %788 = vperm.xlu0 %787, %v526
        %v789 = vpop.permute.xlu0 %788
        %792 = vset.pattern.permute.xlu0 0
        %793 = vperm.xlu0 %792, %v527
        %v794 = vpop.permute.xlu0 %793
        %797 = vset.pattern.permute.xlu0 0
        %798 = vperm.xlu0 %797, %v528
        %v799 = vpop.permute.xlu0 %798
        %802 = vset.pattern.permute.xlu0 0
        %803 = vperm.xlu0 %802, %v529
        %v804 = vpop.permute.xlu0 %803
        %807 = vset.pattern.permute.xlu0 0
        %808 = vperm.xlu0 %807, %v530
        %v809 = vpop.permute.xlu0 %808
        %812 = vset.pattern.permute.xlu0 0
        %813 = vperm.xlu0 %812, %v531
        %v814 = vpop.permute.xlu0 %813
        %817 = vset.pattern.permute.xlu0 0
        %818 = vperm.xlu0 %817, %v532
        %v819 = vpop.permute.xlu0 %818
        %822 = vset.pattern.permute.xlu0 0
        %823 = vperm.xlu0 %822, %v533
        %v824 = vpop.permute.xlu0 %823
        %827 = vset.pattern.permute.xlu0 0
        %828 = vperm.xlu0 %827, %v534
        %v829 = vpop.permute.xlu0 %828
        %832 = vset.pattern.permute.xlu0 0
        %833 = vperm.xlu0 %832, %v535
        %v834 = vpop.permute.xlu0 %833
        %837 = vset.pattern.permute.xlu0 0
        %838 = vperm.xlu0 %837, %v536
        %v839 = vpop.permute.xlu0 %838
        %842 = vset.pattern.permute.xlu0 0
        %843 = vperm.xlu0 %842, %v537
        %v844 = vpop.permute.xlu0 %843
        %847 = vset.pattern.permute.xlu0 0
        %848 = vperm.xlu0 %847, %v538
        %v849 = vpop.permute.xlu0 %848
        %852 = vset.pattern.permute.xlu0 0
        %853 = vperm.xlu0 %852, %v539
        %v854 = vpop.permute.xlu0 %853
        %857 = vset.pattern.permute.xlu0 0
        %858 = vperm.xlu0 %857, %v540
        %v859 = vpop.permute.xlu0 %858
        %v861 = vmul.f32 %v669, %v704
        %v862 = vmul.f32 %v670, %v709
        %v863 = vmul.f32 %v671, %v714
        %v864 = vmul.f32 %v672, %v719
        %v865 = vmul.f32 %v673, %v724
        %v866 = vmul.f32 %v674, %v729
        %v867 = vmul.f32 %v675, %v734
        %v868 = vmul.f32 %v676, %v739
        %v869 = vmul.f32 %v677, %v744
        %v870 = vmul.f32 %v678, %v749
        %v871 = vmul.f32 %v679, %v754
        %v872 = vmul.f32 %v680, %v759
        %v873 = vmul.f32 %v681, %v764
        %v874 = vmul.f32 %v682, %v769
        %v875 = vmul.f32 %v683, %v774
        %v876 = vmul.f32 %v684, %v779
        %v877 = vmul.f32 %v685, %v784
        %v878 = vmul.f32 %v686, %v789
        %v879 = vmul.f32 %v687, %v794
        %v880 = vmul.f32 %v688, %v799
        %v881 = vmul.f32 %v689, %v804
        %v882 = vmul.f32 %v690, %v809
        %v883 = vmul.f32 %v691, %v814
        %v884 = vmul.f32 %v692, %v819
        %v885 = vmul.f32 %v693, %v824
        %v886 = vmul.f32 %v694, %v829
        %v887 = vmul.f32 %v695, %v834
        %v888 = vmul.f32 %v696, %v839
        %v889 = vmul.f32 %v697, %v844
        %v890 = vmul.f32 %v698, %v849
        %v891 = vmul.f32 %v699, %v854
        %v892 = vmul.f32 %v700, %v859
        %v893 = vpack.c.bf16 %v862, %v861
        %v894 = vpack.c.bf16 %v864, %v863
        %v895 = vpack.c.bf16 %v866, %v865
        %v896 = vpack.c.bf16 %v868, %v867
        %v897 = vpack.c.bf16 %v870, %v869
        %v898 = vpack.c.bf16 %v872, %v871
        %v899 = vpack.c.bf16 %v874, %v873
        %v900 = vpack.c.bf16 %v876, %v875
        %v901 = vpack.c.bf16 %v878, %v877
        %v902 = vpack.c.bf16 %v880, %v879
        %v903 = vpack.c.bf16 %v882, %v881
        %v904 = vpack.c.bf16 %v884, %v883
        %v905 = vpack.c.bf16 %v886, %v885
        %v906 = vpack.c.bf16 %v888, %v887
        %v907 = vpack.c.bf16 %v890, %v889
        %v908 = vpack.c.bf16 %v892, %v891
        %v909 = vld [vmem:[%s5] sm:$0xff]
        %v910 = vld [vmem:[%s5 + $0x8] sm:$0xff]
        %v911 = vld [vmem:[%s5 + $0x10] sm:$0xff]
        %v912 = vld [vmem:[%s5 + $0x18] sm:$0xff]
        %v913 = vld [vmem:[%s6] sm:$0xff]
        %v914 = vld [vmem:[%s6 + $0x8] sm:$0xff]
        %v915 = vld [vmem:[%s6 + $0x10] sm:$0xff]
        %v916 = vld [vmem:[%s6 + $0x18] sm:$0xff]
        %v949 = vunpack.c.l.b16 %v573
        %v950 = vunpack.c.l.b16 %v574
        %v951 = vunpack.c.l.b16 %v575
        %v952 = vunpack.c.l.b16 %v576
        %v953 = vunpack.c.l.b16 %v577
        %v954 = vunpack.c.l.b16 %v578
        %v955 = vunpack.c.l.b16 %v579
        %v956 = vunpack.c.l.b16 %v580
        %v957 = vunpack.c.l.b16 %v581
        %v958 = vunpack.c.l.b16 %v582
        %v959 = vunpack.c.l.b16 %v583
        %v960 = vunpack.c.l.b16 %v584
        %v961 = vunpack.c.l.b16 %v585
        %v962 = vunpack.c.l.b16 %v586
        %v963 = vunpack.c.l.b16 %v587
        %v964 = vunpack.c.l.b16 %v588
        %v965 = vunpack.c.l.b16 %v589
        %v966 = vunpack.c.l.b16 %v590
        %v967 = vunpack.c.l.b16 %v591
        %v968 = vunpack.c.l.b16 %v592
        %v969 = vunpack.c.l.b16 %v593
        %v970 = vunpack.c.l.b16 %v594
        %v971 = vunpack.c.l.b16 %v595
        %v972 = vunpack.c.l.b16 %v596
        %v973 = vunpack.c.l.b16 %v597
        %v974 = vunpack.c.l.b16 %v598
        %v975 = vunpack.c.l.b16 %v599
        %v976 = vunpack.c.l.b16 %v600
        %v977 = vunpack.c.l.b16 %v601
        %v978 = vunpack.c.l.b16 %v602
        %v979 = vunpack.c.l.b16 %v603
        %v980 = vunpack.c.l.b16 %v604
        %v981 = vpack.c.b16 %v950, %v949
        %v982 = vpack.c.b16 %v952, %v951
        %v983 = vpack.c.b16 %v954, %v953
        %v984 = vpack.c.b16 %v956, %v955
        %v985 = vpack.c.b16 %v958, %v957
        %v986 = vpack.c.b16 %v960, %v959
        %v987 = vpack.c.b16 %v962, %v961
        %v988 = vpack.c.b16 %v964, %v963
        %v989 = vpack.c.b16 %v966, %v965
        %v990 = vpack.c.b16 %v968, %v967
        %v991 = vpack.c.b16 %v970, %v969
        %v992 = vpack.c.b16 %v972, %v971
        %v993 = vpack.c.b16 %v974, %v973
        %v994 = vpack.c.b16 %v976, %v975
        %v995 = vpack.c.b16 %v978, %v977
        %v996 = vpack.c.b16 %v980, %v979
        %v1001 = vunpack.c.l.b16 %v913
        %v1002 = vunpack.c.h.b16 %v913
        %v1003 = vunpack.c.l.b16 %v914
        %v1004 = vunpack.c.h.b16 %v914
        %v1005 = vunpack.c.l.b16 %v915
        %v1006 = vunpack.c.h.b16 %v915
        %v1007 = vunpack.c.l.b16 %v916
        %v1008 = vunpack.c.h.b16 %v916
        %v1009 = vpack.c.b16 %v1003, %v1001
        %v1010 = vpack.c.b16 %v1004, %v1002
        %v1011 = vpack.c.b16 %v1007, %v1005
        %v1012 = vpack.c.b16 %v1008, %v1006
        %vm1017 = vcmask 261120
        %v1019 = vsel %vm1017, %v981, 0
        %v1022 = vsel %vm1017, %v982, 0
        %v1025 = vsel %vm1017, %v983, 0
        %v1028 = vsel %vm1017, %v984, 0
        %v1031 = vsel %vm1017, %v985, 0
        %v1034 = vsel %vm1017, %v986, 0
        %v1037 = vsel %vm1017, %v987, 0
        %v1040 = vsel %vm1017, %v988, 0
        %v1043 = vsel %vm1017, %v989, 0
        %v1046 = vsel %vm1017, %v990, 0
        %v1049 = vsel %vm1017, %v991, 0
        %v1052 = vsel %vm1017, %v992, 0
        %v1055 = vsel %vm1017, %v993, 0
        %v1058 = vsel %vm1017, %v994, 0
        %v1061 = vsel %vm1017, %v995, 0
        %v1064 = vsel %vm1017, %v996, 0
        %1066 = vmatprep.subr.bf16.mxu0 0
        %1067 = vmatpush1.bf16.msra.mxu0 0
        %1068 = vmatprep.subr.bf16.mxu0 0
        %1069 = vmatpush1.bf16.msra.mxu0 0
        %1070 = vmatprep.subr.bf16.mxu0 0
        %1071 = vmatpush1.bf16.msra.mxu0 0
        %1072 = vmatprep.subr.bf16.mxu0 0
        %1073 = vmatpush1.bf16.msra.mxu0 0
        %1074 = vmatprep.subr.bf16.mxu0 0
        %1075 = vmatpush1.bf16.msra.mxu0 0
        %1076 = vmatprep.subr.bf16.mxu0 0
        %1077 = vmatpush1.bf16.msra.mxu0 0
        %1078 = vmatprep.subr.bf16.mxu0 %v1012
        %1079 = vmatpush1.bf16.msra.mxu0 %v1011
        %1080 = vmatprep.subr.bf16.mxu0 %v1010
        %1081 = vmatpush1.bf16.msra.mxu0 %v1009
        %1082 = vmatprep.subr.bf16.mxu0 0
        %1083 = vmatpush2.bf16.msra.mxu0 0
        %1084 = vmatprep.subr.bf16.mxu0 0
        %1085 = vmatpush2.bf16.msra.mxu0 0
        %1086 = vmatprep.subr.bf16.mxu0 0
        %1087 = vmatpush2.bf16.msra.mxu0 0
        %1088 = vmatprep.subr.bf16.mxu0 0
        %1089 = vmatpush2.bf16.msra.mxu0 0
        %1090 = vmatprep.subr.bf16.mxu0 0
        %1091 = vmatpush2.bf16.msra.mxu0 0
        %1092 = vmatprep.subr.bf16.mxu0 0
        %1093 = vmatpush2.bf16.msra.mxu0 0
        %1094 = vmatprep.subr.bf16.mxu0 0
        %1095 = vmatpush2.bf16.msra.mxu0 0
        %1096 = vmatprep.subr.bf16.mxu0 0
        %1097 = vmatpush2.bf16.msra.mxu0 0
        %1098 = vmatprep.mubr.bf16.mxu0 0
        %1099 = vmatmul.mubr.bf16.gmra.mxu0 %v1019
        %v1100 = vpop.f32.mrf.mxu0
        %v1101 = vadd.f32 0.0, %v1100
        %v1102 = vpop.f32.mrf.mxu0
        %v1103 = vadd.f32 0.0, %v1102
        %v1104 = vpop.f32.mrf.mxu0
        %v1105 = vadd.f32 0.0, %v1104
        %v1106 = vpop.f32.mrf.mxu0
        %v1107 = vadd.f32 0.0, %v1106
        %1108 = vmatprep.mubr.bf16.mxu0 0
        %1109 = vmatmul.mubr.bf16.gmra.mxu0 %v1022
        %v1110 = vpop.f32.mrf.mxu0
        %v1111 = vadd.f32 0.0, %v1110
        %v1112 = vpop.f32.mrf.mxu0
        %v1113 = vadd.f32 0.0, %v1112
        %v1114 = vpop.f32.mrf.mxu0
        %v1115 = vadd.f32 0.0, %v1114
        %v1116 = vpop.f32.mrf.mxu0
        %v1117 = vadd.f32 0.0, %v1116
        %1118 = vmatprep.mubr.bf16.mxu0 0
        %1119 = vmatmul.mubr.bf16.gmra.mxu0 %v1025
        %v1120 = vpop.f32.mrf.mxu0
        %v1121 = vadd.f32 0.0, %v1120
        %v1122 = vpop.f32.mrf.mxu0
        %v1123 = vadd.f32 0.0, %v1122
        %v1124 = vpop.f32.mrf.mxu0
        %v1125 = vadd.f32 0.0, %v1124
        %v1126 = vpop.f32.mrf.mxu0
        %v1127 = vadd.f32 0.0, %v1126
        %1128 = vmatprep.mubr.bf16.mxu0 0
        %1129 = vmatmul.mubr.bf16.gmra.mxu0 %v1028
        %v1130 = vpop.f32.mrf.mxu0
        %v1131 = vadd.f32 0.0, %v1130
        %v1132 = vpop.f32.mrf.mxu0
        %v1133 = vadd.f32 0.0, %v1132
        %v1134 = vpop.f32.mrf.mxu0
        %v1135 = vadd.f32 0.0, %v1134
        %v1136 = vpop.f32.mrf.mxu0
        %v1137 = vadd.f32 0.0, %v1136
        %1138 = vmatprep.mubr.bf16.mxu0 0
        %1139 = vmatmul.mubr.bf16.gmra.mxu0 %v1031
        %v1140 = vpop.f32.mrf.mxu0
        %v1141 = vadd.f32 0.0, %v1140
        %v1142 = vpop.f32.mrf.mxu0
        %v1143 = vadd.f32 0.0, %v1142
        %v1144 = vpop.f32.mrf.mxu0
        %v1145 = vadd.f32 0.0, %v1144
        %v1146 = vpop.f32.mrf.mxu0
        %v1147 = vadd.f32 0.0, %v1146
        %1148 = vmatprep.mubr.bf16.mxu0 0
        %1149 = vmatmul.mubr.bf16.gmra.mxu0 %v1034
        %v1150 = vpop.f32.mrf.mxu0
        %v1151 = vadd.f32 0.0, %v1150
        %v1152 = vpop.f32.mrf.mxu0
        %v1153 = vadd.f32 0.0, %v1152
        %v1154 = vpop.f32.mrf.mxu0
        %v1155 = vadd.f32 0.0, %v1154
        %v1156 = vpop.f32.mrf.mxu0
        %v1157 = vadd.f32 0.0, %v1156
        %1158 = vmatprep.mubr.bf16.mxu0 0
        %1159 = vmatmul.mubr.bf16.gmra.mxu0 %v1037
        %v1160 = vpop.f32.mrf.mxu0
        %v1161 = vadd.f32 0.0, %v1160
        %v1162 = vpop.f32.mrf.mxu0
        %v1163 = vadd.f32 0.0, %v1162
        %v1164 = vpop.f32.mrf.mxu0
        %v1165 = vadd.f32 0.0, %v1164
        %v1166 = vpop.f32.mrf.mxu0
        %v1167 = vadd.f32 0.0, %v1166
        %1168 = vmatprep.mubr.bf16.mxu0 0
        %1169 = vmatmul.mubr.bf16.gmra.mxu0 %v1040
        %v1170 = vpop.f32.mrf.mxu0
        %v1171 = vadd.f32 0.0, %v1170
        %v1172 = vpop.f32.mrf.mxu0
        %v1173 = vadd.f32 0.0, %v1172
        %v1174 = vpop.f32.mrf.mxu0
        %v1175 = vadd.f32 0.0, %v1174
        %v1176 = vpop.f32.mrf.mxu0
        %v1177 = vadd.f32 0.0, %v1176
        %1178 = vmatprep.mubr.bf16.mxu0 0
        %1179 = vmatmul.mubr.bf16.gmra.mxu0 %v1043
        %v1180 = vpop.f32.mrf.mxu0
        %v1181 = vadd.f32 0.0, %v1180
        %v1182 = vpop.f32.mrf.mxu0
        %v1183 = vadd.f32 0.0, %v1182
        %v1184 = vpop.f32.mrf.mxu0
        %v1185 = vadd.f32 0.0, %v1184
        %v1186 = vpop.f32.mrf.mxu0
        %v1187 = vadd.f32 0.0, %v1186
        %1188 = vmatprep.mubr.bf16.mxu0 0
        %1189 = vmatmul.mubr.bf16.gmra.mxu0 %v1046
        %v1190 = vpop.f32.mrf.mxu0
        %v1191 = vadd.f32 0.0, %v1190
        %v1192 = vpop.f32.mrf.mxu0
        %v1193 = vadd.f32 0.0, %v1192
        %v1194 = vpop.f32.mrf.mxu0
        %v1195 = vadd.f32 0.0, %v1194
        %v1196 = vpop.f32.mrf.mxu0
        %v1197 = vadd.f32 0.0, %v1196
        %1198 = vmatprep.mubr.bf16.mxu0 0
        %1199 = vmatmul.mubr.bf16.gmra.mxu0 %v1049
        %v1200 = vpop.f32.mrf.mxu0
        %v1201 = vadd.f32 0.0, %v1200
        %v1202 = vpop.f32.mrf.mxu0
        %v1203 = vadd.f32 0.0, %v1202
        %v1204 = vpop.f32.mrf.mxu0
        %v1205 = vadd.f32 0.0, %v1204
        %v1206 = vpop.f32.mrf.mxu0
        %v1207 = vadd.f32 0.0, %v1206
        %1208 = vmatprep.mubr.bf16.mxu0 0
        %1209 = vmatmul.mubr.bf16.gmra.mxu0 %v1052
        %v1210 = vpop.f32.mrf.mxu0
        %v1211 = vadd.f32 0.0, %v1210
        %v1212 = vpop.f32.mrf.mxu0
        %v1213 = vadd.f32 0.0, %v1212
        %v1214 = vpop.f32.mrf.mxu0
        %v1215 = vadd.f32 0.0, %v1214
        %v1216 = vpop.f32.mrf.mxu0
        %v1217 = vadd.f32 0.0, %v1216
        %1218 = vmatprep.mubr.bf16.mxu0 0
        %1219 = vmatmul.mubr.bf16.gmra.mxu0 %v1055
        %v1220 = vpop.f32.mrf.mxu0
        %v1221 = vadd.f32 0.0, %v1220
        %v1222 = vpop.f32.mrf.mxu0
        %v1223 = vadd.f32 0.0, %v1222
        %v1224 = vpop.f32.mrf.mxu0
        %v1225 = vadd.f32 0.0, %v1224
        %v1226 = vpop.f32.mrf.mxu0
        %v1227 = vadd.f32 0.0, %v1226
        %1228 = vmatprep.mubr.bf16.mxu0 0
        %1229 = vmatmul.mubr.bf16.gmra.mxu0 %v1058
        %v1230 = vpop.f32.mrf.mxu0
        %v1231 = vadd.f32 0.0, %v1230
        %v1232 = vpop.f32.mrf.mxu0
        %v1233 = vadd.f32 0.0, %v1232
        %v1234 = vpop.f32.mrf.mxu0
        %v1235 = vadd.f32 0.0, %v1234
        %v1236 = vpop.f32.mrf.mxu0
        %v1237 = vadd.f32 0.0, %v1236
        %1238 = vmatprep.mubr.bf16.mxu0 0
        %1239 = vmatmul.mubr.bf16.gmra.mxu0 %v1061
        %v1240 = vpop.f32.mrf.mxu0
        %v1241 = vadd.f32 0.0, %v1240
        %v1242 = vpop.f32.mrf.mxu0
        %v1243 = vadd.f32 0.0, %v1242
        %v1244 = vpop.f32.mrf.mxu0
        %v1245 = vadd.f32 0.0, %v1244
        %v1246 = vpop.f32.mrf.mxu0
        %v1247 = vadd.f32 0.0, %v1246
        %1248 = vmatprep.mubr.bf16.mxu0 0
        %1249 = vmatmul.mubr.bf16.gmra.mxu0 %v1064
        %v1250 = vpop.f32.mrf.mxu0
        %v1251 = vadd.f32 0.0, %v1250
        %v1252 = vpop.f32.mrf.mxu0
        %v1253 = vadd.f32 0.0, %v1252
        %v1254 = vpop.f32.mrf.mxu0
        %v1255 = vadd.f32 0.0, %v1254
        %v1256 = vpop.f32.mrf.mxu0
        %v1257 = vadd.f32 0.0, %v1256
        %1258 = vdwg.mxu0
        %v1291 = vunpack.c.l.b16 %v541
        %v1292 = vunpack.c.l.b16 %v542
        %v1293 = vunpack.c.l.b16 %v543
        %v1294 = vunpack.c.l.b16 %v544
        %v1295 = vunpack.c.l.b16 %v545
        %v1296 = vunpack.c.l.b16 %v546
        %v1297 = vunpack.c.l.b16 %v547
        %v1298 = vunpack.c.l.b16 %v548
        %v1299 = vunpack.c.l.b16 %v549
        %v1300 = vunpack.c.l.b16 %v550
        %v1301 = vunpack.c.l.b16 %v551
        %v1302 = vunpack.c.l.b16 %v552
        %v1303 = vunpack.c.l.b16 %v553
        %v1304 = vunpack.c.l.b16 %v554
        %v1305 = vunpack.c.l.b16 %v555
        %v1306 = vunpack.c.l.b16 %v556
        %v1307 = vunpack.c.l.b16 %v557
        %v1308 = vunpack.c.l.b16 %v558
        %v1309 = vunpack.c.l.b16 %v559
        %v1310 = vunpack.c.l.b16 %v560
        %v1311 = vunpack.c.l.b16 %v561
        %v1312 = vunpack.c.l.b16 %v562
        %v1313 = vunpack.c.l.b16 %v563
        %v1314 = vunpack.c.l.b16 %v564
        %v1315 = vunpack.c.l.b16 %v565
        %v1316 = vunpack.c.l.b16 %v566
        %v1317 = vunpack.c.l.b16 %v567
        %v1318 = vunpack.c.l.b16 %v568
        %v1319 = vunpack.c.l.b16 %v569
        %v1320 = vunpack.c.l.b16 %v570
        %v1321 = vunpack.c.l.b16 %v571
        %v1322 = vunpack.c.l.b16 %v572
        %v1323 = vpack.c.b16 %v1292, %v1291
        %v1324 = vpack.c.b16 %v1294, %v1293
        %v1325 = vpack.c.b16 %v1296, %v1295
        %v1326 = vpack.c.b16 %v1298, %v1297
        %v1327 = vpack.c.b16 %v1300, %v1299
        %v1328 = vpack.c.b16 %v1302, %v1301
        %v1329 = vpack.c.b16 %v1304, %v1303
        %v1330 = vpack.c.b16 %v1306, %v1305
        %v1331 = vpack.c.b16 %v1308, %v1307
        %v1332 = vpack.c.b16 %v1310, %v1309
        %v1333 = vpack.c.b16 %v1312, %v1311
        %v1334 = vpack.c.b16 %v1314, %v1313
        %v1335 = vpack.c.b16 %v1316, %v1315
        %v1336 = vpack.c.b16 %v1318, %v1317
        %v1337 = vpack.c.b16 %v1320, %v1319
        %v1338 = vpack.c.b16 %v1322, %v1321
        %v1343 = vunpack.c.l.b16 %v909
        %v1344 = vunpack.c.h.b16 %v909
        %v1345 = vunpack.c.l.b16 %v910
        %v1346 = vunpack.c.h.b16 %v910
        %v1347 = vunpack.c.l.b16 %v911
        %v1348 = vunpack.c.h.b16 %v911
        %v1349 = vunpack.c.l.b16 %v912
        %v1350 = vunpack.c.h.b16 %v912
        %v1351 = vpack.c.b16 %v1345, %v1343
        %v1352 = vpack.c.b16 %v1346, %v1344
        %v1353 = vpack.c.b16 %v1349, %v1347
        %v1354 = vpack.c.b16 %v1350, %v1348
        %v1360 = vsel %vm1017, %v1323, 0
        %v1363 = vsel %vm1017, %v1324, 0
        %v1366 = vsel %vm1017, %v1325, 0
        %v1369 = vsel %vm1017, %v1326, 0
        %v1372 = vsel %vm1017, %v1327, 0
        %v1375 = vsel %vm1017, %v1328, 0
        %v1378 = vsel %vm1017, %v1329, 0
        %v1381 = vsel %vm1017, %v1330, 0
        %v1384 = vsel %vm1017, %v1331, 0
        %v1387 = vsel %vm1017, %v1332, 0
        %v1390 = vsel %vm1017, %v1333, 0
        %v1393 = vsel %vm1017, %v1334, 0
        %v1396 = vsel %vm1017, %v1335, 0
        %v1399 = vsel %vm1017, %v1336, 0
        %v1402 = vsel %vm1017, %v1337, 0
        %v1405 = vsel %vm1017, %v1338, 0
        %1407 = vmatprep.subr.bf16.mxu0 0
        %1408 = vmatpush1.bf16.msra.mxu0 0
        %1409 = vmatprep.subr.bf16.mxu0 0
        %1410 = vmatpush1.bf16.msra.mxu0 0
        %1411 = vmatprep.subr.bf16.mxu0 0
        %1412 = vmatpush1.bf16.msra.mxu0 0
        %1413 = vmatprep.subr.bf16.mxu0 0
        %1414 = vmatpush1.bf16.msra.mxu0 0
        %1415 = vmatprep.subr.bf16.mxu0 0
        %1416 = vmatpush1.bf16.msra.mxu0 0
        %1417 = vmatprep.subr.bf16.mxu0 0
        %1418 = vmatpush1.bf16.msra.mxu0 0
        %1419 = vmatprep.subr.bf16.mxu0 %v1354
        %1420 = vmatpush1.bf16.msra.mxu0 %v1353
        %1421 = vmatprep.subr.bf16.mxu0 %v1352
        %1422 = vmatpush1.bf16.msra.mxu0 %v1351
        %1423 = vmatprep.subr.bf16.mxu0 0
        %1424 = vmatpush2.bf16.msra.mxu0 0
        %1425 = vmatprep.subr.bf16.mxu0 0
        %1426 = vmatpush2.bf16.msra.mxu0 0
        %1427 = vmatprep.subr.bf16.mxu0 0
        %1428 = vmatpush2.bf16.msra.mxu0 0
        %1429 = vmatprep.subr.bf16.mxu0 0
        %1430 = vmatpush2.bf16.msra.mxu0 0
        %1431 = vmatprep.subr.bf16.mxu0 0
        %1432 = vmatpush2.bf16.msra.mxu0 0
        %1433 = vmatprep.subr.bf16.mxu0 0
        %1434 = vmatpush2.bf16.msra.mxu0 0
        %1435 = vmatprep.subr.bf16.mxu0 0
        %1436 = vmatpush2.bf16.msra.mxu0 0
        %1437 = vmatprep.subr.bf16.mxu0 0
        %1438 = vmatpush2.bf16.msra.mxu0 0
        %1439 = vmatprep.mubr.bf16.mxu0 0
        %1440 = vmatmul.mubr.bf16.gmra.mxu0 %v1360
        %v1441 = vpop.f32.mrf.mxu0
        %v1442 = vadd.f32 %v1101, %v1441
        %v1443 = vpop.f32.mrf.mxu0
        %v1444 = vadd.f32 %v1103, %v1443
        %v1445 = vpop.f32.mrf.mxu0
        %v1446 = vadd.f32 %v1105, %v1445
        %v1447 = vpop.f32.mrf.mxu0
        %v1448 = vadd.f32 %v1107, %v1447
        %1449 = vmatprep.mubr.bf16.mxu0 0
        %1450 = vmatmul.mubr.bf16.gmra.mxu0 %v1363
        %v1451 = vpop.f32.mrf.mxu0
        %v1452 = vadd.f32 %v1111, %v1451
        %v1453 = vpop.f32.mrf.mxu0
        %v1454 = vadd.f32 %v1113, %v1453
        %v1455 = vpop.f32.mrf.mxu0
        %v1456 = vadd.f32 %v1115, %v1455
        %v1457 = vpop.f32.mrf.mxu0
        %v1458 = vadd.f32 %v1117, %v1457
        %1459 = vmatprep.mubr.bf16.mxu0 0
        %1460 = vmatmul.mubr.bf16.gmra.mxu0 %v1366
        %v1461 = vpop.f32.mrf.mxu0
        %v1462 = vadd.f32 %v1121, %v1461
        %v1463 = vpop.f32.mrf.mxu0
        %v1464 = vadd.f32 %v1123, %v1463
        %v1465 = vpop.f32.mrf.mxu0
        %v1466 = vadd.f32 %v1125, %v1465
        %v1467 = vpop.f32.mrf.mxu0
        %v1468 = vadd.f32 %v1127, %v1467
        %1469 = vmatprep.mubr.bf16.mxu0 0
        %1470 = vmatmul.mubr.bf16.gmra.mxu0 %v1369
        %v1471 = vpop.f32.mrf.mxu0
        %v1472 = vadd.f32 %v1131, %v1471
        %v1473 = vpop.f32.mrf.mxu0
        %v1474 = vadd.f32 %v1133, %v1473
        %v1475 = vpop.f32.mrf.mxu0
        %v1476 = vadd.f32 %v1135, %v1475
        %v1477 = vpop.f32.mrf.mxu0
        %v1478 = vadd.f32 %v1137, %v1477
        %1479 = vmatprep.mubr.bf16.mxu0 0
        %1480 = vmatmul.mubr.bf16.gmra.mxu0 %v1372
        %v1481 = vpop.f32.mrf.mxu0
        %v1482 = vadd.f32 %v1141, %v1481
        %v1483 = vpop.f32.mrf.mxu0
        %v1484 = vadd.f32 %v1143, %v1483
        %v1485 = vpop.f32.mrf.mxu0
        %v1486 = vadd.f32 %v1145, %v1485
        %v1487 = vpop.f32.mrf.mxu0
        %v1488 = vadd.f32 %v1147, %v1487
        %1489 = vmatprep.mubr.bf16.mxu0 0
        %1490 = vmatmul.mubr.bf16.gmra.mxu0 %v1375
        %v1491 = vpop.f32.mrf.mxu0
        %v1492 = vadd.f32 %v1151, %v1491
        %v1493 = vpop.f32.mrf.mxu0
        %v1494 = vadd.f32 %v1153, %v1493
        %v1495 = vpop.f32.mrf.mxu0
        %v1496 = vadd.f32 %v1155, %v1495
        %v1497 = vpop.f32.mrf.mxu0
        %v1498 = vadd.f32 %v1157, %v1497
        %1499 = vmatprep.mubr.bf16.mxu0 0
        %1500 = vmatmul.mubr.bf16.gmra.mxu0 %v1378
        %v1501 = vpop.f32.mrf.mxu0
        %v1502 = vadd.f32 %v1161, %v1501
        %v1503 = vpop.f32.mrf.mxu0
        %v1504 = vadd.f32 %v1163, %v1503
        %v1505 = vpop.f32.mrf.mxu0
        %v1506 = vadd.f32 %v1165, %v1505
        %v1507 = vpop.f32.mrf.mxu0
        %v1508 = vadd.f32 %v1167, %v1507
        %1509 = vmatprep.mubr.bf16.mxu0 0
        %1510 = vmatmul.mubr.bf16.gmra.mxu0 %v1381
        %v1511 = vpop.f32.mrf.mxu0
        %v1512 = vadd.f32 %v1171, %v1511
        %v1513 = vpop.f32.mrf.mxu0
        %v1514 = vadd.f32 %v1173, %v1513
        %v1515 = vpop.f32.mrf.mxu0
        %v1516 = vadd.f32 %v1175, %v1515
        %v1517 = vpop.f32.mrf.mxu0
        %v1518 = vadd.f32 %v1177, %v1517
        %1519 = vmatprep.mubr.bf16.mxu0 0
        %1520 = vmatmul.mubr.bf16.gmra.mxu0 %v1384
        %v1521 = vpop.f32.mrf.mxu0
        %v1522 = vadd.f32 %v1181, %v1521
        %v1523 = vpop.f32.mrf.mxu0
        %v1524 = vadd.f32 %v1183, %v1523
        %v1525 = vpop.f32.mrf.mxu0
        %v1526 = vadd.f32 %v1185, %v1525
        %v1527 = vpop.f32.mrf.mxu0
        %v1528 = vadd.f32 %v1187, %v1527
        %1529 = vmatprep.mubr.bf16.mxu0 0
        %1530 = vmatmul.mubr.bf16.gmra.mxu0 %v1387
        %v1531 = vpop.f32.mrf.mxu0
        %v1532 = vadd.f32 %v1191, %v1531
        %v1533 = vpop.f32.mrf.mxu0
        %v1534 = vadd.f32 %v1193, %v1533
        %v1535 = vpop.f32.mrf.mxu0
        %v1536 = vadd.f32 %v1195, %v1535
        %v1537 = vpop.f32.mrf.mxu0
        %v1538 = vadd.f32 %v1197, %v1537
        %1539 = vmatprep.mubr.bf16.mxu0 0
        %1540 = vmatmul.mubr.bf16.gmra.mxu0 %v1390
        %v1541 = vpop.f32.mrf.mxu0
        %v1542 = vadd.f32 %v1201, %v1541
        %v1543 = vpop.f32.mrf.mxu0
        %v1544 = vadd.f32 %v1203, %v1543
        %v1545 = vpop.f32.mrf.mxu0
        %v1546 = vadd.f32 %v1205, %v1545
        %v1547 = vpop.f32.mrf.mxu0
        %v1548 = vadd.f32 %v1207, %v1547
        %1549 = vmatprep.mubr.bf16.mxu0 0
        %1550 = vmatmul.mubr.bf16.gmra.mxu0 %v1393
        %v1551 = vpop.f32.mrf.mxu0
        %v1552 = vadd.f32 %v1211, %v1551
        %v1553 = vpop.f32.mrf.mxu0
        %v1554 = vadd.f32 %v1213, %v1553
        %v1555 = vpop.f32.mrf.mxu0
        %v1556 = vadd.f32 %v1215, %v1555
        %v1557 = vpop.f32.mrf.mxu0
        %v1558 = vadd.f32 %v1217, %v1557
        %1559 = vmatprep.mubr.bf16.mxu0 0
        %1560 = vmatmul.mubr.bf16.gmra.mxu0 %v1396
        %v1561 = vpop.f32.mrf.mxu0
        %v1562 = vadd.f32 %v1221, %v1561
        %v1563 = vpop.f32.mrf.mxu0
        %v1564 = vadd.f32 %v1223, %v1563
        %v1565 = vpop.f32.mrf.mxu0
        %v1566 = vadd.f32 %v1225, %v1565
        %v1567 = vpop.f32.mrf.mxu0
        %v1568 = vadd.f32 %v1227, %v1567
        %1569 = vmatprep.mubr.bf16.mxu0 0
        %1570 = vmatmul.mubr.bf16.gmra.mxu0 %v1399
        %v1571 = vpop.f32.mrf.mxu0
        %v1572 = vadd.f32 %v1231, %v1571
        %v1573 = vpop.f32.mrf.mxu0
        %v1574 = vadd.f32 %v1233, %v1573
        %v1575 = vpop.f32.mrf.mxu0
        %v1576 = vadd.f32 %v1235, %v1575
        %v1577 = vpop.f32.mrf.mxu0
        %v1578 = vadd.f32 %v1237, %v1577
        %1579 = vmatprep.mubr.bf16.mxu0 0
        %1580 = vmatmul.mubr.bf16.gmra.mxu0 %v1402
        %v1581 = vpop.f32.mrf.mxu0
        %v1582 = vadd.f32 %v1241, %v1581
        %v1583 = vpop.f32.mrf.mxu0
        %v1584 = vadd.f32 %v1243, %v1583
        %v1585 = vpop.f32.mrf.mxu0
        %v1586 = vadd.f32 %v1245, %v1585
        %v1587 = vpop.f32.mrf.mxu0
        %v1588 = vadd.f32 %v1247, %v1587
        %1589 = vmatprep.mubr.bf16.mxu0 0
        %1590 = vmatmul.mubr.bf16.gmra.mxu0 %v1405
        %v1591 = vpop.f32.mrf.mxu0
        %v1592 = vadd.f32 %v1251, %v1591
        %v1593 = vpop.f32.mrf.mxu0
        %v1594 = vadd.f32 %v1253, %v1593
        %v1595 = vpop.f32.mrf.mxu0
        %v1596 = vadd.f32 %v1255, %v1595
        %v1597 = vpop.f32.mrf.mxu0
        %v1598 = vadd.f32 %v1257, %v1597
        %1599 = vdwg.mxu0
        %v1600 = vld [vmem:[%s7] sm:$0xff]
        %v1601 = vld [vmem:[%s7 + $0x8] sm:$0xff]
        %v1602 = vld [vmem:[%s7 + $0x10] sm:$0xff]
        %v1603 = vld [vmem:[%s7 + $0x18] sm:$0xff]
        %v1608 = vunpack.c.l.b16 %v1600
        %v1609 = vunpack.c.h.b16 %v1600
        %v1610 = vunpack.c.l.b16 %v1601
        %v1611 = vunpack.c.h.b16 %v1601
        %v1612 = vunpack.c.l.b16 %v1602
        %v1613 = vunpack.c.h.b16 %v1602
        %v1614 = vunpack.c.l.b16 %v1603
        %v1615 = vunpack.c.h.b16 %v1603
        %v1616 = vpack.c.b16 %v1610, %v1608
        %v1617 = vpack.c.b16 %v1611, %v1609
        %v1618 = vpack.c.b16 %v1614, %v1612
        %v1619 = vpack.c.b16 %v1615, %v1613
        %v1625 = vsel %vm1017, %v893, 0
        %v1628 = vsel %vm1017, %v894, 0
        %v1631 = vsel %vm1017, %v895, 0
        %v1634 = vsel %vm1017, %v896, 0
        %v1637 = vsel %vm1017, %v897, 0
        %v1640 = vsel %vm1017, %v898, 0
        %v1643 = vsel %vm1017, %v899, 0
        %v1646 = vsel %vm1017, %v900, 0
        %v1649 = vsel %vm1017, %v901, 0
        %v1652 = vsel %vm1017, %v902, 0
        %v1655 = vsel %vm1017, %v903, 0
        %v1658 = vsel %vm1017, %v904, 0
        %v1661 = vsel %vm1017, %v905, 0
        %v1664 = vsel %vm1017, %v906, 0
        %v1667 = vsel %vm1017, %v907, 0
        %v1670 = vsel %vm1017, %v908, 0
        %1672 = vmatprep.subr.bf16.mxu0 0
        %1673 = vmatpush1.bf16.msra.mxu0 0
        %1674 = vmatprep.subr.bf16.mxu0 0
        %1675 = vmatpush1.bf16.msra.mxu0 0
        %1676 = vmatprep.subr.bf16.mxu0 0
        %1677 = vmatpush1.bf16.msra.mxu0 0
        %1678 = vmatprep.subr.bf16.mxu0 0
        %1679 = vmatpush1.bf16.msra.mxu0 0
        %1680 = vmatprep.subr.bf16.mxu0 0
        %1681 = vmatpush1.bf16.msra.mxu0 0
        %1682 = vmatprep.subr.bf16.mxu0 0
        %1683 = vmatpush1.bf16.msra.mxu0 0
        %1684 = vmatprep.subr.bf16.mxu0 %v1619
        %1685 = vmatpush1.bf16.msra.mxu0 %v1618
        %1686 = vmatprep.subr.bf16.mxu0 %v1617
        %1687 = vmatpush1.bf16.msra.mxu0 %v1616
        %1688 = vmatprep.subr.bf16.mxu0 0
        %1689 = vmatpush2.bf16.msra.mxu0 0
        %1690 = vmatprep.subr.bf16.mxu0 0
        %1691 = vmatpush2.bf16.msra.mxu0 0
        %1692 = vmatprep.subr.bf16.mxu0 0
        %1693 = vmatpush2.bf16.msra.mxu0 0
        %1694 = vmatprep.subr.bf16.mxu0 0
        %1695 = vmatpush2.bf16.msra.mxu0 0
        %1696 = vmatprep.subr.bf16.mxu0 0
        %1697 = vmatpush2.bf16.msra.mxu0 0
        %1698 = vmatprep.subr.bf16.mxu0 0
        %1699 = vmatpush2.bf16.msra.mxu0 0
        %1700 = vmatprep.subr.bf16.mxu0 0
        %1701 = vmatpush2.bf16.msra.mxu0 0
        %1702 = vmatprep.subr.bf16.mxu0 0
        %1703 = vmatpush2.bf16.msra.mxu0 0
        %1704 = vmatprep.mubr.bf16.mxu0 0
        %1705 = vmatmul.mubr.bf16.gmra.mxu0 %v1625
        %v1706 = vpop.f32.mrf.mxu0
        %v1707 = vadd.f32 0.0, %v1706
        %v1708 = vpop.f32.mrf.mxu0
        %v1709 = vadd.f32 0.0, %v1708
        %v1710 = vpop.f32.mrf.mxu0
        %v1711 = vadd.f32 0.0, %v1710
        %v1712 = vpop.f32.mrf.mxu0
        %v1713 = vadd.f32 0.0, %v1712
        %1714 = vmatprep.mubr.bf16.mxu0 0
        %1715 = vmatmul.mubr.bf16.gmra.mxu0 %v1628
        %v1716 = vpop.f32.mrf.mxu0
        %v1717 = vadd.f32 0.0, %v1716
        %v1718 = vpop.f32.mrf.mxu0
        %v1719 = vadd.f32 0.0, %v1718
        %v1720 = vpop.f32.mrf.mxu0
        %v1721 = vadd.f32 0.0, %v1720
        %v1722 = vpop.f32.mrf.mxu0
        %v1723 = vadd.f32 0.0, %v1722
        %1724 = vmatprep.mubr.bf16.mxu0 0
        %1725 = vmatmul.mubr.bf16.gmra.mxu0 %v1631
        %v1726 = vpop.f32.mrf.mxu0
        %v1727 = vadd.f32 0.0, %v1726
        %v1728 = vpop.f32.mrf.mxu0
        %v1729 = vadd.f32 0.0, %v1728
        %v1730 = vpop.f32.mrf.mxu0
        %v1731 = vadd.f32 0.0, %v1730
        %v1732 = vpop.f32.mrf.mxu0
        %v1733 = vadd.f32 0.0, %v1732
        %1734 = vmatprep.mubr.bf16.mxu0 0
        %1735 = vmatmul.mubr.bf16.gmra.mxu0 %v1634
        %v1736 = vpop.f32.mrf.mxu0
        %v1737 = vadd.f32 0.0, %v1736
        %v1738 = vpop.f32.mrf.mxu0
        %v1739 = vadd.f32 0.0, %v1738
        %v1740 = vpop.f32.mrf.mxu0
        %v1741 = vadd.f32 0.0, %v1740
        %v1742 = vpop.f32.mrf.mxu0
        %v1743 = vadd.f32 0.0, %v1742
        %1744 = vmatprep.mubr.bf16.mxu0 0
        %1745 = vmatmul.mubr.bf16.gmra.mxu0 %v1637
        %v1746 = vpop.f32.mrf.mxu0
        %v1747 = vadd.f32 0.0, %v1746
        %v1748 = vpop.f32.mrf.mxu0
        %v1749 = vadd.f32 0.0, %v1748
        %v1750 = vpop.f32.mrf.mxu0
        %v1751 = vadd.f32 0.0, %v1750
        %v1752 = vpop.f32.mrf.mxu0
        %v1753 = vadd.f32 0.0, %v1752
        %1754 = vmatprep.mubr.bf16.mxu0 0
        %1755 = vmatmul.mubr.bf16.gmra.mxu0 %v1640
        %v1756 = vpop.f32.mrf.mxu0
        %v1757 = vadd.f32 0.0, %v1756
        %v1758 = vpop.f32.mrf.mxu0
        %v1759 = vadd.f32 0.0, %v1758
        %v1760 = vpop.f32.mrf.mxu0
        %v1761 = vadd.f32 0.0, %v1760
        %v1762 = vpop.f32.mrf.mxu0
        %v1763 = vadd.f32 0.0, %v1762
        %1764 = vmatprep.mubr.bf16.mxu0 0
        %1765 = vmatmul.mubr.bf16.gmra.mxu0 %v1643
        %v1766 = vpop.f32.mrf.mxu0
        %v1767 = vadd.f32 0.0, %v1766
        %v1768 = vpop.f32.mrf.mxu0
        %v1769 = vadd.f32 0.0, %v1768
        %v1770 = vpop.f32.mrf.mxu0
        %v1771 = vadd.f32 0.0, %v1770
        %v1772 = vpop.f32.mrf.mxu0
        %v1773 = vadd.f32 0.0, %v1772
        %1774 = vmatprep.mubr.bf16.mxu0 0
        %1775 = vmatmul.mubr.bf16.gmra.mxu0 %v1646
        %v1776 = vpop.f32.mrf.mxu0
        %v1777 = vadd.f32 0.0, %v1776
        %v1778 = vpop.f32.mrf.mxu0
        %v1779 = vadd.f32 0.0, %v1778
        %v1780 = vpop.f32.mrf.mxu0
        %v1781 = vadd.f32 0.0, %v1780
        %v1782 = vpop.f32.mrf.mxu0
        %v1783 = vadd.f32 0.0, %v1782
        %1784 = vmatprep.mubr.bf16.mxu0 0
        %1785 = vmatmul.mubr.bf16.gmra.mxu0 %v1649
        %v1786 = vpop.f32.mrf.mxu0
        %v1787 = vadd.f32 0.0, %v1786
        %v1788 = vpop.f32.mrf.mxu0
        %v1789 = vadd.f32 0.0, %v1788
        %v1790 = vpop.f32.mrf.mxu0
        %v1791 = vadd.f32 0.0, %v1790
        %v1792 = vpop.f32.mrf.mxu0
        %v1793 = vadd.f32 0.0, %v1792
        %1794 = vmatprep.mubr.bf16.mxu0 0
        %1795 = vmatmul.mubr.bf16.gmra.mxu0 %v1652
        %v1796 = vpop.f32.mrf.mxu0
        %v1797 = vadd.f32 0.0, %v1796
        %v1798 = vpop.f32.mrf.mxu0
        %v1799 = vadd.f32 0.0, %v1798
        %v1800 = vpop.f32.mrf.mxu0
        %v1801 = vadd.f32 0.0, %v1800
        %v1802 = vpop.f32.mrf.mxu0
        %v1803 = vadd.f32 0.0, %v1802
        %1804 = vmatprep.mubr.bf16.mxu0 0
        %1805 = vmatmul.mubr.bf16.gmra.mxu0 %v1655
        %v1806 = vpop.f32.mrf.mxu0
        %v1807 = vadd.f32 0.0, %v1806
        %v1808 = vpop.f32.mrf.mxu0
        %v1809 = vadd.f32 0.0, %v1808
        %v1810 = vpop.f32.mrf.mxu0
        %v1811 = vadd.f32 0.0, %v1810
        %v1812 = vpop.f32.mrf.mxu0
        %v1813 = vadd.f32 0.0, %v1812
        %1814 = vmatprep.mubr.bf16.mxu0 0
        %1815 = vmatmul.mubr.bf16.gmra.mxu0 %v1658
        %v1816 = vpop.f32.mrf.mxu0
        %v1817 = vadd.f32 0.0, %v1816
        %v1818 = vpop.f32.mrf.mxu0
        %v1819 = vadd.f32 0.0, %v1818
        %v1820 = vpop.f32.mrf.mxu0
        %v1821 = vadd.f32 0.0, %v1820
        %v1822 = vpop.f32.mrf.mxu0
        %v1823 = vadd.f32 0.0, %v1822
        %1824 = vmatprep.mubr.bf16.mxu0 0
        %1825 = vmatmul.mubr.bf16.gmra.mxu0 %v1661
        %v1826 = vpop.f32.mrf.mxu0
        %v1827 = vadd.f32 0.0, %v1826
        %v1828 = vpop.f32.mrf.mxu0
        %v1829 = vadd.f32 0.0, %v1828
        %v1830 = vpop.f32.mrf.mxu0
        %v1831 = vadd.f32 0.0, %v1830
        %v1832 = vpop.f32.mrf.mxu0
        %v1833 = vadd.f32 0.0, %v1832
        %1834 = vmatprep.mubr.bf16.mxu0 0
        %1835 = vmatmul.mubr.bf16.gmra.mxu0 %v1664
        %v1836 = vpop.f32.mrf.mxu0
        %v1837 = vadd.f32 0.0, %v1836
        %v1838 = vpop.f32.mrf.mxu0
        %v1839 = vadd.f32 0.0, %v1838
        %v1840 = vpop.f32.mrf.mxu0
        %v1841 = vadd.f32 0.0, %v1840
        %v1842 = vpop.f32.mrf.mxu0
        %v1843 = vadd.f32 0.0, %v1842
        %1844 = vmatprep.mubr.bf16.mxu0 0
        %1845 = vmatmul.mubr.bf16.gmra.mxu0 %v1667
        %v1846 = vpop.f32.mrf.mxu0
        %v1847 = vadd.f32 0.0, %v1846
        %v1848 = vpop.f32.mrf.mxu0
        %v1849 = vadd.f32 0.0, %v1848
        %v1850 = vpop.f32.mrf.mxu0
        %v1851 = vadd.f32 0.0, %v1850
        %v1852 = vpop.f32.mrf.mxu0
        %v1853 = vadd.f32 0.0, %v1852
        %1854 = vmatprep.mubr.bf16.mxu0 0
        %1855 = vmatmul.mubr.bf16.gmra.mxu0 %v1670
        %v1856 = vpop.f32.mrf.mxu0
        %v1857 = vadd.f32 0.0, %v1856
        %v1858 = vpop.f32.mrf.mxu0
        %v1859 = vadd.f32 0.0, %v1858
        %v1860 = vpop.f32.mrf.mxu0
        %v1861 = vadd.f32 0.0, %v1860
        %v1862 = vpop.f32.mrf.mxu0
        %v1863 = vadd.f32 0.0, %v1862
        %1864 = vdwg.mxu0
        %v1865 = vadd.f32 %v1442, %v1707
        %v1866 = vadd.f32 %v1444, %v1709
        %v1867 = vadd.f32 %v1446, %v1711
        %v1868 = vadd.f32 %v1448, %v1713
        %v1869 = vadd.f32 %v1452, %v1717
        %v1870 = vadd.f32 %v1454, %v1719
        %v1871 = vadd.f32 %v1456, %v1721
        %v1872 = vadd.f32 %v1458, %v1723
        %v1873 = vadd.f32 %v1462, %v1727
        %v1874 = vadd.f32 %v1464, %v1729
        %v1875 = vadd.f32 %v1466, %v1731
        %v1876 = vadd.f32 %v1468, %v1733
        %v1877 = vadd.f32 %v1472, %v1737
        %v1878 = vadd.f32 %v1474, %v1739
        %v1879 = vadd.f32 %v1476, %v1741
        %v1880 = vadd.f32 %v1478, %v1743
        %v1881 = vadd.f32 %v1482, %v1747
        %v1882 = vadd.f32 %v1484, %v1749
        %v1883 = vadd.f32 %v1486, %v1751
        %v1884 = vadd.f32 %v1488, %v1753
        %v1885 = vadd.f32 %v1492, %v1757
        %v1886 = vadd.f32 %v1494, %v1759
        %v1887 = vadd.f32 %v1496, %v1761
        %v1888 = vadd.f32 %v1498, %v1763
        %v1889 = vadd.f32 %v1502, %v1767
        %v1890 = vadd.f32 %v1504, %v1769
        %v1891 = vadd.f32 %v1506, %v1771
        %v1892 = vadd.f32 %v1508, %v1773
        %v1893 = vadd.f32 %v1512, %v1777
        %v1894 = vadd.f32 %v1514, %v1779
        %v1895 = vadd.f32 %v1516, %v1781
        %v1896 = vadd.f32 %v1518, %v1783
        %v1897 = vadd.f32 %v1522, %v1787
        %v1898 = vadd.f32 %v1524, %v1789
        %v1899 = vadd.f32 %v1526, %v1791
        %v1900 = vadd.f32 %v1528, %v1793
        %v1901 = vadd.f32 %v1532, %v1797
        %v1902 = vadd.f32 %v1534, %v1799
        %v1903 = vadd.f32 %v1536, %v1801
        %v1904 = vadd.f32 %v1538, %v1803
        %v1905 = vadd.f32 %v1542, %v1807
        %v1906 = vadd.f32 %v1544, %v1809
        %v1907 = vadd.f32 %v1546, %v1811
        %v1908 = vadd.f32 %v1548, %v1813
        %v1909 = vadd.f32 %v1552, %v1817
        %v1910 = vadd.f32 %v1554, %v1819
        %v1911 = vadd.f32 %v1556, %v1821
        %v1912 = vadd.f32 %v1558, %v1823
        %v1913 = vadd.f32 %v1562, %v1827
        %v1914 = vadd.f32 %v1564, %v1829
        %v1915 = vadd.f32 %v1566, %v1831
        %v1916 = vadd.f32 %v1568, %v1833
        %v1917 = vadd.f32 %v1572, %v1837
        %v1918 = vadd.f32 %v1574, %v1839
        %v1919 = vadd.f32 %v1576, %v1841
        %v1920 = vadd.f32 %v1578, %v1843
        %v1921 = vadd.f32 %v1582, %v1847
        %v1922 = vadd.f32 %v1584, %v1849
        %v1923 = vadd.f32 %v1586, %v1851
        %v1924 = vadd.f32 %v1588, %v1853
        %v1925 = vadd.f32 %v1592, %v1857
        %v1926 = vadd.f32 %v1594, %v1859
        %v1927 = vadd.f32 %v1596, %v1861
        %v1928 = vadd.f32 %v1598, %v1863
        %v1929 = vsub.f32 0.0, %v1865
        %v1930 = vsub.f32 0.0, %v1867
        %v1931 = vsub.f32 0.0, %v1869
        %v1932 = vsub.f32 0.0, %v1871
        %v1933 = vsub.f32 0.0, %v1873
        %v1934 = vsub.f32 0.0, %v1875
        %v1935 = vsub.f32 0.0, %v1877
        %v1936 = vsub.f32 0.0, %v1879
        %v1937 = vsub.f32 0.0, %v1881
        %v1938 = vsub.f32 0.0, %v1883
        %v1939 = vsub.f32 0.0, %v1885
        %v1940 = vsub.f32 0.0, %v1887
        %v1941 = vsub.f32 0.0, %v1889
        %v1942 = vsub.f32 0.0, %v1891
        %v1943 = vsub.f32 0.0, %v1893
        %v1944 = vsub.f32 0.0, %v1895
        %v1945 = vsub.f32 0.0, %v1897
        %v1946 = vsub.f32 0.0, %v1899
        %v1947 = vsub.f32 0.0, %v1901
        %v1948 = vsub.f32 0.0, %v1903
        %v1949 = vsub.f32 0.0, %v1905
        %v1950 = vsub.f32 0.0, %v1907
        %v1951 = vsub.f32 0.0, %v1909
        %v1952 = vsub.f32 0.0, %v1911
        %v1953 = vsub.f32 0.0, %v1913
        %v1954 = vsub.f32 0.0, %v1915
        %v1955 = vsub.f32 0.0, %v1917
        %v1956 = vsub.f32 0.0, %v1919
        %v1957 = vsub.f32 0.0, %v1921
        %v1958 = vsub.f32 0.0, %v1923
        %v1959 = vsub.f32 0.0, %v1925
        %v1960 = vsub.f32 0.0, %v1927
        %v1961 = vmul.f32 %v1929, 1.442695
        %v1962 = vpow.pop %v1961
        %v1963 = vmul.f32 %v1930, 1.442695
        %v1964 = vpow.pop %v1963
        %v1965 = vmul.f32 %v1931, 1.442695
        %v1966 = vpow.pop %v1965
        %v1967 = vmul.f32 %v1932, 1.442695
        %v1968 = vpow.pop %v1967
        %v1969 = vmul.f32 %v1933, 1.442695
        %v1970 = vpow.pop %v1969
        %v1971 = vmul.f32 %v1934, 1.442695
        %v1972 = vpow.pop %v1971
        %v1973 = vmul.f32 %v1935, 1.442695
        %v1974 = vpow.pop %v1973
        %v1975 = vmul.f32 %v1936, 1.442695
        %v1976 = vpow.pop %v1975
        %v1977 = vmul.f32 %v1937, 1.442695
        %v1978 = vpow.pop %v1977
        %v1979 = vmul.f32 %v1938, 1.442695
        %v1980 = vpow.pop %v1979
        %v1981 = vmul.f32 %v1939, 1.442695
        %v1982 = vpow.pop %v1981
        %v1983 = vmul.f32 %v1940, 1.442695
        %v1984 = vpow.pop %v1983
        %v1985 = vmul.f32 %v1941, 1.442695
        %v1986 = vpow.pop %v1985
        %v1987 = vmul.f32 %v1942, 1.442695
        %v1988 = vpow.pop %v1987
        %v1989 = vmul.f32 %v1943, 1.442695
        %v1990 = vpow.pop %v1989
        %v1991 = vmul.f32 %v1944, 1.442695
        %v1992 = vpow.pop %v1991
        %v1993 = vmul.f32 %v1945, 1.442695
        %v1994 = vpow.pop %v1993
        %v1995 = vmul.f32 %v1946, 1.442695
        %v1996 = vpow.pop %v1995
        %v1997 = vmul.f32 %v1947, 1.442695
        %v1998 = vpow.pop %v1997
        %v1999 = vmul.f32 %v1948, 1.442695
        %v2000 = vpow.pop %v1999
        %v2001 = vmul.f32 %v1949, 1.442695
        %v2002 = vpow.pop %v2001
        %v2003 = vmul.f32 %v1950, 1.442695
        %v2004 = vpow.pop %v2003
        %v2005 = vmul.f32 %v1951, 1.442695
        %v2006 = vpow.pop %v2005
        %v2007 = vmul.f32 %v1952, 1.442695
        %v2008 = vpow.pop %v2007
        %v2009 = vmul.f32 %v1953, 1.442695
        %v2010 = vpow.pop %v2009
        %v2011 = vmul.f32 %v1954, 1.442695
        %v2012 = vpow.pop %v2011
        %v2013 = vmul.f32 %v1955, 1.442695
        %v2014 = vpow.pop %v2013
        %v2015 = vmul.f32 %v1956, 1.442695
        %v2016 = vpow.pop %v2015
        %v2017 = vmul.f32 %v1957, 1.442695
        %v2018 = vpow.pop %v2017
        %v2019 = vmul.f32 %v1958, 1.442695
        %v2020 = vpow.pop %v2019
        %v2021 = vmul.f32 %v1959, 1.442695
        %v2022 = vpow.pop %v2021
        %v2023 = vmul.f32 %v1960, 1.442695
        %v2024 = vpow.pop %v2023
        %v2025 = vadd.f32 %v1962, 1.0
        %v2026 = vadd.f32 %v1964, 1.0
        %v2027 = vadd.f32 %v1966, 1.0
        %v2028 = vadd.f32 %v1968, 1.0
        %v2029 = vadd.f32 %v1970, 1.0
        %v2030 = vadd.f32 %v1972, 1.0
        %v2031 = vadd.f32 %v1974, 1.0
        %v2032 = vadd.f32 %v1976, 1.0
        %v2033 = vadd.f32 %v1978, 1.0
        %v2034 = vadd.f32 %v1980, 1.0
        %v2035 = vadd.f32 %v1982, 1.0
        %v2036 = vadd.f32 %v1984, 1.0
        %v2037 = vadd.f32 %v1986, 1.0
        %v2038 = vadd.f32 %v1988, 1.0
        %v2039 = vadd.f32 %v1990, 1.0
        %v2040 = vadd.f32 %v1992, 1.0
        %v2041 = vadd.f32 %v1994, 1.0
        %v2042 = vadd.f32 %v1996, 1.0
        %v2043 = vadd.f32 %v1998, 1.0
        %v2044 = vadd.f32 %v2000, 1.0
        %v2045 = vadd.f32 %v2002, 1.0
        %v2046 = vadd.f32 %v2004, 1.0
        %v2047 = vadd.f32 %v2006, 1.0
        %v2048 = vadd.f32 %v2008, 1.0
        %v2049 = vadd.f32 %v2010, 1.0
        %v2050 = vadd.f32 %v2012, 1.0
        %v2051 = vadd.f32 %v2014, 1.0
        %v2052 = vadd.f32 %v2016, 1.0
        %v2053 = vadd.f32 %v2018, 1.0
        %v2054 = vadd.f32 %v2020, 1.0
        %v2055 = vadd.f32 %v2022, 1.0
        %v2056 = vadd.f32 %v2024, 1.0
        %v2057 = vrcp.pop %v2025
        %v2058 = vmul.f32 1.0, %v2057
        %v2059 = vrcp.pop %v2026
        %v2060 = vmul.f32 1.0, %v2059
        %v2061 = vrcp.pop %v2027
        %v2062 = vmul.f32 1.0, %v2061
        %v2063 = vrcp.pop %v2028
        %v2064 = vmul.f32 1.0, %v2063
        %v2065 = vrcp.pop %v2029
        %v2066 = vmul.f32 1.0, %v2065
        %v2067 = vrcp.pop %v2030
        %v2068 = vmul.f32 1.0, %v2067
        %v2069 = vrcp.pop %v2031
        %v2070 = vmul.f32 1.0, %v2069
        %v2071 = vrcp.pop %v2032
        %v2072 = vmul.f32 1.0, %v2071
        %v2073 = vrcp.pop %v2033
        %v2074 = vmul.f32 1.0, %v2073
        %v2075 = vrcp.pop %v2034
        %v2076 = vmul.f32 1.0, %v2075
        %v2077 = vrcp.pop %v2035
        %v2078 = vmul.f32 1.0, %v2077
        %v2079 = vrcp.pop %v2036
        %v2080 = vmul.f32 1.0, %v2079
        %v2081 = vrcp.pop %v2037
        %v2082 = vmul.f32 1.0, %v2081
        %v2083 = vrcp.pop %v2038
        %v2084 = vmul.f32 1.0, %v2083
        %v2085 = vrcp.pop %v2039
        %v2086 = vmul.f32 1.0, %v2085
        %v2087 = vrcp.pop %v2040
        %v2088 = vmul.f32 1.0, %v2087
        %v2089 = vrcp.pop %v2041
        %v2090 = vmul.f32 1.0, %v2089
        %v2091 = vrcp.pop %v2042
        %v2092 = vmul.f32 1.0, %v2091
        %v2093 = vrcp.pop %v2043
        %v2094 = vmul.f32 1.0, %v2093
        %v2095 = vrcp.pop %v2044
        %v2096 = vmul.f32 1.0, %v2095
        %v2097 = vrcp.pop %v2045
        %v2098 = vmul.f32 1.0, %v2097
        %v2099 = vrcp.pop %v2046
        %v2100 = vmul.f32 1.0, %v2099
        %v2101 = vrcp.pop %v2047
        %v2102 = vmul.f32 1.0, %v2101
        %v2103 = vrcp.pop %v2048
        %v2104 = vmul.f32 1.0, %v2103
        %v2105 = vrcp.pop %v2049
        %v2106 = vmul.f32 1.0, %v2105
        %v2107 = vrcp.pop %v2050
        %v2108 = vmul.f32 1.0, %v2107
        %v2109 = vrcp.pop %v2051
        %v2110 = vmul.f32 1.0, %v2109
        %v2111 = vrcp.pop %v2052
        %v2112 = vmul.f32 1.0, %v2111
        %v2113 = vrcp.pop %v2053
        %v2114 = vmul.f32 1.0, %v2113
        %v2115 = vrcp.pop %v2054
        %v2116 = vmul.f32 1.0, %v2115
        %v2117 = vrcp.pop %v2055
        %v2118 = vmul.f32 1.0, %v2117
        %v2119 = vrcp.pop %v2056
        %v2120 = vmul.f32 1.0, %v2119
        %vm2121 = vcmp.gt.f32.partialorder %v1866, 0.0
        %vm2122 = vcmp.gt.f32.partialorder %v1868, 0.0
        %vm2123 = vcmp.gt.f32.partialorder %v1870, 0.0
        %vm2124 = vcmp.gt.f32.partialorder %v1872, 0.0
        %vm2125 = vcmp.gt.f32.partialorder %v1874, 0.0
        %vm2126 = vcmp.gt.f32.partialorder %v1876, 0.0
        %vm2127 = vcmp.gt.f32.partialorder %v1878, 0.0
        %vm2128 = vcmp.gt.f32.partialorder %v1880, 0.0
        %vm2129 = vcmp.gt.f32.partialorder %v1882, 0.0
        %vm2130 = vcmp.gt.f32.partialorder %v1884, 0.0
        %vm2131 = vcmp.gt.f32.partialorder %v1886, 0.0
        %vm2132 = vcmp.gt.f32.partialorder %v1888, 0.0
        %vm2133 = vcmp.gt.f32.partialorder %v1890, 0.0
        %vm2134 = vcmp.gt.f32.partialorder %v1892, 0.0
        %vm2135 = vcmp.gt.f32.partialorder %v1894, 0.0
        %vm2136 = vcmp.gt.f32.partialorder %v1896, 0.0
        %vm2137 = vcmp.gt.f32.partialorder %v1898, 0.0
        %vm2138 = vcmp.gt.f32.partialorder %v1900, 0.0
        %vm2139 = vcmp.gt.f32.partialorder %v1902, 0.0
        %vm2140 = vcmp.gt.f32.partialorder %v1904, 0.0
        %vm2141 = vcmp.gt.f32.partialorder %v1906, 0.0
        %vm2142 = vcmp.gt.f32.partialorder %v1908, 0.0
        %vm2143 = vcmp.gt.f32.partialorder %v1910, 0.0
        %vm2144 = vcmp.gt.f32.partialorder %v1912, 0.0
        %vm2145 = vcmp.gt.f32.partialorder %v1914, 0.0
        %vm2146 = vcmp.gt.f32.partialorder %v1916, 0.0
        %vm2147 = vcmp.gt.f32.partialorder %v1918, 0.0
        %vm2148 = vcmp.gt.f32.partialorder %v1920, 0.0
        %vm2149 = vcmp.gt.f32.partialorder %v1922, 0.0
        %vm2150 = vcmp.gt.f32.partialorder %v1924, 0.0
        %vm2151 = vcmp.gt.f32.partialorder %v1926, 0.0
        %vm2152 = vcmp.gt.f32.partialorder %v1928, 0.0
        %v2153 = vmin.f32 %v1866, 0.0
        %v2154 = vmin.f32 %v1868, 0.0
        %v2155 = vmin.f32 %v1870, 0.0
        %v2156 = vmin.f32 %v1872, 0.0
        %v2157 = vmin.f32 %v1874, 0.0
        %v2158 = vmin.f32 %v1876, 0.0
        %v2159 = vmin.f32 %v1878, 0.0
        %v2160 = vmin.f32 %v1880, 0.0
        %v2161 = vmin.f32 %v1882, 0.0
        %v2162 = vmin.f32 %v1884, 0.0
        %v2163 = vmin.f32 %v1886, 0.0
        %v2164 = vmin.f32 %v1888, 0.0
        %v2165 = vmin.f32 %v1890, 0.0
        %v2166 = vmin.f32 %v1892, 0.0
        %v2167 = vmin.f32 %v1894, 0.0
        %v2168 = vmin.f32 %v1896, 0.0
        %v2169 = vmin.f32 %v1898, 0.0
        %v2170 = vmin.f32 %v1900, 0.0
        %v2171 = vmin.f32 %v1902, 0.0
        %v2172 = vmin.f32 %v1904, 0.0
        %v2173 = vmin.f32 %v1906, 0.0
        %v2174 = vmin.f32 %v1908, 0.0
        %v2175 = vmin.f32 %v1910, 0.0
        %v2176 = vmin.f32 %v1912, 0.0
        %v2177 = vmin.f32 %v1914, 0.0
        %v2178 = vmin.f32 %v1916, 0.0
        %v2179 = vmin.f32 %v1918, 0.0
        %v2180 = vmin.f32 %v1920, 0.0
        %v2181 = vmin.f32 %v1922, 0.0
        %v2182 = vmin.f32 %v1924, 0.0
        %v2183 = vmin.f32 %v1926, 0.0
        %v2184 = vmin.f32 %v1928, 0.0
        %v2185 = vmul.f32 %v2153, 1.442695
        %v2186 = vpow.pop %v2185
        %v2187 = vmul.f32 %v2154, 1.442695
        %v2188 = vpow.pop %v2187
        %v2189 = vmul.f32 %v2155, 1.442695
        %v2190 = vpow.pop %v2189
        %v2191 = vmul.f32 %v2156, 1.442695
        %v2192 = vpow.pop %v2191
        %v2193 = vmul.f32 %v2157, 1.442695
        %v2194 = vpow.pop %v2193
        %v2195 = vmul.f32 %v2158, 1.442695
        %v2196 = vpow.pop %v2195
        %v2197 = vmul.f32 %v2159, 1.442695
        %v2198 = vpow.pop %v2197
        %v2199 = vmul.f32 %v2160, 1.442695
        %v2200 = vpow.pop %v2199
        %v2201 = vmul.f32 %v2161, 1.442695
        %v2202 = vpow.pop %v2201
        %v2203 = vmul.f32 %v2162, 1.442695
        %v2204 = vpow.pop %v2203
        %v2205 = vmul.f32 %v2163, 1.442695
        %v2206 = vpow.pop %v2205
        %v2207 = vmul.f32 %v2164, 1.442695
        %v2208 = vpow.pop %v2207
        %v2209 = vmul.f32 %v2165, 1.442695
        %v2210 = vpow.pop %v2209
        %v2211 = vmul.f32 %v2166, 1.442695
        %v2212 = vpow.pop %v2211
        %v2213 = vmul.f32 %v2167, 1.442695
        %v2214 = vpow.pop %v2213
        %v2215 = vmul.f32 %v2168, 1.442695
        %v2216 = vpow.pop %v2215
        %v2217 = vmul.f32 %v2169, 1.442695
        %v2218 = vpow.pop %v2217
        %v2219 = vmul.f32 %v2170, 1.442695
        %v2220 = vpow.pop %v2219
        %v2221 = vmul.f32 %v2171, 1.442695
        %v2222 = vpow.pop %v2221
        %v2223 = vmul.f32 %v2172, 1.442695
        %v2224 = vpow.pop %v2223
        %v2225 = vmul.f32 %v2173, 1.442695
        %v2226 = vpow.pop %v2225
        %v2227 = vmul.f32 %v2174, 1.442695
        %v2228 = vpow.pop %v2227
        %v2229 = vmul.f32 %v2175, 1.442695
        %v2230 = vpow.pop %v2229
        %v2231 = vmul.f32 %v2176, 1.442695
        %v2232 = vpow.pop %v2231
        %v2233 = vmul.f32 %v2177, 1.442695
        %v2234 = vpow.pop %v2233
        %v2235 = vmul.f32 %v2178, 1.442695
        %v2236 = vpow.pop %v2235
        %v2237 = vmul.f32 %v2179, 1.442695
        %v2238 = vpow.pop %v2237
        %v2239 = vmul.f32 %v2180, 1.442695
        %v2240 = vpow.pop %v2239
        %v2241 = vmul.f32 %v2181, 1.442695
        %v2242 = vpow.pop %v2241
        %v2243 = vmul.f32 %v2182, 1.442695
        %v2244 = vpow.pop %v2243
        %v2245 = vmul.f32 %v2183, 1.442695
        %v2246 = vpow.pop %v2245
        %v2247 = vmul.f32 %v2184, 1.442695
        %v2248 = vpow.pop %v2247
        %v2249 = vsub.f32 %v2186, 1.0
        %v2250 = vsub.f32 %v2188, 1.0
        %v2251 = vsub.f32 %v2190, 1.0
        %v2252 = vsub.f32 %v2192, 1.0
        %v2253 = vsub.f32 %v2194, 1.0
        %v2254 = vsub.f32 %v2196, 1.0
        %v2255 = vsub.f32 %v2198, 1.0
        %v2256 = vsub.f32 %v2200, 1.0
        %v2257 = vsub.f32 %v2202, 1.0
        %v2258 = vsub.f32 %v2204, 1.0
        %v2259 = vsub.f32 %v2206, 1.0
        %v2260 = vsub.f32 %v2208, 1.0
        %v2261 = vsub.f32 %v2210, 1.0
        %v2262 = vsub.f32 %v2212, 1.0
        %v2263 = vsub.f32 %v2214, 1.0
        %v2264 = vsub.f32 %v2216, 1.0
        %v2265 = vsub.f32 %v2218, 1.0
        %v2266 = vsub.f32 %v2220, 1.0
        %v2267 = vsub.f32 %v2222, 1.0
        %v2268 = vsub.f32 %v2224, 1.0
        %v2269 = vsub.f32 %v2226, 1.0
        %v2270 = vsub.f32 %v2228, 1.0
        %v2271 = vsub.f32 %v2230, 1.0
        %v2272 = vsub.f32 %v2232, 1.0
        %v2273 = vsub.f32 %v2234, 1.0
        %v2274 = vsub.f32 %v2236, 1.0
        %v2275 = vsub.f32 %v2238, 1.0
        %v2276 = vsub.f32 %v2240, 1.0
        %v2277 = vsub.f32 %v2242, 1.0
        %v2278 = vsub.f32 %v2244, 1.0
        %v2279 = vsub.f32 %v2246, 1.0
        %v2280 = vsub.f32 %v2248, 1.0
        %v2281 = vsel %vm2121, %v1866, %v2249
        %v2282 = vsel %vm2122, %v1868, %v2250
        %v2283 = vsel %vm2123, %v1870, %v2251
        %v2284 = vsel %vm2124, %v1872, %v2252
        %v2285 = vsel %vm2125, %v1874, %v2253
        %v2286 = vsel %vm2126, %v1876, %v2254
        %v2287 = vsel %vm2127, %v1878, %v2255
        %v2288 = vsel %vm2128, %v1880, %v2256
        %v2289 = vsel %vm2129, %v1882, %v2257
        %v2290 = vsel %vm2130, %v1884, %v2258
        %v2291 = vsel %vm2131, %v1886, %v2259
        %v2292 = vsel %vm2132, %v1888, %v2260
        %v2293 = vsel %vm2133, %v1890, %v2261
        %v2294 = vsel %vm2134, %v1892, %v2262
        %v2295 = vsel %vm2135, %v1894, %v2263
        %v2296 = vsel %vm2136, %v1896, %v2264
        %v2297 = vsel %vm2137, %v1898, %v2265
        %v2298 = vsel %vm2138, %v1900, %v2266
        %v2299 = vsel %vm2139, %v1902, %v2267
        %v2300 = vsel %vm2140, %v1904, %v2268
        %v2301 = vsel %vm2141, %v1906, %v2269
        %v2302 = vsel %vm2142, %v1908, %v2270
        %v2303 = vsel %vm2143, %v1910, %v2271
        %v2304 = vsel %vm2144, %v1912, %v2272
        %v2305 = vsel %vm2145, %v1914, %v2273
        %v2306 = vsel %vm2146, %v1916, %v2274
        %v2307 = vsel %vm2147, %v1918, %v2275
        %v2308 = vsel %vm2148, %v1920, %v2276
        %v2309 = vsel %vm2149, %v1922, %v2277
        %v2310 = vsel %vm2150, %v1924, %v2278
        %v2311 = vsel %vm2151, %v1926, %v2279
        %v2312 = vsel %vm2152, %v1928, %v2280
        %v2313 = vld [vmem:[%s467] sm:$0xf]
        %v2314 = vld [vmem:[%s467 + $0x4] sm:$0xf]
        %v2315 = vld [vmem:[%s467 + $0x8] sm:$0xf]
        %v2316 = vld [vmem:[%s467 + $0xc] sm:$0xf]
        %v2317 = vld [vmem:[%s467 + $0x10] sm:$0xf]
        %v2318 = vld [vmem:[%s467 + $0x14] sm:$0xf]
        %v2319 = vld [vmem:[%s467 + $0x18] sm:$0xf]
        %v2320 = vld [vmem:[%s467 + $0x1c] sm:$0xf]
        %v2321 = vld [vmem:[%s467 + $0x20] sm:$0xf]
        %v2322 = vld [vmem:[%s467 + $0x24] sm:$0xf]
        %v2323 = vld [vmem:[%s467 + $0x28] sm:$0xf]
        %v2324 = vld [vmem:[%s467 + $0x2c] sm:$0xf]
        %v2325 = vld [vmem:[%s467 + $0x30] sm:$0xf]
        %v2326 = vld [vmem:[%s467 + $0x34] sm:$0xf]
        %v2327 = vld [vmem:[%s467 + $0x38] sm:$0xf]
        %v2328 = vld [vmem:[%s467 + $0x3c] sm:$0xf]
        %v2329 = vld [vmem:[%s467 + $0x40] sm:$0xf]
        %v2330 = vld [vmem:[%s467 + $0x44] sm:$0xf]
        %v2331 = vld [vmem:[%s467 + $0x48] sm:$0xf]
        %v2332 = vld [vmem:[%s467 + $0x4c] sm:$0xf]
        %v2333 = vld [vmem:[%s467 + $0x50] sm:$0xf]
        %v2334 = vld [vmem:[%s467 + $0x54] sm:$0xf]
        %v2335 = vld [vmem:[%s467 + $0x58] sm:$0xf]
        %v2336 = vld [vmem:[%s467 + $0x5c] sm:$0xf]
        %v2337 = vld [vmem:[%s467 + $0x60] sm:$0xf]
        %v2338 = vld [vmem:[%s467 + $0x64] sm:$0xf]
        %v2339 = vld [vmem:[%s467 + $0x68] sm:$0xf]
        %v2340 = vld [vmem:[%s467 + $0x6c] sm:$0xf]
        %v2341 = vld [vmem:[%s467 + $0x70] sm:$0xf]
        %v2342 = vld [vmem:[%s467 + $0x74] sm:$0xf]
        %v2343 = vld [vmem:[%s467 + $0x78] sm:$0xf]
        %v2344 = vld [vmem:[%s467 + $0x7c] sm:$0xf]
        %v2345 = vld [vmem:[%s8] sm:$0xf]
        %v2346 = vld [vmem:[%s8 + $0x4] sm:$0xf]
        %v2347 = vld [vmem:[%s8 + $0x8] sm:$0xf]
        %v2348 = vld [vmem:[%s8 + $0xc] sm:$0xf]
        %v2349 = vld [vmem:[%s473] sm:$0xf]
        %v2350 = vld [vmem:[%s473 + $0x4] sm:$0xf]
        %v2351 = vld [vmem:[%s473 + $0x8] sm:$0xf]
        %v2352 = vld [vmem:[%s473 + $0xc] sm:$0xf]
        %v2353 = vld [vmem:[%s473 + $0x10] sm:$0xf]
        %v2354 = vld [vmem:[%s473 + $0x14] sm:$0xf]
        %v2355 = vld [vmem:[%s473 + $0x18] sm:$0xf]
        %v2356 = vld [vmem:[%s473 + $0x1c] sm:$0xf]
        %v2357 = vld [vmem:[%s473 + $0x20] sm:$0xf]
        %v2358 = vld [vmem:[%s473 + $0x24] sm:$0xf]
        %v2359 = vld [vmem:[%s473 + $0x28] sm:$0xf]
        %v2360 = vld [vmem:[%s473 + $0x2c] sm:$0xf]
        %v2361 = vld [vmem:[%s473 + $0x30] sm:$0xf]
        %v2362 = vld [vmem:[%s473 + $0x34] sm:$0xf]
        %v2363 = vld [vmem:[%s473 + $0x38] sm:$0xf]
        %v2364 = vld [vmem:[%s473 + $0x3c] sm:$0xf]
        %v2365 = vld [vmem:[%s473 + $0x40] sm:$0xf]
        %v2366 = vld [vmem:[%s473 + $0x44] sm:$0xf]
        %v2367 = vld [vmem:[%s473 + $0x48] sm:$0xf]
        %v2368 = vld [vmem:[%s473 + $0x4c] sm:$0xf]
        %v2369 = vld [vmem:[%s473 + $0x50] sm:$0xf]
        %v2370 = vld [vmem:[%s473 + $0x54] sm:$0xf]
        %v2371 = vld [vmem:[%s473 + $0x58] sm:$0xf]
        %v2372 = vld [vmem:[%s473 + $0x5c] sm:$0xf]
        %v2373 = vld [vmem:[%s473 + $0x60] sm:$0xf]
        %v2374 = vld [vmem:[%s473 + $0x64] sm:$0xf]
        %v2375 = vld [vmem:[%s473 + $0x68] sm:$0xf]
        %v2376 = vld [vmem:[%s473 + $0x6c] sm:$0xf]
        %v2377 = vld [vmem:[%s473 + $0x70] sm:$0xf]
        %v2378 = vld [vmem:[%s473 + $0x74] sm:$0xf]
        %v2379 = vld [vmem:[%s473 + $0x78] sm:$0xf]
        %v2380 = vld [vmem:[%s473 + $0x7c] sm:$0xf]
        %v2381 = vld [vmem:[%s9] sm:$0xf]
        %v2382 = vld [vmem:[%s9 + $0x4] sm:$0xf]
        %v2383 = vld [vmem:[%s9 + $0x8] sm:$0xf]
        %v2384 = vld [vmem:[%s9 + $0xc] sm:$0xf]
        %v2385 = vld [vmem:[%s9 + $0x10] sm:$0xf]
        %v2386 = vld [vmem:[%s9 + $0x14] sm:$0xf]
        %v2387 = vld [vmem:[%s9 + $0x18] sm:$0xf]
        %v2388 = vld [vmem:[%s9 + $0x1c] sm:$0xf]
        %v2421 = vunpack.c.l.b16 %v2349
        %v2422 = vunpack.c.l.b16 %v2350
        %v2423 = vunpack.c.l.b16 %v2351
        %v2424 = vunpack.c.l.b16 %v2352
        %v2425 = vunpack.c.l.b16 %v2353
        %v2426 = vunpack.c.l.b16 %v2354
        %v2427 = vunpack.c.l.b16 %v2355
        %v2428 = vunpack.c.l.b16 %v2356
        %v2429 = vunpack.c.l.b16 %v2357
        %v2430 = vunpack.c.l.b16 %v2358
        %v2431 = vunpack.c.l.b16 %v2359
        %v2432 = vunpack.c.l.b16 %v2360
        %v2433 = vunpack.c.l.b16 %v2361
        %v2434 = vunpack.c.l.b16 %v2362
        %v2435 = vunpack.c.l.b16 %v2363
        %v2436 = vunpack.c.l.b16 %v2364
        %v2437 = vunpack.c.l.b16 %v2365
        %v2438 = vunpack.c.l.b16 %v2366
        %v2439 = vunpack.c.l.b16 %v2367
        %v2440 = vunpack.c.l.b16 %v2368
        %v2441 = vunpack.c.l.b16 %v2369
        %v2442 = vunpack.c.l.b16 %v2370
        %v2443 = vunpack.c.l.b16 %v2371
        %v2444 = vunpack.c.l.b16 %v2372
        %v2445 = vunpack.c.l.b16 %v2373
        %v2446 = vunpack.c.l.b16 %v2374
        %v2447 = vunpack.c.l.b16 %v2375
        %v2448 = vunpack.c.l.b16 %v2376
        %v2449 = vunpack.c.l.b16 %v2377
        %v2450 = vunpack.c.l.b16 %v2378
        %v2451 = vunpack.c.l.b16 %v2379
        %v2452 = vunpack.c.l.b16 %v2380
        %v2453 = vpack.c.b16 %v2422, %v2421
        %v2454 = vpack.c.b16 %v2424, %v2423
        %v2455 = vpack.c.b16 %v2426, %v2425
        %v2456 = vpack.c.b16 %v2428, %v2427
        %v2457 = vpack.c.b16 %v2430, %v2429
        %v2458 = vpack.c.b16 %v2432, %v2431
        %v2459 = vpack.c.b16 %v2434, %v2433
        %v2460 = vpack.c.b16 %v2436, %v2435
        %v2461 = vpack.c.b16 %v2438, %v2437
        %v2462 = vpack.c.b16 %v2440, %v2439
        %v2463 = vpack.c.b16 %v2442, %v2441
        %v2464 = vpack.c.b16 %v2444, %v2443
        %v2465 = vpack.c.b16 %v2446, %v2445
        %v2466 = vpack.c.b16 %v2448, %v2447
        %v2467 = vpack.c.b16 %v2450, %v2449
        %v2468 = vpack.c.b16 %v2452, %v2451
        %v2477 = vunpack.c.l.b16 %v2381
        %v2478 = vunpack.c.l.b16 %v2382
        %v2479 = vunpack.c.l.b16 %v2383
        %v2480 = vunpack.c.l.b16 %v2384
        %v2481 = vunpack.c.l.b16 %v2385
        %v2482 = vunpack.c.l.b16 %v2386
        %v2483 = vunpack.c.l.b16 %v2387
        %v2484 = vunpack.c.l.b16 %v2388
        %v2485 = vpack.c.b16 %v2478, %v2477
        %v2486 = vpack.c.b16 %v2480, %v2479
        %v2487 = vpack.c.b16 %v2482, %v2481
        %v2488 = vpack.c.b16 %v2484, %v2483
        %vm2493 = vcmask 523264
        %v2495 = vsel %vm2493, %v2453, 0
        %v2498 = vsel %vm2493, %v2454, 0
        %v2501 = vsel %vm2493, %v2455, 0
        %v2504 = vsel %vm2493, %v2456, 0
        %v2507 = vsel %vm2493, %v2457, 0
        %v2510 = vsel %vm2493, %v2458, 0
        %v2513 = vsel %vm2493, %v2459, 0
        %v2516 = vsel %vm2493, %v2460, 0
        %v2519 = vsel %vm2493, %v2461, 0
        %v2522 = vsel %vm2493, %v2462, 0
        %v2525 = vsel %vm2493, %v2463, 0
        %v2528 = vsel %vm2493, %v2464, 0
        %v2531 = vsel %vm2493, %v2465, 0
        %v2534 = vsel %vm2493, %v2466, 0
        %v2537 = vsel %vm2493, %v2467, 0
        %v2540 = vsel %vm2493, %v2468, 0
        %2542 = vmatprep.subr.bf16.mxu0 0
        %2543 = vmatpush1.bf16.msra.mxu0 0
        %2544 = vmatprep.subr.bf16.mxu0 0
        %2545 = vmatpush1.bf16.msra.mxu0 0
        %2546 = vmatprep.subr.bf16.mxu0 0
        %2547 = vmatpush1.bf16.msra.mxu0 0
        %2548 = vmatprep.subr.bf16.mxu0 0
        %2549 = vmatpush1.bf16.msra.mxu0 0
        %2550 = vmatprep.subr.bf16.mxu0 0
        %2551 = vmatpush1.bf16.msra.mxu0 %v2488
        %2552 = vmatprep.subr.bf16.mxu0 0
        %2553 = vmatpush1.bf16.msra.mxu0 %v2487
        %2554 = vmatprep.subr.bf16.mxu0 0
        %2555 = vmatpush1.bf16.msra.mxu0 %v2486
        %2556 = vmatprep.subr.bf16.mxu0 0
        %2557 = vmatpush1.bf16.msra.mxu0 %v2485
        %2558 = vmatprep.subr.bf16.mxu0 0
        %2559 = vmatpush2.bf16.msra.mxu0 0
        %2560 = vmatprep.subr.bf16.mxu0 0
        %2561 = vmatpush2.bf16.msra.mxu0 0
        %2562 = vmatprep.subr.bf16.mxu0 0
        %2563 = vmatpush2.bf16.msra.mxu0 0
        %2564 = vmatprep.subr.bf16.mxu0 0
        %2565 = vmatpush2.bf16.msra.mxu0 0
        %2566 = vmatprep.subr.bf16.mxu0 0
        %2567 = vmatpush2.bf16.msra.mxu0 0
        %2568 = vmatprep.subr.bf16.mxu0 0
        %2569 = vmatpush2.bf16.msra.mxu0 0
        %2570 = vmatprep.subr.bf16.mxu0 0
        %2571 = vmatpush2.bf16.msra.mxu0 0
        %2572 = vmatprep.subr.bf16.mxu0 0
        %2573 = vmatpush2.bf16.msra.mxu0 0
        %2574 = vmatprep.mubr.bf16.mxu0 0
        %2575 = vmatmul.mubr.bf16.gmra.mxu0 %v2495
        %v2576 = vpop.f32.mrf.mxu0
        %v2577 = vadd.f32 0.0, %v2576
        %v2578 = vpop.f32.mrf.mxu0
        %v2579 = vpop.f32.mrf.mxu0
        %v2580 = vadd.f32 0.0, %v2579
        %v2581 = vpop.f32.mrf.mxu0
        %2582 = vmatprep.mubr.bf16.mxu0 0
        %2583 = vmatmul.mubr.bf16.gmra.mxu0 %v2498
        %v2584 = vpop.f32.mrf.mxu0
        %v2585 = vadd.f32 0.0, %v2584
        %v2586 = vpop.f32.mrf.mxu0
        %v2587 = vpop.f32.mrf.mxu0
        %v2588 = vadd.f32 0.0, %v2587
        %v2589 = vpop.f32.mrf.mxu0
        %2590 = vmatprep.mubr.bf16.mxu0 0
        %2591 = vmatmul.mubr.bf16.gmra.mxu0 %v2501
        %v2592 = vpop.f32.mrf.mxu0
        %v2593 = vadd.f32 0.0, %v2592
        %v2594 = vpop.f32.mrf.mxu0
        %v2595 = vpop.f32.mrf.mxu0
        %v2596 = vadd.f32 0.0, %v2595
        %v2597 = vpop.f32.mrf.mxu0
        %2598 = vmatprep.mubr.bf16.mxu0 0
        %2599 = vmatmul.mubr.bf16.gmra.mxu0 %v2504
        %v2600 = vpop.f32.mrf.mxu0
        %v2601 = vadd.f32 0.0, %v2600
        %v2602 = vpop.f32.mrf.mxu0
        %v2603 = vpop.f32.mrf.mxu0
        %v2604 = vadd.f32 0.0, %v2603
        %v2605 = vpop.f32.mrf.mxu0
        %2606 = vmatprep.mubr.bf16.mxu0 0
        %2607 = vmatmul.mubr.bf16.gmra.mxu0 %v2507
        %v2608 = vpop.f32.mrf.mxu0
        %v2609 = vadd.f32 0.0, %v2608
        %v2610 = vpop.f32.mrf.mxu0
        %v2611 = vpop.f32.mrf.mxu0
        %v2612 = vadd.f32 0.0, %v2611
        %v2613 = vpop.f32.mrf.mxu0
        %2614 = vmatprep.mubr.bf16.mxu0 0
        %2615 = vmatmul.mubr.bf16.gmra.mxu0 %v2510
        %v2616 = vpop.f32.mrf.mxu0
        %v2617 = vadd.f32 0.0, %v2616
        %v2618 = vpop.f32.mrf.mxu0
        %v2619 = vpop.f32.mrf.mxu0
        %v2620 = vadd.f32 0.0, %v2619
        %v2621 = vpop.f32.mrf.mxu0
        %2622 = vmatprep.mubr.bf16.mxu0 0
        %2623 = vmatmul.mubr.bf16.gmra.mxu0 %v2513
        %v2624 = vpop.f32.mrf.mxu0
        %v2625 = vadd.f32 0.0, %v2624
        %v2626 = vpop.f32.mrf.mxu0
        %v2627 = vpop.f32.mrf.mxu0
        %v2628 = vadd.f32 0.0, %v2627
        %v2629 = vpop.f32.mrf.mxu0
        %2630 = vmatprep.mubr.bf16.mxu0 0
        %2631 = vmatmul.mubr.bf16.gmra.mxu0 %v2516
        %v2632 = vpop.f32.mrf.mxu0
        %v2633 = vadd.f32 0.0, %v2632
        %v2634 = vpop.f32.mrf.mxu0
        %v2635 = vpop.f32.mrf.mxu0
        %v2636 = vadd.f32 0.0, %v2635
        %v2637 = vpop.f32.mrf.mxu0
        %2638 = vmatprep.mubr.bf16.mxu0 0
        %2639 = vmatmul.mubr.bf16.gmra.mxu0 %v2519
        %v2640 = vpop.f32.mrf.mxu0
        %v2641 = vadd.f32 0.0, %v2640
        %v2642 = vpop.f32.mrf.mxu0
        %v2643 = vpop.f32.mrf.mxu0
        %v2644 = vadd.f32 0.0, %v2643
        %v2645 = vpop.f32.mrf.mxu0
        %2646 = vmatprep.mubr.bf16.mxu0 0
        %2647 = vmatmul.mubr.bf16.gmra.mxu0 %v2522
        %v2648 = vpop.f32.mrf.mxu0
        %v2649 = vadd.f32 0.0, %v2648
        %v2650 = vpop.f32.mrf.mxu0
        %v2651 = vpop.f32.mrf.mxu0
        %v2652 = vadd.f32 0.0, %v2651
        %v2653 = vpop.f32.mrf.mxu0
        %2654 = vmatprep.mubr.bf16.mxu0 0
        %2655 = vmatmul.mubr.bf16.gmra.mxu0 %v2525
        %v2656 = vpop.f32.mrf.mxu0
        %v2657 = vadd.f32 0.0, %v2656
        %v2658 = vpop.f32.mrf.mxu0
        %v2659 = vpop.f32.mrf.mxu0
        %v2660 = vadd.f32 0.0, %v2659
        %v2661 = vpop.f32.mrf.mxu0
        %2662 = vmatprep.mubr.bf16.mxu0 0
        %2663 = vmatmul.mubr.bf16.gmra.mxu0 %v2528
        %v2664 = vpop.f32.mrf.mxu0
        %v2665 = vadd.f32 0.0, %v2664
        %v2666 = vpop.f32.mrf.mxu0
        %v2667 = vpop.f32.mrf.mxu0
        %v2668 = vadd.f32 0.0, %v2667
        %v2669 = vpop.f32.mrf.mxu0
        %2670 = vmatprep.mubr.bf16.mxu0 0
        %2671 = vmatmul.mubr.bf16.gmra.mxu0 %v2531
        %v2672 = vpop.f32.mrf.mxu0
        %v2673 = vadd.f32 0.0, %v2672
        %v2674 = vpop.f32.mrf.mxu0
        %v2675 = vpop.f32.mrf.mxu0
        %v2676 = vadd.f32 0.0, %v2675
        %v2677 = vpop.f32.mrf.mxu0
        %2678 = vmatprep.mubr.bf16.mxu0 0
        %2679 = vmatmul.mubr.bf16.gmra.mxu0 %v2534
        %v2680 = vpop.f32.mrf.mxu0
        %v2681 = vadd.f32 0.0, %v2680
        %v2682 = vpop.f32.mrf.mxu0
        %v2683 = vpop.f32.mrf.mxu0
        %v2684 = vadd.f32 0.0, %v2683
        %v2685 = vpop.f32.mrf.mxu0
        %2686 = vmatprep.mubr.bf16.mxu0 0
        %2687 = vmatmul.mubr.bf16.gmra.mxu0 %v2537
        %v2688 = vpop.f32.mrf.mxu0
        %v2689 = vadd.f32 0.0, %v2688
        %v2690 = vpop.f32.mrf.mxu0
        %v2691 = vpop.f32.mrf.mxu0
        %v2692 = vadd.f32 0.0, %v2691
        %v2693 = vpop.f32.mrf.mxu0
        %2694 = vmatprep.mubr.bf16.mxu0 0
        %2695 = vmatmul.mubr.bf16.gmra.mxu0 %v2540
        %v2696 = vpop.f32.mrf.mxu0
        %v2697 = vadd.f32 0.0, %v2696
        %v2698 = vpop.f32.mrf.mxu0
        %v2699 = vpop.f32.mrf.mxu0
        %v2700 = vadd.f32 0.0, %v2699
        %v2701 = vpop.f32.mrf.mxu0
        %2702 = vdwg.mxu0
        %v2703 = vsub.f32 0.0, %v2577
        %v2704 = vsub.f32 0.0, %v2580
        %v2705 = vsub.f32 0.0, %v2585
        %v2706 = vsub.f32 0.0, %v2588
        %v2707 = vsub.f32 0.0, %v2593
        %v2708 = vsub.f32 0.0, %v2596
        %v2709 = vsub.f32 0.0, %v2601
        %v2710 = vsub.f32 0.0, %v2604
        %v2711 = vsub.f32 0.0, %v2609
        %v2712 = vsub.f32 0.0, %v2612
        %v2713 = vsub.f32 0.0, %v2617
        %v2714 = vsub.f32 0.0, %v2620
        %v2715 = vsub.f32 0.0, %v2625
        %v2716 = vsub.f32 0.0, %v2628
        %v2717 = vsub.f32 0.0, %v2633
        %v2718 = vsub.f32 0.0, %v2636
        %v2719 = vsub.f32 0.0, %v2641
        %v2720 = vsub.f32 0.0, %v2644
        %v2721 = vsub.f32 0.0, %v2649
        %v2722 = vsub.f32 0.0, %v2652
        %v2723 = vsub.f32 0.0, %v2657
        %v2724 = vsub.f32 0.0, %v2660
        %v2725 = vsub.f32 0.0, %v2665
        %v2726 = vsub.f32 0.0, %v2668
        %v2727 = vsub.f32 0.0, %v2673
        %v2728 = vsub.f32 0.0, %v2676
        %v2729 = vsub.f32 0.0, %v2681
        %v2730 = vsub.f32 0.0, %v2684
        %v2731 = vsub.f32 0.0, %v2689
        %v2732 = vsub.f32 0.0, %v2692
        %v2733 = vsub.f32 0.0, %v2697
        %v2734 = vsub.f32 0.0, %v2700
        %v2735 = vmul.f32 %v2703, 1.442695
        %v2736 = vpow.pop %v2735
        %v2737 = vmul.f32 %v2704, 1.442695
        %v2738 = vpow.pop %v2737
        %v2739 = vmul.f32 %v2705, 1.442695
        %v2740 = vpow.pop %v2739
        %v2741 = vmul.f32 %v2706, 1.442695
        %v2742 = vpow.pop %v2741
        %v2743 = vmul.f32 %v2707, 1.442695
        %v2744 = vpow.pop %v2743
        %v2745 = vmul.f32 %v2708, 1.442695
        %v2746 = vpow.pop %v2745
        %v2747 = vmul.f32 %v2709, 1.442695
        %v2748 = vpow.pop %v2747
        %v2749 = vmul.f32 %v2710, 1.442695
        %v2750 = vpow.pop %v2749
        %v2751 = vmul.f32 %v2711, 1.442695
        %v2752 = vpow.pop %v2751
        %v2753 = vmul.f32 %v2712, 1.442695
        %v2754 = vpow.pop %v2753
        %v2755 = vmul.f32 %v2713, 1.442695
        %v2756 = vpow.pop %v2755
        %v2757 = vmul.f32 %v2714, 1.442695
        %v2758 = vpow.pop %v2757
        %v2759 = vmul.f32 %v2715, 1.442695
        %v2760 = vpow.pop %v2759
        %v2761 = vmul.f32 %v2716, 1.442695
        %v2762 = vpow.pop %v2761
        %v2763 = vmul.f32 %v2717, 1.442695
        %v2764 = vpow.pop %v2763
        %v2765 = vmul.f32 %v2718, 1.442695
        %v2766 = vpow.pop %v2765
        %v2767 = vmul.f32 %v2719, 1.442695
        %v2768 = vpow.pop %v2767
        %v2769 = vmul.f32 %v2720, 1.442695
        %v2770 = vpow.pop %v2769
        %v2771 = vmul.f32 %v2721, 1.442695
        %v2772 = vpow.pop %v2771
        %v2773 = vmul.f32 %v2722, 1.442695
        %v2774 = vpow.pop %v2773
        %v2775 = vmul.f32 %v2723, 1.442695
        %v2776 = vpow.pop %v2775
        %v2777 = vmul.f32 %v2724, 1.442695
        %v2778 = vpow.pop %v2777
        %v2779 = vmul.f32 %v2725, 1.442695
        %v2780 = vpow.pop %v2779
        %v2781 = vmul.f32 %v2726, 1.442695
        %v2782 = vpow.pop %v2781
        %v2783 = vmul.f32 %v2727, 1.442695
        %v2784 = vpow.pop %v2783
        %v2785 = vmul.f32 %v2728, 1.442695
        %v2786 = vpow.pop %v2785
        %v2787 = vmul.f32 %v2729, 1.442695
        %v2788 = vpow.pop %v2787
        %v2789 = vmul.f32 %v2730, 1.442695
        %v2790 = vpow.pop %v2789
        %v2791 = vmul.f32 %v2731, 1.442695
        %v2792 = vpow.pop %v2791
        %v2793 = vmul.f32 %v2732, 1.442695
        %v2794 = vpow.pop %v2793
        %v2795 = vmul.f32 %v2733, 1.442695
        %v2796 = vpow.pop %v2795
        %v2797 = vmul.f32 %v2734, 1.442695
        %v2798 = vpow.pop %v2797
        %v2799 = vadd.f32 %v2736, 1.0
        %v2800 = vadd.f32 %v2738, 1.0
        %v2801 = vadd.f32 %v2740, 1.0
        %v2802 = vadd.f32 %v2742, 1.0
        %v2803 = vadd.f32 %v2744, 1.0
        %v2804 = vadd.f32 %v2746, 1.0
        %v2805 = vadd.f32 %v2748, 1.0
        %v2806 = vadd.f32 %v2750, 1.0
        %v2807 = vadd.f32 %v2752, 1.0
        %v2808 = vadd.f32 %v2754, 1.0
        %v2809 = vadd.f32 %v2756, 1.0
        %v2810 = vadd.f32 %v2758, 1.0
        %v2811 = vadd.f32 %v2760, 1.0
        %v2812 = vadd.f32 %v2762, 1.0
        %v2813 = vadd.f32 %v2764, 1.0
        %v2814 = vadd.f32 %v2766, 1.0
        %v2815 = vadd.f32 %v2768, 1.0
        %v2816 = vadd.f32 %v2770, 1.0
        %v2817 = vadd.f32 %v2772, 1.0
        %v2818 = vadd.f32 %v2774, 1.0
        %v2819 = vadd.f32 %v2776, 1.0
        %v2820 = vadd.f32 %v2778, 1.0
        %v2821 = vadd.f32 %v2780, 1.0
        %v2822 = vadd.f32 %v2782, 1.0
        %v2823 = vadd.f32 %v2784, 1.0
        %v2824 = vadd.f32 %v2786, 1.0
        %v2825 = vadd.f32 %v2788, 1.0
        %v2826 = vadd.f32 %v2790, 1.0
        %v2827 = vadd.f32 %v2792, 1.0
        %v2828 = vadd.f32 %v2794, 1.0
        %v2829 = vadd.f32 %v2796, 1.0
        %v2830 = vadd.f32 %v2798, 1.0
        %v2831 = vrcp.pop %v2799
        %v2832 = vmul.f32 1.0, %v2831
        %v2833 = vrcp.pop %v2800
        %v2834 = vmul.f32 1.0, %v2833
        %v2835 = vrcp.pop %v2801
        %v2836 = vmul.f32 1.0, %v2835
        %v2837 = vrcp.pop %v2802
        %v2838 = vmul.f32 1.0, %v2837
        %v2839 = vrcp.pop %v2803
        %v2840 = vmul.f32 1.0, %v2839
        %v2841 = vrcp.pop %v2804
        %v2842 = vmul.f32 1.0, %v2841
        %v2843 = vrcp.pop %v2805
        %v2844 = vmul.f32 1.0, %v2843
        %v2845 = vrcp.pop %v2806
        %v2846 = vmul.f32 1.0, %v2845
        %v2847 = vrcp.pop %v2807
        %v2848 = vmul.f32 1.0, %v2847
        %v2849 = vrcp.pop %v2808
        %v2850 = vmul.f32 1.0, %v2849
        %v2851 = vrcp.pop %v2809
        %v2852 = vmul.f32 1.0, %v2851
        %v2853 = vrcp.pop %v2810
        %v2854 = vmul.f32 1.0, %v2853
        %v2855 = vrcp.pop %v2811
        %v2856 = vmul.f32 1.0, %v2855
        %v2857 = vrcp.pop %v2812
        %v2858 = vmul.f32 1.0, %v2857
        %v2859 = vrcp.pop %v2813
        %v2860 = vmul.f32 1.0, %v2859
        %v2861 = vrcp.pop %v2814
        %v2862 = vmul.f32 1.0, %v2861
        %v2863 = vrcp.pop %v2815
        %v2864 = vmul.f32 1.0, %v2863
        %v2865 = vrcp.pop %v2816
        %v2866 = vmul.f32 1.0, %v2865
        %v2867 = vrcp.pop %v2817
        %v2868 = vmul.f32 1.0, %v2867
        %v2869 = vrcp.pop %v2818
        %v2870 = vmul.f32 1.0, %v2869
        %v2871 = vrcp.pop %v2819
        %v2872 = vmul.f32 1.0, %v2871
        %v2873 = vrcp.pop %v2820
        %v2874 = vmul.f32 1.0, %v2873
        %v2875 = vrcp.pop %v2821
        %v2876 = vmul.f32 1.0, %v2875
        %v2877 = vrcp.pop %v2822
        %v2878 = vmul.f32 1.0, %v2877
        %v2879 = vrcp.pop %v2823
        %v2880 = vmul.f32 1.0, %v2879
        %v2881 = vrcp.pop %v2824
        %v2882 = vmul.f32 1.0, %v2881
        %v2883 = vrcp.pop %v2825
        %v2884 = vmul.f32 1.0, %v2883
        %v2885 = vrcp.pop %v2826
        %v2886 = vmul.f32 1.0, %v2885
        %v2887 = vrcp.pop %v2827
        %v2888 = vmul.f32 1.0, %v2887
        %v2889 = vrcp.pop %v2828
        %v2890 = vmul.f32 1.0, %v2889
        %v2891 = vrcp.pop %v2829
        %v2892 = vmul.f32 1.0, %v2891
        %v2893 = vrcp.pop %v2830
        %v2894 = vmul.f32 1.0, %v2893
        %v2895 = vunpack.c.l.bf16 %v2349
        %v2896 = vunpack.c.l.bf16 %v2350
        %v2897 = vunpack.c.l.bf16 %v2351
        %v2898 = vunpack.c.l.bf16 %v2352
        %v2899 = vunpack.c.l.bf16 %v2353
        %v2900 = vunpack.c.l.bf16 %v2354
        %v2901 = vunpack.c.l.bf16 %v2355
        %v2902 = vunpack.c.l.bf16 %v2356
        %v2903 = vunpack.c.l.bf16 %v2357
        %v2904 = vunpack.c.l.bf16 %v2358
        %v2905 = vunpack.c.l.bf16 %v2359
        %v2906 = vunpack.c.l.bf16 %v2360
        %v2907 = vunpack.c.l.bf16 %v2361
        %v2908 = vunpack.c.l.bf16 %v2362
        %v2909 = vunpack.c.l.bf16 %v2363
        %v2910 = vunpack.c.l.bf16 %v2364
        %v2911 = vunpack.c.l.bf16 %v2365
        %v2912 = vunpack.c.l.bf16 %v2366
        %v2913 = vunpack.c.l.bf16 %v2367
        %v2914 = vunpack.c.l.bf16 %v2368
        %v2915 = vunpack.c.l.bf16 %v2369
        %v2916 = vunpack.c.l.bf16 %v2370
        %v2917 = vunpack.c.l.bf16 %v2371
        %v2918 = vunpack.c.l.bf16 %v2372
        %v2919 = vunpack.c.l.bf16 %v2373
        %v2920 = vunpack.c.l.bf16 %v2374
        %v2921 = vunpack.c.l.bf16 %v2375
        %v2922 = vunpack.c.l.bf16 %v2376
        %v2923 = vunpack.c.l.bf16 %v2377
        %v2924 = vunpack.c.l.bf16 %v2378
        %v2925 = vunpack.c.l.bf16 %v2379
        %v2926 = vunpack.c.l.bf16 %v2380
        %v2927 = vmul.f32 %v2895, %v2832
        %v2928 = vmul.f32 %v2896, %v2834
        %v2929 = vmul.f32 %v2897, %v2836
        %v2930 = vmul.f32 %v2898, %v2838
        %v2931 = vmul.f32 %v2899, %v2840
        %v2932 = vmul.f32 %v2900, %v2842
        %v2933 = vmul.f32 %v2901, %v2844
        %v2934 = vmul.f32 %v2902, %v2846
        %v2935 = vmul.f32 %v2903, %v2848
        %v2936 = vmul.f32 %v2904, %v2850
        %v2937 = vmul.f32 %v2905, %v2852
        %v2938 = vmul.f32 %v2906, %v2854
        %v2939 = vmul.f32 %v2907, %v2856
        %v2940 = vmul.f32 %v2908, %v2858
        %v2941 = vmul.f32 %v2909, %v2860
        %v2942 = vmul.f32 %v2910, %v2862
        %v2943 = vmul.f32 %v2911, %v2864
        %v2944 = vmul.f32 %v2912, %v2866
        %v2945 = vmul.f32 %v2913, %v2868
        %v2946 = vmul.f32 %v2914, %v2870
        %v2947 = vmul.f32 %v2915, %v2872
        %v2948 = vmul.f32 %v2916, %v2874
        %v2949 = vmul.f32 %v2917, %v2876
        %v2950 = vmul.f32 %v2918, %v2878
        %v2951 = vmul.f32 %v2919, %v2880
        %v2952 = vmul.f32 %v2920, %v2882
        %v2953 = vmul.f32 %v2921, %v2884
        %v2954 = vmul.f32 %v2922, %v2886
        %v2955 = vmul.f32 %v2923, %v2888
        %v2956 = vmul.f32 %v2924, %v2890
        %v2957 = vmul.f32 %v2925, %v2892
        %v2958 = vmul.f32 %v2926, %v2894
        %v2959 = vpack.c.bf16 %v2928, %v2927
        %v2960 = vpack.c.bf16 %v2930, %v2929
        %v2961 = vpack.c.bf16 %v2932, %v2931
        %v2962 = vpack.c.bf16 %v2934, %v2933
        %v2963 = vpack.c.bf16 %v2936, %v2935
        %v2964 = vpack.c.bf16 %v2938, %v2937
        %v2965 = vpack.c.bf16 %v2940, %v2939
        %v2966 = vpack.c.bf16 %v2942, %v2941
        %v2967 = vpack.c.bf16 %v2944, %v2943
        %v2968 = vpack.c.bf16 %v2946, %v2945
        %v2969 = vpack.c.bf16 %v2948, %v2947
        %v2970 = vpack.c.bf16 %v2950, %v2949
        %v2971 = vpack.c.bf16 %v2952, %v2951
        %v2972 = vpack.c.bf16 %v2954, %v2953
        %v2973 = vpack.c.bf16 %v2956, %v2955
        %v2974 = vpack.c.bf16 %v2958, %v2957
        %v2975 = vld [vmem:[%s10] sm:$0xf]
        %v2976 = vld [vmem:[%s10 + $0x4] sm:$0xf]
        %v2977 = vld [vmem:[%s10 + $0x8] sm:$0xf]
        %v2978 = vld [vmem:[%s10 + $0xc] sm:$0xf]
        %v2979 = vld [vmem:[%s10 + $0x10] sm:$0xf]
        %v2980 = vld [vmem:[%s10 + $0x14] sm:$0xf]
        %v2981 = vld [vmem:[%s10 + $0x18] sm:$0xf]
        %v2982 = vld [vmem:[%s10 + $0x1c] sm:$0xf]
        %v2991 = vunpack.c.l.b16 %v2975
        %v2992 = vunpack.c.l.b16 %v2976
        %v2993 = vunpack.c.l.b16 %v2977
        %v2994 = vunpack.c.l.b16 %v2978
        %v2995 = vunpack.c.l.b16 %v2979
        %v2996 = vunpack.c.l.b16 %v2980
        %v2997 = vunpack.c.l.b16 %v2981
        %v2998 = vunpack.c.l.b16 %v2982
        %v2999 = vpack.c.b16 %v2992, %v2991
        %v3000 = vpack.c.b16 %v2994, %v2993
        %v3001 = vpack.c.b16 %v2996, %v2995
        %v3002 = vpack.c.b16 %v2998, %v2997
        %v3008 = vsel %vm2493, %v2959, 0
        %v3011 = vsel %vm2493, %v2960, 0
        %v3014 = vsel %vm2493, %v2961, 0
        %v3017 = vsel %vm2493, %v2962, 0
        %v3020 = vsel %vm2493, %v2963, 0
        %v3023 = vsel %vm2493, %v2964, 0
        %v3026 = vsel %vm2493, %v2965, 0
        %v3029 = vsel %vm2493, %v2966, 0
        %v3032 = vsel %vm2493, %v2967, 0
        %v3035 = vsel %vm2493, %v2968, 0
        %v3038 = vsel %vm2493, %v2969, 0
        %v3041 = vsel %vm2493, %v2970, 0
        %v3044 = vsel %vm2493, %v2971, 0
        %v3047 = vsel %vm2493, %v2972, 0
        %v3050 = vsel %vm2493, %v2973, 0
        %v3053 = vsel %vm2493, %v2974, 0
        %3055 = vmatprep.subr.bf16.mxu0 0
        %3056 = vmatpush1.bf16.msra.mxu0 0
        %3057 = vmatprep.subr.bf16.mxu0 0
        %3058 = vmatpush1.bf16.msra.mxu0 0
        %3059 = vmatprep.subr.bf16.mxu0 0
        %3060 = vmatpush1.bf16.msra.mxu0 0
        %3061 = vmatprep.subr.bf16.mxu0 0
        %3062 = vmatpush1.bf16.msra.mxu0 0
        %3063 = vmatprep.subr.bf16.mxu0 0
        %3064 = vmatpush1.bf16.msra.mxu0 %v3002
        %3065 = vmatprep.subr.bf16.mxu0 0
        %3066 = vmatpush1.bf16.msra.mxu0 %v3001
        %3067 = vmatprep.subr.bf16.mxu0 0
        %3068 = vmatpush1.bf16.msra.mxu0 %v3000
        %3069 = vmatprep.subr.bf16.mxu0 0
        %3070 = vmatpush1.bf16.msra.mxu0 %v2999
        %3071 = vmatprep.subr.bf16.mxu0 0
        %3072 = vmatpush2.bf16.msra.mxu0 0
        %3073 = vmatprep.subr.bf16.mxu0 0
        %3074 = vmatpush2.bf16.msra.mxu0 0
        %3075 = vmatprep.subr.bf16.mxu0 0
        %3076 = vmatpush2.bf16.msra.mxu0 0
        %3077 = vmatprep.subr.bf16.mxu0 0
        %3078 = vmatpush2.bf16.msra.mxu0 0
        %3079 = vmatprep.subr.bf16.mxu0 0
        %3080 = vmatpush2.bf16.msra.mxu0 0
        %3081 = vmatprep.subr.bf16.mxu0 0
        %3082 = vmatpush2.bf16.msra.mxu0 0
        %3083 = vmatprep.subr.bf16.mxu0 0
        %3084 = vmatpush2.bf16.msra.mxu0 0
        %3085 = vmatprep.subr.bf16.mxu0 0
        %3086 = vmatpush2.bf16.msra.mxu0 0
        %3087 = vmatprep.mubr.bf16.mxu0 0
        %3088 = vmatmul.mubr.bf16.gmra.mxu0 %v3008
        %v3089 = vpop.f32.mrf.mxu0
        %v3090 = vadd.f32 0.0, %v3089
        %v3091 = vpop.f32.mrf.mxu0
        %v3092 = vpop.f32.mrf.mxu0
        %v3093 = vadd.f32 0.0, %v3092
        %v3094 = vpop.f32.mrf.mxu0
        %3095 = vmatprep.mubr.bf16.mxu0 0
        %3096 = vmatmul.mubr.bf16.gmra.mxu0 %v3011
        %v3097 = vpop.f32.mrf.mxu0
        %v3098 = vadd.f32 0.0, %v3097
        %v3099 = vpop.f32.mrf.mxu0
        %v3100 = vpop.f32.mrf.mxu0
        %v3101 = vadd.f32 0.0, %v3100
        %v3102 = vpop.f32.mrf.mxu0
        %3103 = vmatprep.mubr.bf16.mxu0 0
        %3104 = vmatmul.mubr.bf16.gmra.mxu0 %v3014
        %v3105 = vpop.f32.mrf.mxu0
        %v3106 = vadd.f32 0.0, %v3105
        %v3107 = vpop.f32.mrf.mxu0
        %v3108 = vpop.f32.mrf.mxu0
        %v3109 = vadd.f32 0.0, %v3108
        %v3110 = vpop.f32.mrf.mxu0
        %3111 = vmatprep.mubr.bf16.mxu0 0
        %3112 = vmatmul.mubr.bf16.gmra.mxu0 %v3017
        %v3113 = vpop.f32.mrf.mxu0
        %v3114 = vadd.f32 0.0, %v3113
        %v3115 = vpop.f32.mrf.mxu0
        %v3116 = vpop.f32.mrf.mxu0
        %v3117 = vadd.f32 0.0, %v3116
        %v3118 = vpop.f32.mrf.mxu0
        %3119 = vmatprep.mubr.bf16.mxu0 0
        %3120 = vmatmul.mubr.bf16.gmra.mxu0 %v3020
        %v3121 = vpop.f32.mrf.mxu0
        %v3122 = vadd.f32 0.0, %v3121
        %v3123 = vpop.f32.mrf.mxu0
        %v3124 = vpop.f32.mrf.mxu0
        %v3125 = vadd.f32 0.0, %v3124
        %v3126 = vpop.f32.mrf.mxu0
        %3127 = vmatprep.mubr.bf16.mxu0 0
        %3128 = vmatmul.mubr.bf16.gmra.mxu0 %v3023
        %v3129 = vpop.f32.mrf.mxu0
        %v3130 = vadd.f32 0.0, %v3129
        %v3131 = vpop.f32.mrf.mxu0
        %v3132 = vpop.f32.mrf.mxu0
        %v3133 = vadd.f32 0.0, %v3132
        %v3134 = vpop.f32.mrf.mxu0
        %3135 = vmatprep.mubr.bf16.mxu0 0
        %3136 = vmatmul.mubr.bf16.gmra.mxu0 %v3026
        %v3137 = vpop.f32.mrf.mxu0
        %v3138 = vadd.f32 0.0, %v3137
        %v3139 = vpop.f32.mrf.mxu0
        %v3140 = vpop.f32.mrf.mxu0
        %v3141 = vadd.f32 0.0, %v3140
        %v3142 = vpop.f32.mrf.mxu0
        %3143 = vmatprep.mubr.bf16.mxu0 0
        %3144 = vmatmul.mubr.bf16.gmra.mxu0 %v3029
        %v3145 = vpop.f32.mrf.mxu0
        %v3146 = vadd.f32 0.0, %v3145
        %v3147 = vpop.f32.mrf.mxu0
        %v3148 = vpop.f32.mrf.mxu0
        %v3149 = vadd.f32 0.0, %v3148
        %v3150 = vpop.f32.mrf.mxu0
        %3151 = vmatprep.mubr.bf16.mxu0 0
        %3152 = vmatmul.mubr.bf16.gmra.mxu0 %v3032
        %v3153 = vpop.f32.mrf.mxu0
        %v3154 = vadd.f32 0.0, %v3153
        %v3155 = vpop.f32.mrf.mxu0
        %v3156 = vpop.f32.mrf.mxu0
        %v3157 = vadd.f32 0.0, %v3156
        %v3158 = vpop.f32.mrf.mxu0
        %3159 = vmatprep.mubr.bf16.mxu0 0
        %3160 = vmatmul.mubr.bf16.gmra.mxu0 %v3035
        %v3161 = vpop.f32.mrf.mxu0
        %v3162 = vadd.f32 0.0, %v3161
        %v3163 = vpop.f32.mrf.mxu0
        %v3164 = vpop.f32.mrf.mxu0
        %v3165 = vadd.f32 0.0, %v3164
        %v3166 = vpop.f32.mrf.mxu0
        %3167 = vmatprep.mubr.bf16.mxu0 0
        %3168 = vmatmul.mubr.bf16.gmra.mxu0 %v3038
        %v3169 = vpop.f32.mrf.mxu0
        %v3170 = vadd.f32 0.0, %v3169
        %v3171 = vpop.f32.mrf.mxu0
        %v3172 = vpop.f32.mrf.mxu0
        %v3173 = vadd.f32 0.0, %v3172
        %v3174 = vpop.f32.mrf.mxu0
        %3175 = vmatprep.mubr.bf16.mxu0 0
        %3176 = vmatmul.mubr.bf16.gmra.mxu0 %v3041
        %v3177 = vpop.f32.mrf.mxu0
        %v3178 = vadd.f32 0.0, %v3177
        %v3179 = vpop.f32.mrf.mxu0
        %v3180 = vpop.f32.mrf.mxu0
        %v3181 = vadd.f32 0.0, %v3180
        %v3182 = vpop.f32.mrf.mxu0
        %3183 = vmatprep.mubr.bf16.mxu0 0
        %3184 = vmatmul.mubr.bf16.gmra.mxu0 %v3044
        %v3185 = vpop.f32.mrf.mxu0
        %v3186 = vadd.f32 0.0, %v3185
        %v3187 = vpop.f32.mrf.mxu0
        %v3188 = vpop.f32.mrf.mxu0
        %v3189 = vadd.f32 0.0, %v3188
        %v3190 = vpop.f32.mrf.mxu0
        %3191 = vmatprep.mubr.bf16.mxu0 0
        %3192 = vmatmul.mubr.bf16.gmra.mxu0 %v3047
        %v3193 = vpop.f32.mrf.mxu0
        %v3194 = vadd.f32 0.0, %v3193
        %v3195 = vpop.f32.mrf.mxu0
        %v3196 = vpop.f32.mrf.mxu0
        %v3197 = vadd.f32 0.0, %v3196
        %v3198 = vpop.f32.mrf.mxu0
        %3199 = vmatprep.mubr.bf16.mxu0 0
        %3200 = vmatmul.mubr.bf16.gmra.mxu0 %v3050
        %v3201 = vpop.f32.mrf.mxu0
        %v3202 = vadd.f32 0.0, %v3201
        %v3203 = vpop.f32.mrf.mxu0
        %v3204 = vpop.f32.mrf.mxu0
        %v3205 = vadd.f32 0.0, %v3204
        %v3206 = vpop.f32.mrf.mxu0
        %3207 = vmatprep.mubr.bf16.mxu0 0
        %3208 = vmatmul.mubr.bf16.gmra.mxu0 %v3053
        %v3209 = vpop.f32.mrf.mxu0
        %v3210 = vadd.f32 0.0, %v3209
        %v3211 = vpop.f32.mrf.mxu0
        %v3212 = vpop.f32.mrf.mxu0
        %v3213 = vadd.f32 0.0, %v3212
        %v3214 = vpop.f32.mrf.mxu0
        %3215 = vdwg.mxu0
        %vm3216 = vcmp.lt.f32.partialorder %v477, 1.5
        %vm3217 = vcmp.lt.f32.partialorder %v478, 1.5
        %vm3218 = vcmp.lt.f32.partialorder %v479, 1.5
        %vm3219 = vcmp.lt.f32.partialorder %v480, 1.5
        %vm3220 = vcmp.lt.f32.partialorder %v481, 1.5
        %vm3221 = vcmp.lt.f32.partialorder %v482, 1.5
        %vm3222 = vcmp.lt.f32.partialorder %v483, 1.5
        %vm3223 = vcmp.lt.f32.partialorder %v484, 1.5
        %vm3224 = vcmp.lt.f32.partialorder %v485, 1.5
        %vm3225 = vcmp.lt.f32.partialorder %v486, 1.5
        %vm3226 = vcmp.lt.f32.partialorder %v487, 1.5
        %vm3227 = vcmp.lt.f32.partialorder %v488, 1.5
        %vm3228 = vcmp.lt.f32.partialorder %v489, 1.5
        %vm3229 = vcmp.lt.f32.partialorder %v490, 1.5
        %vm3230 = vcmp.lt.f32.partialorder %v491, 1.5
        %vm3231 = vcmp.lt.f32.partialorder %v492, 1.5
        %vm3232 = vcmp.lt.f32.partialorder %v493, 1.5
        %vm3233 = vcmp.lt.f32.partialorder %v494, 1.5
        %vm3234 = vcmp.lt.f32.partialorder %v495, 1.5
        %vm3235 = vcmp.lt.f32.partialorder %v496, 1.5
        %vm3236 = vcmp.lt.f32.partialorder %v497, 1.5
        %vm3237 = vcmp.lt.f32.partialorder %v498, 1.5
        %vm3238 = vcmp.lt.f32.partialorder %v499, 1.5
        %vm3239 = vcmp.lt.f32.partialorder %v500, 1.5
        %vm3240 = vcmp.lt.f32.partialorder %v501, 1.5
        %vm3241 = vcmp.lt.f32.partialorder %v502, 1.5
        %vm3242 = vcmp.lt.f32.partialorder %v503, 1.5
        %vm3243 = vcmp.lt.f32.partialorder %v504, 1.5
        %vm3244 = vcmp.lt.f32.partialorder %v505, 1.5
        %vm3245 = vcmp.lt.f32.partialorder %v506, 1.5
        %vm3246 = vcmp.lt.f32.partialorder %v507, 1.5
        %vm3247 = vcmp.lt.f32.partialorder %v508, 1.5
        %v3248 = vsel %vm3216, 1, 0
        %v3249 = vsel %vm3217, 1, 0
        %v3250 = vsel %vm3218, 1, 0
        %v3251 = vsel %vm3219, 1, 0
        %v3252 = vsel %vm3220, 1, 0
        %v3253 = vsel %vm3221, 1, 0
        %v3254 = vsel %vm3222, 1, 0
        %v3255 = vsel %vm3223, 1, 0
        %v3256 = vsel %vm3224, 1, 0
        %v3257 = vsel %vm3225, 1, 0
        %v3258 = vsel %vm3226, 1, 0
        %v3259 = vsel %vm3227, 1, 0
        %v3260 = vsel %vm3228, 1, 0
        %v3261 = vsel %vm3229, 1, 0
        %v3262 = vsel %vm3230, 1, 0
        %v3263 = vsel %vm3231, 1, 0
        %v3264 = vsel %vm3232, 1, 0
        %v3265 = vsel %vm3233, 1, 0
        %v3266 = vsel %vm3234, 1, 0
        %v3267 = vsel %vm3235, 1, 0
        %v3268 = vsel %vm3236, 1, 0
        %v3269 = vsel %vm3237, 1, 0
        %v3270 = vsel %vm3238, 1, 0
        %v3271 = vsel %vm3239, 1, 0
        %v3272 = vsel %vm3240, 1, 0
        %v3273 = vsel %vm3241, 1, 0
        %v3274 = vsel %vm3242, 1, 0
        %v3275 = vsel %vm3243, 1, 0
        %v3276 = vsel %vm3244, 1, 0
        %v3277 = vsel %vm3245, 1, 0
        %v3278 = vsel %vm3246, 1, 0
        %v3279 = vsel %vm3247, 1, 0
        %v3280 = vcvt.s32.f32 %v3248
        %v3281 = vcvt.s32.f32 %v3249
        %v3282 = vcvt.s32.f32 %v3250
        %v3283 = vcvt.s32.f32 %v3251
        %v3284 = vcvt.s32.f32 %v3252
        %v3285 = vcvt.s32.f32 %v3253
        %v3286 = vcvt.s32.f32 %v3254
        %v3287 = vcvt.s32.f32 %v3255
        %v3288 = vcvt.s32.f32 %v3256
        %v3289 = vcvt.s32.f32 %v3257
        %v3290 = vcvt.s32.f32 %v3258
        %v3291 = vcvt.s32.f32 %v3259
        %v3292 = vcvt.s32.f32 %v3260
        %v3293 = vcvt.s32.f32 %v3261
        %v3294 = vcvt.s32.f32 %v3262
        %v3295 = vcvt.s32.f32 %v3263
        %v3296 = vcvt.s32.f32 %v3264
        %v3297 = vcvt.s32.f32 %v3265
        %v3298 = vcvt.s32.f32 %v3266
        %v3299 = vcvt.s32.f32 %v3267
        %v3300 = vcvt.s32.f32 %v3268
        %v3301 = vcvt.s32.f32 %v3269
        %v3302 = vcvt.s32.f32 %v3270
        %v3303 = vcvt.s32.f32 %v3271
        %v3304 = vcvt.s32.f32 %v3272
        %v3305 = vcvt.s32.f32 %v3273
        %v3306 = vcvt.s32.f32 %v3274
        %v3307 = vcvt.s32.f32 %v3275
        %v3308 = vcvt.s32.f32 %v3276
        %v3309 = vcvt.s32.f32 %v3277
        %v3310 = vcvt.s32.f32 %v3278
        %v3311 = vcvt.s32.f32 %v3279
        %v3312 = vmul.f32 %v2058, %v2281
        %v3313 = vmul.f32 %v2060, %v2282
        %v3314 = vmul.f32 %v2062, %v2283
        %v3315 = vmul.f32 %v2064, %v2284
        %v3316 = vmul.f32 %v2066, %v2285
        %v3317 = vmul.f32 %v2068, %v2286
        %v3318 = vmul.f32 %v2070, %v2287
        %v3319 = vmul.f32 %v2072, %v2288
        %v3320 = vmul.f32 %v2074, %v2289
        %v3321 = vmul.f32 %v2076, %v2290
        %v3322 = vmul.f32 %v2078, %v2291
        %v3323 = vmul.f32 %v2080, %v2292
        %v3324 = vmul.f32 %v2082, %v2293
        %v3325 = vmul.f32 %v2084, %v2294
        %v3326 = vmul.f32 %v2086, %v2295
        %v3327 = vmul.f32 %v2088, %v2296
        %v3328 = vmul.f32 %v2090, %v2297
        %v3329 = vmul.f32 %v2092, %v2298
        %v3330 = vmul.f32 %v2094, %v2299
        %v3331 = vmul.f32 %v2096, %v2300
        %v3332 = vmul.f32 %v2098, %v2301
        %v3333 = vmul.f32 %v2100, %v2302
        %v3334 = vmul.f32 %v2102, %v2303
        %v3335 = vmul.f32 %v2104, %v2304
        %v3336 = vmul.f32 %v2106, %v2305
        %v3337 = vmul.f32 %v2108, %v2306
        %v3338 = vmul.f32 %v2110, %v2307
        %v3339 = vmul.f32 %v2112, %v2308
        %v3340 = vmul.f32 %v2114, %v2309
        %v3341 = vmul.f32 %v2116, %v2310
        %v3342 = vmul.f32 %v2118, %v2311
        %v3343 = vmul.f32 %v2120, %v2312
        %v3376 = vunpack.c.l.b16 %v2313
        %v3377 = vunpack.c.l.b16 %v2314
        %v3378 = vunpack.c.l.b16 %v2315
        %v3379 = vunpack.c.l.b16 %v2316
        %v3380 = vunpack.c.l.b16 %v2317
        %v3381 = vunpack.c.l.b16 %v2318
        %v3382 = vunpack.c.l.b16 %v2319
        %v3383 = vunpack.c.l.b16 %v2320
        %v3384 = vunpack.c.l.b16 %v2321
        %v3385 = vunpack.c.l.b16 %v2322
        %v3386 = vunpack.c.l.b16 %v2323
        %v3387 = vunpack.c.l.b16 %v2324
        %v3388 = vunpack.c.l.b16 %v2325
        %v3389 = vunpack.c.l.b16 %v2326
        %v3390 = vunpack.c.l.b16 %v2327
        %v3391 = vunpack.c.l.b16 %v2328
        %v3392 = vunpack.c.l.b16 %v2329
        %v3393 = vunpack.c.l.b16 %v2330
        %v3394 = vunpack.c.l.b16 %v2331
        %v3395 = vunpack.c.l.b16 %v2332
        %v3396 = vunpack.c.l.b16 %v2333
        %v3397 = vunpack.c.l.b16 %v2334
        %v3398 = vunpack.c.l.b16 %v2335
        %v3399 = vunpack.c.l.b16 %v2336
        %v3400 = vunpack.c.l.b16 %v2337
        %v3401 = vunpack.c.l.b16 %v2338
        %v3402 = vunpack.c.l.b16 %v2339
        %v3403 = vunpack.c.l.b16 %v2340
        %v3404 = vunpack.c.l.b16 %v2341
        %v3405 = vunpack.c.l.b16 %v2342
        %v3406 = vunpack.c.l.b16 %v2343
        %v3407 = vunpack.c.l.b16 %v2344
        %v3408 = vpack.c.b16 %v3377, %v3376
        %v3409 = vpack.c.b16 %v3379, %v3378
        %v3410 = vpack.c.b16 %v3381, %v3380
        %v3411 = vpack.c.b16 %v3383, %v3382
        %v3412 = vpack.c.b16 %v3385, %v3384
        %v3413 = vpack.c.b16 %v3387, %v3386
        %v3414 = vpack.c.b16 %v3389, %v3388
        %v3415 = vpack.c.b16 %v3391, %v3390
        %v3416 = vpack.c.b16 %v3393, %v3392
        %v3417 = vpack.c.b16 %v3395, %v3394
        %v3418 = vpack.c.b16 %v3397, %v3396
        %v3419 = vpack.c.b16 %v3399, %v3398
        %v3420 = vpack.c.b16 %v3401, %v3400
        %v3421 = vpack.c.b16 %v3403, %v3402
        %v3422 = vpack.c.b16 %v3405, %v3404
        %v3423 = vpack.c.b16 %v3407, %v3406
        %v3428 = vunpack.c.l.b16 %v2345
        %v3429 = vunpack.c.l.b16 %v2346
        %v3430 = vunpack.c.l.b16 %v2347
        %v3431 = vunpack.c.l.b16 %v2348
        %v3432 = vpack.c.b16 %v3429, %v3428
        %v3433 = vpack.c.b16 %v3431, %v3430
        %v3437 = vsel %vm1017, %v3408, 0
        %v3440 = vsel %vm1017, %v3409, 0
        %v3443 = vsel %vm1017, %v3410, 0
        %v3446 = vsel %vm1017, %v3411, 0
        %v3449 = vsel %vm1017, %v3412, 0
        %v3452 = vsel %vm1017, %v3413, 0
        %v3455 = vsel %vm1017, %v3414, 0
        %v3458 = vsel %vm1017, %v3415, 0
        %v3461 = vsel %vm1017, %v3416, 0
        %v3464 = vsel %vm1017, %v3417, 0
        %v3467 = vsel %vm1017, %v3418, 0
        %v3470 = vsel %vm1017, %v3419, 0
        %v3473 = vsel %vm1017, %v3420, 0
        %v3476 = vsel %vm1017, %v3421, 0
        %v3479 = vsel %vm1017, %v3422, 0
        %v3482 = vsel %vm1017, %v3423, 0
        %3484 = vmatprep.subr.bf16.mxu0 0
        %3485 = vmatpush1.bf16.msra.mxu0 0
        %3486 = vmatprep.subr.bf16.mxu0 0
        %3487 = vmatpush1.bf16.msra.mxu0 0
        %3488 = vmatprep.subr.bf16.mxu0 0
        %3489 = vmatpush1.bf16.msra.mxu0 0
        %3490 = vmatprep.subr.bf16.mxu0 0
        %3491 = vmatpush1.bf16.msra.mxu0 0
        %3492 = vmatprep.subr.bf16.mxu0 0
        %3493 = vmatpush1.bf16.msra.mxu0 0
        %3494 = vmatprep.subr.bf16.mxu0 0
        %3495 = vmatpush1.bf16.msra.mxu0 0
        %3496 = vmatprep.subr.bf16.mxu0 0
        %3497 = vmatpush1.bf16.msra.mxu0 %v3433
        %3498 = vmatprep.subr.bf16.mxu0 0
        %3499 = vmatpush1.bf16.msra.mxu0 %v3432
        %3500 = vmatprep.subr.bf16.mxu0 0
        %3501 = vmatpush2.bf16.msra.mxu0 0
        %3502 = vmatprep.subr.bf16.mxu0 0
        %3503 = vmatpush2.bf16.msra.mxu0 0
        %3504 = vmatprep.subr.bf16.mxu0 0
        %3505 = vmatpush2.bf16.msra.mxu0 0
        %3506 = vmatprep.subr.bf16.mxu0 0
        %3507 = vmatpush2.bf16.msra.mxu0 0
        %3508 = vmatprep.subr.bf16.mxu0 0
        %3509 = vmatpush2.bf16.msra.mxu0 0
        %3510 = vmatprep.subr.bf16.mxu0 0
        %3511 = vmatpush2.bf16.msra.mxu0 0
        %3512 = vmatprep.subr.bf16.mxu0 0
        %3513 = vmatpush2.bf16.msra.mxu0 0
        %3514 = vmatprep.subr.bf16.mxu0 0
        %3515 = vmatpush2.bf16.msra.mxu0 0
        %3516 = vmatprep.mubr.bf16.mxu0 0
        %3517 = vmatmul.mubr.bf16.gmra.mxu0 %v3437
        %v3518 = vpop.f32.mrf.mxu0
        %v3519 = vadd.f32 %v3090, %v3518
        %v3520 = vpop.f32.mrf.mxu0
        %v3521 = vpop.f32.mrf.mxu0
        %v3522 = vadd.f32 %v3093, %v3521
        %v3523 = vpop.f32.mrf.mxu0
        %3524 = vmatprep.mubr.bf16.mxu0 0
        %3525 = vmatmul.mubr.bf16.gmra.mxu0 %v3440
        %v3526 = vpop.f32.mrf.mxu0
        %v3527 = vadd.f32 %v3098, %v3526
        %v3528 = vpop.f32.mrf.mxu0
        %v3529 = vpop.f32.mrf.mxu0
        %v3530 = vadd.f32 %v3101, %v3529
        %v3531 = vpop.f32.mrf.mxu0
        %3532 = vmatprep.mubr.bf16.mxu0 0
        %3533 = vmatmul.mubr.bf16.gmra.mxu0 %v3443
        %v3534 = vpop.f32.mrf.mxu0
        %v3535 = vadd.f32 %v3106, %v3534
        %v3536 = vpop.f32.mrf.mxu0
        %v3537 = vpop.f32.mrf.mxu0
        %v3538 = vadd.f32 %v3109, %v3537
        %v3539 = vpop.f32.mrf.mxu0
        %3540 = vmatprep.mubr.bf16.mxu0 0
        %3541 = vmatmul.mubr.bf16.gmra.mxu0 %v3446
        %v3542 = vpop.f32.mrf.mxu0
        %v3543 = vadd.f32 %v3114, %v3542
        %v3544 = vpop.f32.mrf.mxu0
        %v3545 = vpop.f32.mrf.mxu0
        %v3546 = vadd.f32 %v3117, %v3545
        %v3547 = vpop.f32.mrf.mxu0
        %3548 = vmatprep.mubr.bf16.mxu0 0
        %3549 = vmatmul.mubr.bf16.gmra.mxu0 %v3449
        %v3550 = vpop.f32.mrf.mxu0
        %v3551 = vadd.f32 %v3122, %v3550
        %v3552 = vpop.f32.mrf.mxu0
        %v3553 = vpop.f32.mrf.mxu0
        %v3554 = vadd.f32 %v3125, %v3553
        %v3555 = vpop.f32.mrf.mxu0
        %3556 = vmatprep.mubr.bf16.mxu0 0
        %3557 = vmatmul.mubr.bf16.gmra.mxu0 %v3452
        %v3558 = vpop.f32.mrf.mxu0
        %v3559 = vadd.f32 %v3130, %v3558
        %v3560 = vpop.f32.mrf.mxu0
        %v3561 = vpop.f32.mrf.mxu0
        %v3562 = vadd.f32 %v3133, %v3561
        %v3563 = vpop.f32.mrf.mxu0
        %3564 = vmatprep.mubr.bf16.mxu0 0
        %3565 = vmatmul.mubr.bf16.gmra.mxu0 %v3455
        %v3566 = vpop.f32.mrf.mxu0
        %v3567 = vadd.f32 %v3138, %v3566
        %v3568 = vpop.f32.mrf.mxu0
        %v3569 = vpop.f32.mrf.mxu0
        %v3570 = vadd.f32 %v3141, %v3569
        %v3571 = vpop.f32.mrf.mxu0
        %3572 = vmatprep.mubr.bf16.mxu0 0
        %3573 = vmatmul.mubr.bf16.gmra.mxu0 %v3458
        %v3574 = vpop.f32.mrf.mxu0
        %v3575 = vadd.f32 %v3146, %v3574
        %v3576 = vpop.f32.mrf.mxu0
        %v3577 = vpop.f32.mrf.mxu0
        %v3578 = vadd.f32 %v3149, %v3577
        %v3579 = vpop.f32.mrf.mxu0
        %3580 = vmatprep.mubr.bf16.mxu0 0
        %3581 = vmatmul.mubr.bf16.gmra.mxu0 %v3461
        %v3582 = vpop.f32.mrf.mxu0
        %v3583 = vadd.f32 %v3154, %v3582
        %v3584 = vpop.f32.mrf.mxu0
        %v3585 = vpop.f32.mrf.mxu0
        %v3586 = vadd.f32 %v3157, %v3585
        %v3587 = vpop.f32.mrf.mxu0
        %3588 = vmatprep.mubr.bf16.mxu0 0
        %3589 = vmatmul.mubr.bf16.gmra.mxu0 %v3464
        %v3590 = vpop.f32.mrf.mxu0
        %v3591 = vadd.f32 %v3162, %v3590
        %v3592 = vpop.f32.mrf.mxu0
        %v3593 = vpop.f32.mrf.mxu0
        %v3594 = vadd.f32 %v3165, %v3593
        %v3595 = vpop.f32.mrf.mxu0
        %3596 = vmatprep.mubr.bf16.mxu0 0
        %3597 = vmatmul.mubr.bf16.gmra.mxu0 %v3467
        %v3598 = vpop.f32.mrf.mxu0
        %v3599 = vadd.f32 %v3170, %v3598
        %v3600 = vpop.f32.mrf.mxu0
        %v3601 = vpop.f32.mrf.mxu0
        %v3602 = vadd.f32 %v3173, %v3601
        %v3603 = vpop.f32.mrf.mxu0
        %3604 = vmatprep.mubr.bf16.mxu0 0
        %3605 = vmatmul.mubr.bf16.gmra.mxu0 %v3470
        %v3606 = vpop.f32.mrf.mxu0
        %v3607 = vadd.f32 %v3178, %v3606
        %v3608 = vpop.f32.mrf.mxu0
        %v3609 = vpop.f32.mrf.mxu0
        %v3610 = vadd.f32 %v3181, %v3609
        %v3611 = vpop.f32.mrf.mxu0
        %3612 = vmatprep.mubr.bf16.mxu0 0
        %3613 = vmatmul.mubr.bf16.gmra.mxu0 %v3473
        %v3614 = vpop.f32.mrf.mxu0
        %v3615 = vadd.f32 %v3186, %v3614
        %v3616 = vpop.f32.mrf.mxu0
        %v3617 = vpop.f32.mrf.mxu0
        %v3618 = vadd.f32 %v3189, %v3617
        %v3619 = vpop.f32.mrf.mxu0
        %3620 = vmatprep.mubr.bf16.mxu0 0
        %3621 = vmatmul.mubr.bf16.gmra.mxu0 %v3476
        %v3622 = vpop.f32.mrf.mxu0
        %v3623 = vadd.f32 %v3194, %v3622
        %v3624 = vpop.f32.mrf.mxu0
        %v3625 = vpop.f32.mrf.mxu0
        %v3626 = vadd.f32 %v3197, %v3625
        %v3627 = vpop.f32.mrf.mxu0
        %3628 = vmatprep.mubr.bf16.mxu0 0
        %3629 = vmatmul.mubr.bf16.gmra.mxu0 %v3479
        %v3630 = vpop.f32.mrf.mxu0
        %v3631 = vadd.f32 %v3202, %v3630
        %v3632 = vpop.f32.mrf.mxu0
        %v3633 = vpop.f32.mrf.mxu0
        %v3634 = vadd.f32 %v3205, %v3633
        %v3635 = vpop.f32.mrf.mxu0
        %3636 = vmatprep.mubr.bf16.mxu0 0
        %3637 = vmatmul.mubr.bf16.gmra.mxu0 %v3482
        %v3638 = vpop.f32.mrf.mxu0
        %v3639 = vadd.f32 %v3210, %v3638
        %v3640 = vpop.f32.mrf.mxu0
        %v3641 = vpop.f32.mrf.mxu0
        %v3642 = vadd.f32 %v3213, %v3641
        %v3643 = vpop.f32.mrf.mxu0
        %3644 = vdwg.mxu0
        %v3645 = vmul.f32 %v3312, %v3519
        %v3646 = vmul.f32 %v3313, %v3522
        %v3647 = vmul.f32 %v3314, %v3527
        %v3648 = vmul.f32 %v3315, %v3530
        %v3649 = vmul.f32 %v3316, %v3535
        %v3650 = vmul.f32 %v3317, %v3538
        %v3651 = vmul.f32 %v3318, %v3543
        %v3652 = vmul.f32 %v3319, %v3546
        %v3653 = vmul.f32 %v3320, %v3551
        %v3654 = vmul.f32 %v3321, %v3554
        %v3655 = vmul.f32 %v3322, %v3559
        %v3656 = vmul.f32 %v3323, %v3562
        %v3657 = vmul.f32 %v3324, %v3567
        %v3658 = vmul.f32 %v3325, %v3570
        %v3659 = vmul.f32 %v3326, %v3575
        %v3660 = vmul.f32 %v3327, %v3578
        %v3661 = vmul.f32 %v3328, %v3583
        %v3662 = vmul.f32 %v3329, %v3586
        %v3663 = vmul.f32 %v3330, %v3591
        %v3664 = vmul.f32 %v3331, %v3594
        %v3665 = vmul.f32 %v3332, %v3599
        %v3666 = vmul.f32 %v3333, %v3602
        %v3667 = vmul.f32 %v3334, %v3607
        %v3668 = vmul.f32 %v3335, %v3610
        %v3669 = vmul.f32 %v3336, %v3615
        %v3670 = vmul.f32 %v3337, %v3618
        %v3671 = vmul.f32 %v3338, %v3623
        %v3672 = vmul.f32 %v3339, %v3626
        %v3673 = vmul.f32 %v3340, %v3631
        %v3674 = vmul.f32 %v3341, %v3634
        %v3675 = vmul.f32 %v3342, %v3639
        %v3676 = vmul.f32 %v3343, %v3642
        %3678 = vset.pattern.permute.xlu0 0
        %3679 = vperm.xlu0 %3678, %v3280
        %v3680 = vpop.permute.xlu0 %3679
        %3683 = vset.pattern.permute.xlu0 0
        %3684 = vperm.xlu0 %3683, %v3281
        %v3685 = vpop.permute.xlu0 %3684
        %3688 = vset.pattern.permute.xlu0 0
        %3689 = vperm.xlu0 %3688, %v3282
        %v3690 = vpop.permute.xlu0 %3689
        %3693 = vset.pattern.permute.xlu0 0
        %3694 = vperm.xlu0 %3693, %v3283
        %v3695 = vpop.permute.xlu0 %3694
        %3698 = vset.pattern.permute.xlu0 0
        %3699 = vperm.xlu0 %3698, %v3284
        %v3700 = vpop.permute.xlu0 %3699
        %3703 = vset.pattern.permute.xlu0 0
        %3704 = vperm.xlu0 %3703, %v3285
        %v3705 = vpop.permute.xlu0 %3704
        %3708 = vset.pattern.permute.xlu0 0
        %3709 = vperm.xlu0 %3708, %v3286
        %v3710 = vpop.permute.xlu0 %3709
        %3713 = vset.pattern.permute.xlu0 0
        %3714 = vperm.xlu0 %3713, %v3287
        %v3715 = vpop.permute.xlu0 %3714
        %3718 = vset.pattern.permute.xlu0 0
        %3719 = vperm.xlu0 %3718, %v3288
        %v3720 = vpop.permute.xlu0 %3719
        %3723 = vset.pattern.permute.xlu0 0
        %3724 = vperm.xlu0 %3723, %v3289
        %v3725 = vpop.permute.xlu0 %3724
        %3728 = vset.pattern.permute.xlu0 0
        %3729 = vperm.xlu0 %3728, %v3290
        %v3730 = vpop.permute.xlu0 %3729
        %3733 = vset.pattern.permute.xlu0 0
        %3734 = vperm.xlu0 %3733, %v3291
        %v3735 = vpop.permute.xlu0 %3734
        %3738 = vset.pattern.permute.xlu0 0
        %3739 = vperm.xlu0 %3738, %v3292
        %v3740 = vpop.permute.xlu0 %3739
        %3743 = vset.pattern.permute.xlu0 0
        %3744 = vperm.xlu0 %3743, %v3293
        %v3745 = vpop.permute.xlu0 %3744
        %3748 = vset.pattern.permute.xlu0 0
        %3749 = vperm.xlu0 %3748, %v3294
        %v3750 = vpop.permute.xlu0 %3749
        %3753 = vset.pattern.permute.xlu0 0
        %3754 = vperm.xlu0 %3753, %v3295
        %v3755 = vpop.permute.xlu0 %3754
        %3758 = vset.pattern.permute.xlu0 0
        %3759 = vperm.xlu0 %3758, %v3296
        %v3760 = vpop.permute.xlu0 %3759
        %3763 = vset.pattern.permute.xlu0 0
        %3764 = vperm.xlu0 %3763, %v3297
        %v3765 = vpop.permute.xlu0 %3764
        %3768 = vset.pattern.permute.xlu0 0
        %3769 = vperm.xlu0 %3768, %v3298
        %v3770 = vpop.permute.xlu0 %3769
        %3773 = vset.pattern.permute.xlu0 0
        %3774 = vperm.xlu0 %3773, %v3299
        %v3775 = vpop.permute.xlu0 %3774
        %3778 = vset.pattern.permute.xlu0 0
        %3779 = vperm.xlu0 %3778, %v3300
        %v3780 = vpop.permute.xlu0 %3779
        %3783 = vset.pattern.permute.xlu0 0
        %3784 = vperm.xlu0 %3783, %v3301
        %v3785 = vpop.permute.xlu0 %3784
        %3788 = vset.pattern.permute.xlu0 0
        %3789 = vperm.xlu0 %3788, %v3302
        %v3790 = vpop.permute.xlu0 %3789
        %3793 = vset.pattern.permute.xlu0 0
        %3794 = vperm.xlu0 %3793, %v3303
        %v3795 = vpop.permute.xlu0 %3794
        %3798 = vset.pattern.permute.xlu0 0
        %3799 = vperm.xlu0 %3798, %v3304
        %v3800 = vpop.permute.xlu0 %3799
        %3803 = vset.pattern.permute.xlu0 0
        %3804 = vperm.xlu0 %3803, %v3305
        %v3805 = vpop.permute.xlu0 %3804
        %3808 = vset.pattern.permute.xlu0 0
        %3809 = vperm.xlu0 %3808, %v3306
        %v3810 = vpop.permute.xlu0 %3809
        %3813 = vset.pattern.permute.xlu0 0
        %3814 = vperm.xlu0 %3813, %v3307
        %v3815 = vpop.permute.xlu0 %3814
        %3818 = vset.pattern.permute.xlu0 0
        %3819 = vperm.xlu0 %3818, %v3308
        %v3820 = vpop.permute.xlu0 %3819
        %3823 = vset.pattern.permute.xlu0 0
        %3824 = vperm.xlu0 %3823, %v3309
        %v3825 = vpop.permute.xlu0 %3824
        %3828 = vset.pattern.permute.xlu0 0
        %3829 = vperm.xlu0 %3828, %v3310
        %v3830 = vpop.permute.xlu0 %3829
        %3833 = vset.pattern.permute.xlu0 0
        %3834 = vperm.xlu0 %3833, %v3311
        %v3835 = vpop.permute.xlu0 %3834
        %v3837 = vmul.f32 %v3645, %v3680
        %v3838 = vmul.f32 %v3646, %v3685
        %v3839 = vmul.f32 %v3647, %v3690
        %v3840 = vmul.f32 %v3648, %v3695
        %v3841 = vmul.f32 %v3649, %v3700
        %v3842 = vmul.f32 %v3650, %v3705
        %v3843 = vmul.f32 %v3651, %v3710
        %v3844 = vmul.f32 %v3652, %v3715
        %v3845 = vmul.f32 %v3653, %v3720
        %v3846 = vmul.f32 %v3654, %v3725
        %v3847 = vmul.f32 %v3655, %v3730
        %v3848 = vmul.f32 %v3656, %v3735
        %v3849 = vmul.f32 %v3657, %v3740
        %v3850 = vmul.f32 %v3658, %v3745
        %v3851 = vmul.f32 %v3659, %v3750
        %v3852 = vmul.f32 %v3660, %v3755
        %v3853 = vmul.f32 %v3661, %v3760
        %v3854 = vmul.f32 %v3662, %v3765
        %v3855 = vmul.f32 %v3663, %v3770
        %v3856 = vmul.f32 %v3664, %v3775
        %v3857 = vmul.f32 %v3665, %v3780
        %v3858 = vmul.f32 %v3666, %v3785
        %v3859 = vmul.f32 %v3667, %v3790
        %v3860 = vmul.f32 %v3668, %v3795
        %v3861 = vmul.f32 %v3669, %v3800
        %v3862 = vmul.f32 %v3670, %v3805
        %v3863 = vmul.f32 %v3671, %v3810
        %v3864 = vmul.f32 %v3672, %v3815
        %v3865 = vmul.f32 %v3673, %v3820
        %v3866 = vmul.f32 %v3674, %v3825
        %v3867 = vmul.f32 %v3675, %v3830
        %v3868 = vmul.f32 %v3676, %v3835
        %3869 = vst [vmem:[%s444] sm:$0xff] %v3837
        %3870 = vst [vmem:[%s444 + $0x8] sm:$0xff] %v3838
        %3871 = vst [vmem:[%s444 + $0x10] sm:$0xff] %v3839
        %3872 = vst [vmem:[%s444 + $0x18] sm:$0xff] %v3840
        %3873 = vst [vmem:[%s444 + $0x20] sm:$0xff] %v3841
        %3874 = vst [vmem:[%s444 + $0x28] sm:$0xff] %v3842
        %3875 = vst [vmem:[%s444 + $0x30] sm:$0xff] %v3843
        %3876 = vst [vmem:[%s444 + $0x38] sm:$0xff] %v3844
        %3877 = vst [vmem:[%s444 + $0x40] sm:$0xff] %v3845
        %3878 = vst [vmem:[%s444 + $0x48] sm:$0xff] %v3846
        %3879 = vst [vmem:[%s444 + $0x50] sm:$0xff] %v3847
        %3880 = vst [vmem:[%s444 + $0x58] sm:$0xff] %v3848
        %3881 = vst [vmem:[%s444 + $0x60] sm:$0xff] %v3849
        %3882 = vst [vmem:[%s444 + $0x68] sm:$0xff] %v3850
        %3883 = vst [vmem:[%s444 + $0x70] sm:$0xff] %v3851
        %3884 = vst [vmem:[%s444 + $0x78] sm:$0xff] %v3852
        %3885 = vst [vmem:[%s444 + $0x80] sm:$0xff] %v3853
        %3886 = vst [vmem:[%s444 + $0x88] sm:$0xff] %v3854
        %3887 = vst [vmem:[%s444 + $0x90] sm:$0xff] %v3855
        %3888 = vst [vmem:[%s444 + $0x98] sm:$0xff] %v3856
        %3889 = vst [vmem:[%s444 + $0xa0] sm:$0xff] %v3857
        %3890 = vst [vmem:[%s444 + $0xa8] sm:$0xff] %v3858
        %3891 = vst [vmem:[%s444 + $0xb0] sm:$0xff] %v3859
        %3892 = vst [vmem:[%s444 + $0xb8] sm:$0xff] %v3860
        %3893 = vst [vmem:[%s444 + $0xc0] sm:$0xff] %v3861
        %3894 = vst [vmem:[%s444 + $0xc8] sm:$0xff] %v3862
        %3895 = vst [vmem:[%s444 + $0xd0] sm:$0xff] %v3863
        %3896 = vst [vmem:[%s444 + $0xd8] sm:$0xff] %v3864
        %3897 = vst [vmem:[%s444 + $0xe0] sm:$0xff] %v3865
        %3898 = vst [vmem:[%s444 + $0xe8] sm:$0xff] %v3866
        %3899 = vst [vmem:[%s444 + $0xf0] sm:$0xff] %v3867
        %3900 = vst [vmem:[%s444 + $0xf8] sm:$0xff] %v3868
        %s3901 = sand.u32 %s289, 1
        %s3902 = scalar_lea.sflag [#allocation3], %s3901
        %s3903 = sand.u32 %s289, 1
        %s3904 = smul.addr %s3903, 256
        %s3905 = scalar_lea.vmem [#allocation2], %s3904
        // Predicated region
        $region65: #{tpu_custom_call.1} parent=63 // pred_check
          %p3906 = pneg %p299
        $region66: #{tpu_custom_call.1} parent=63 // pred_check_branch
          %3908 = sbr.rel (%p3906) target = $region68
        $region67: #{tpu_custom_call.1} parent=63 // pred_region
          %s3909 = smul.u32 32, %s25
          %s3911 = ssub.s32 4096, 4096
          %3912 = vsyncadd %s3902, %s3911
          %s3913 = smul.addr %s3909, 128
          %s3914 = scalar_lea.hbm %s11, %s3913
          %s3915 = sshll.u32 %s3905, 4
          %s3916 = int_to_ptr.vmem [resolvable:$true] %s3915
          %3921 = dma.vmem_to_hbm [thread:$0]  %s3916, 4096, %s3914, %s3902, 128, 128, 8
        $region68: #{tpu_custom_call.1} parent=63 // pred_fallthru
          _
      $region64: #{tpu_custom_call.1} parent=5 // pred_fallthru
        _
      %p3922 = scmp.le.s32.totalorder 2, %s20
      // Predicated region
      $region69: #{tpu_custom_call.1} parent=5 // pred_check
        %p3923 = pneg %p3922
      $region70: #{tpu_custom_call.1} parent=5 // pred_check_branch
        %3925 = sbr.rel (%p3923) target = $region72
      $region71: #{tpu_custom_call.1} parent=5 // pred_region
        %s3926 = ssub.s32 %s20, 2
        // Predicated region
        $region73: #{tpu_custom_call.1} parent=71 // pred_check
          %p3927 = pneg %p305
        $region74: #{tpu_custom_call.1} parent=71 // pred_check_branch
          %3929 = sbr.rel (%p3927) target = $region76
        $region75: #{tpu_custom_call.1} parent=71 // pred_region
          %s3930 = sand.u32 %s290, 1
          %s3931 = scalar_lea.sflag [#allocation3], %s3930
          %s3932 = sand.u32 %s290, 1
          %s3933 = smul.addr %s3932, 256
          %s3934 = scalar_lea.vmem [#allocation2], %s3933
          %3935 = dma.done %s3931, 4096
        $region76: #{tpu_custom_call.1} parent=71 // pred_fallthru
          _
      $region72: #{tpu_custom_call.1} parent=5 // pred_fallthru
        _
    $region6: #{tpu_custom_call.1} parent=1 // loop_footer
      %s24 = sadd.s32 1, %s20
    $region7: #{tpu_custom_call.1} parent=1 // loop_footer_branch
      %19 = sbr.rel target = $region3
    $region8: #{tpu_custom_call.1} parent=1 // loop_exit
      _
    %3936 = vsyncpa [#allocation3], 1
    %s3937 = scalar_lea.sflag [#allocation3], 1
    %3938 = vsyncpa %s3937, 1

</llo_original>
